<compile_context>
chip_gen: v6e
topology: v6e:2x2x1
jax: 0.10.0
libtpu: 0.0.40
codegen_flags: <defaults>
</compile_context>

<pallas_src>
import functools

import jax
import jax.numpy as jnp
from jax import lax
from jax.experimental import pallas as pl
from jax.experimental.pallas import tpu as pltpu

F32 = jnp.float32
BF16 = jnp.bfloat16
VMEM_LIMIT = 32 * 1024 * 1024       # safe scoped-VMEM limit on v5e/v6e/v7x
K_STEM = 7 * 7 * 3                  # stem 7x7x3 taps folded into the contraction


def _round_up(x, m):
    return ((x + m - 1) // m) * m


def _pick_tile(n, target=8):
    """Largest divisor of n that is <= target (keeps row tiles exact, no tails)."""
    t = min(n, target)
    while n % t:
        t -= 1
    return t


# ===================================================================== kernel 1
def _stem_pool_reduce_kernel(pm_ref, ph_ref, ws_ref, bs_ref, w1_ref, b1_ref,
                             x_ref, h1_ref, *, tq, wq, wq_pad):
    """Stem conv (folded taps) + ReLU + 3x3/s2/p1 maxpool + 1x1 reduce + ReLU.

    pm_ref: (1, 2*tq*2*wq, 147)  stem-patch rows for stem rows [2*t*tq, 2*(t+1)*tq)
                                 row order = (stem_row, col_parity, col_half)
    ph_ref: (1, 2*wq, 147)       patch rows of the single halo stem row above
    ws_ref: (147, 128) bf16      stem weight;  bs_ref: (1, 128) f32 bias
    w1_ref: (128, 128) bf16      fused 1x1 reduce; b1_ref: (1, 128) f32
    x_ref : (1, tq*wq_pad, 128)  maxpool output (residual branch input)
    h1_ref: (1, tq*wq_pad, 128)  relu(x @ w1 + b1), pad columns zeroed
    """
    ws2 = 2 * wq                                     # stem output width (s2d cols)

    # ---- stem conv: a single K=147 matmul per slab (MXU-dense) + ReLU ----
    y_main = jnp.dot(pm_ref[0], ws_ref[...], preferred_element_type=F32)
    y_main = jnp.maximum(y_main + bs_ref[...], 0.0).astype(BF16)   # (2*tq*ws2, 128)
    y_halo = jnp.dot(ph_ref[0], ws_ref[...], preferred_element_type=F32)
    y_halo = jnp.maximum(y_halo + bs_ref[...], 0.0).astype(BF16)   # (ws2, 128)
    # local stem rows -1 .. 2*tq-1 (halo duplicate at t==0 is harmless for a max
    # over non-negative post-ReLU data).
    yf = jnp.concatenate([y_halo, y_main], axis=0)

    # ---- 3x3 / stride-2 / pad-1 max pool on the VMEM-resident conv tile ----
    zero1 = jnp.zeros((1, 128), BF16)
    zpad = jnp.zeros((wq_pad - wq, 128), BF16)
    pooled = []
    for q in range(tq):
        best = None
        for di in range(3):
            base = (2 * q + di) * ws2                 # local stem row 2q-1+di
            even = yf[base:base + wq, :]              # source cols 2*qw
            odd = yf[base + wq:base + 2 * wq, :]      # source cols 2*qw+1
            left = jnp.concatenate(                   # source cols 2*qw-1 (left pad=0)
                [zero1, yf[base + wq:base + 2 * wq - 1, :]], axis=0)
            cand = jnp.maximum(jnp.maximum(even, odd), left)
            best = cand if best is None else jnp.maximum(best, cand)
        pooled.append(jnp.concatenate([best, zpad], axis=0))        # (wq_pad, 128)
    x_tile = jnp.concatenate(pooled, axis=0)          # (tq*wq_pad, 128) bf16
    x_ref[0] = x_tile

    # ---- fused 1x1 reduce conv + ReLU (zero the width-pad columns) ----
    h = jnp.dot(x_tile, w1_ref[...], preferred_element_type=F32) + b1_ref[...]
    h = jnp.maximum(h, 0.0)
    r = lax.broadcasted_iota(jnp.int32, (tq * wq_pad, 1), 0)
    h = jnp.where((r % wq_pad) < wq, h, 0.0)          # keep zero-pad semantics for K2
    h1_ref[0] = h.astype(BF16)


# ===================================================================== kernel 2
def _res_embed_kernel(h1_ref, ht_ref, hb_ref, x_ref,
                      w2_ref, b2_ref, w3_ref, b3_ref, wd_ref, bd_ref,
                      we_ref, be_ref, o_ref, acc_ref, *, th, wq, wq_pad, inv_count):
    """3x3 conv + ReLU + 1x1 expand + 1x1 downsample + residual + ReLU
       + masked global-average-pool + embed Linear (finalized on last tile).

    h1_ref: (1, th*wq_pad, 128)  current row tile of h1
    ht_ref: (1, wq_pad, 128)     spatial row above the tile (halo)
    hb_ref: (1, wq_pad, 128)     spatial row below the tile (halo)
    x_ref : (1, th*wq_pad, 128)  residual branch input (maxpool output)
    acc_ref: (1, 256) f32        running spatial sum (VMEM scratch)
    o_ref : (1, 1, 128) f32      final embedding (written at last tile only)
    """
    t = pl.program_id(1)
    nt = pl.num_programs(1)
    m = th * wq_pad

    @pl.when(t == 0)
    def _init():
        acc_ref[...] = jnp.zeros_like(acc_ref)

    # assemble the halo'd input slab; top/bottom image borders are zero padding
    zero1 = jnp.zeros((1, 128), h1_ref.dtype)
    top = jnp.where(t == 0, jnp.zeros_like(ht_ref[0]), ht_ref[0])
    bot = jnp.where(t == nt - 1, jnp.zeros_like(hb_ref[0]), hb_ref[0])
    a = jnp.concatenate([zero1, top, h1_ref[0], bot, zero1], axis=0)

    # 3x3 / stride-1 / pad-1 direct conv: constant-offset row slabs, no im2col
    conv = jnp.zeros((m, 128), F32)
    for di in range(3):
        for dj in range(3):
            off = di * wq_pad + dj
            conv = conv + jnp.dot(a[off:off + m, :], w2_ref[di * 3 + dj],
                                  preferred_element_type=F32)
    h2 = jnp.maximum(conv + b2_ref[...], 0.0).astype(BF16)

    # fused 1x1 expand + 1x1 downsample + residual add + ReLU (never hits HBM)
    z = jnp.dot(h2, w3_ref[...], preferred_element_type=F32) + b3_ref[...]
    z = z + jnp.dot(x_ref[0], wd_ref[...], preferred_element_type=F32) + bd_ref[...]
    z = jnp.maximum(z, 0.0)                                        # (m, 256) f32

    # masked spatial sum as a ones-vector matmul on the MXU (excludes pad columns)
    col = lax.broadcasted_iota(jnp.int32, (1, m), 1)
    mask = ((col % wq_pad) < wq).astype(F32)                       # (1, m)
    acc_ref[...] += jnp.dot(mask, z, preferred_element_type=F32)   # (1, 256)

    @pl.when(t == nt - 1)
    def _fin():
        mean = acc_ref[...] * inv_count                            # global avg pool
        emb = jnp.dot(mean.astype(BF16), we_ref[...],
                      preferred_element_type=F32) + be_ref[...]
        o_ref[0] = emb                                             # (1, 128) f32


# ================================================================ host helpers
def _build_stem_patches(images):
    """(B,3,H,W) f32 NCHW -> (B, Hs*Ws, 147) bf16 patch matrix.

    Stem 7x7/s2/p3 taps are folded into the contraction dim (K=147) at the cheap
    3-channel input stage; output rows are ordered (stem_row, col_parity, col_half)
    so the stem conv output comes out column space-to-depth'd for the fused
    stride-2 maxpool (no host-side repacking of the 128-channel activation).
    """
    B, C, H, W = images.shape
    Hs, Ws, Wq = H // 2, W // 2, W // 4
    x = jnp.transpose(images, (0, 2, 3, 1)).astype(BF16)           # NHWC
    xp = jnp.pad(x, ((0, 0), (3, 3), (3, 3), (0, 0)))
    slabs = []
    for i in range(7):
        for j in range(7):
            slabs.append(xp[:, i:i + 2 * Hs - 1:2, j:j + 2 * Ws - 1:2, :])
    p = jnp.concatenate(slabs, axis=-1)                            # (B, Hs, Ws, 147)
    p = p.reshape(B, Hs, Wq, 2, K_STEM).transpose(0, 1, 3, 2, 4)   # (B, Hs, 2, Wq, K)
    return p.reshape(B, Hs * Ws, K_STEM)


def init_params(key, embed_size=32):
    C1, Cb, Cf, EP = 128, 128, 256, 128        # lane-dense channel widths
    assert embed_size <= EP
    ks = jax.random.split(key, 12)
    s = 0.05

    def nrm(k, shape):
        return s * jax.random.normal(k, shape, F32)

    w7 = nrm(ks[0], (7, 7, 3, C1))                                 # HWIO stem taps
    w_emb = jnp.zeros((Cf, EP), F32).at[:, :embed_size].set(nrm(ks[10], (Cf, embed_size)))
    b_emb = jnp.zeros((1, EP), F32).at[:, :embed_size].set(nrm(ks[11], (1, embed_size)))
    return {
        "w_stem": w7.reshape(K_STEM, C1).astype(BF16),  # row = (i*7+j)*3 + cin
        "b_stem": nrm(ks[1], (1, C1)),
        "w_b1": nrm(ks[2], (C1, Cb)).astype(BF16), "b_b1": nrm(ks[3], (1, Cb)),
        "w_b2": nrm(ks[4], (9, Cb, Cb)).astype(BF16), "b_b2": nrm(ks[5], (1, Cb)),
        "w_b3": nrm(ks[6], (Cb, Cf)).astype(BF16), "b_b3": nrm(ks[7], (1, Cf)),
        "w_ds": nrm(ks[8], (C1, Cf)).astype(BF16), "b_ds": nrm(ks[9], (1, Cf)),
        "w_embed": w_emb.astype(BF16),              # (Cf, 128), lanes >= embed = 0
        "b_embed": b_emb,                           # (1, 128) f32
    }


# ======================================================================= forward
def encoder_cnn_forward(params, images, embed_size=32):
    """images: (B, 3, H, W) float32 NCHW -> (B, embed_size) float32."""
    B, C, H, W = images.shape
    assert C == 3 and H % 4 == 0 and W % 16 == 0, (H, W)
    Hs, Ws = H // 2, W // 2                     # stem output spatial
    Hq, Wq = H // 4, W // 4                     # post-maxpool spatial
    Wqp = _round_up(Wq + 1, 8)                  # >=1 zero pad col, sublane aligned

    patches = _build_stem_patches(images)       # (B, Hs*Ws, 147) bf16

    # ---- K1: stem conv + ReLU + maxpool(3x3/s2/p1) + 1x1 reduce + ReLU ----
    TQ = _pick_tile(Hq, 8)                      # pool rows / tile (512 flat rows @224)
    nt1 = Hq // TQ
    x_pool, h1 = pl.pallas_call(
        functools.partial(_stem_pool_reduce_kernel, tq=TQ, wq=Wq, wq_pad=Wqp),
        out_shape=(jax.ShapeDtypeStruct((B, Hq * Wqp, 128), BF16),
                   jax.ShapeDtypeStruct((B, Hq * Wqp, 128), BF16)),
        grid=(B, nt1),
        in_specs=[
            pl.BlockSpec((1, 2 * TQ * Ws, K_STEM), lambda b, t: (b, t, 0)),
            pl.BlockSpec((1, Ws, K_STEM),
                         lambda b, t: (b, jnp.maximum(2 * t * TQ - 1, 0), 0)),
            pl.BlockSpec((K_STEM, 128), lambda b, t: (0, 0)),
            pl.BlockSpec((1, 128), lambda b, t: (0, 0)),
            pl.BlockSpec((128, 128), lambda b, t: (0, 0)),
            pl.BlockSpec((1, 128), lambda b, t: (0, 0)),
        ],
        out_specs=(pl.BlockSpec((1, TQ * Wqp, 128), lambda b, t: (b, t, 0)),
                   pl.BlockSpec((1, TQ * Wqp, 128), lambda b, t: (b, t, 0))),
        compiler_params=pltpu.CompilerParams(
            dimension_semantics=("parallel", "parallel"),
            vmem_limit_bytes=VMEM_LIMIT),
    )(patches, patches, params["w_stem"], params["b_stem"],
      params["w_b1"], params["b_b1"])

    # ---- K2: 3x3 conv + expand + downsample + residual + ReLU + avgpool + embed ----
    TH = _pick_tile(Hq, 8)
    nt2 = Hq // TH
    out = pl.pallas_call(
        functools.partial(_res_embed_kernel, th=TH, wq=Wq, wq_pad=Wqp,
                          inv_count=1.0 / float(Hq * Wq)),
        out_shape=jax.ShapeDtypeStruct((B, 1, 128), F32),
        grid=(B, nt2),
        in_specs=[
            pl.BlockSpec((1, TH * Wqp, 128), lambda b, t: (b, t, 0)),               # h1
            pl.BlockSpec((1, Wqp, 128),
                         lambda b, t: (b, jnp.maximum(t * TH - 1, 0), 0)),          # halo up
            pl.BlockSpec((1, Wqp, 128),
                         lambda b, t: (b, jnp.minimum((t + 1) * TH, Hq - 1), 0)),   # halo down
            pl.BlockSpec((1, TH * Wqp, 128), lambda b, t: (b, t, 0)),               # x (residual)
            pl.BlockSpec((9, 128, 128), lambda b, t: (0, 0, 0)),
            pl.BlockSpec((1, 128), lambda b, t: (0, 0)),
            pl.BlockSpec((128, 256), lambda b, t: (0, 0)),
            pl.BlockSpec((1, 256), lambda b, t: (0, 0)),
            pl.BlockSpec((128, 256), lambda b, t: (0, 0)),
            pl.BlockSpec((1, 256), lambda b, t: (0, 0)),
            pl.BlockSpec((256, 128), lambda b, t: (0, 0)),
            pl.BlockSpec((1, 128), lambda b, t: (0, 0)),
        ],
        out_specs=pl.BlockSpec((1, 1, 128), lambda b, t: (b, 0, 0)),
        scratch_shapes=[pltpu.VMEM((1, 256), F32)],
        compiler_params=pltpu.CompilerParams(
            dimension_semantics=("parallel", "arbitrary"),
            vmem_limit_bytes=VMEM_LIMIT),
    )(h1, h1, h1, x_pool,
      params["w_b2"], params["b_b2"], params["w_b3"], params["b_b3"],
      params["w_ds"], params["b_ds"], params["w_embed"], params["b_embed"])

    return out[:, 0, :embed_size]               # slice the lane-padded embedding


# ========================================================================== main
if __name__ == "__main__":
    key = jax.random.PRNGKey(0)
    k_img, k_par = jax.random.split(key)

    embed_size = 32
    images = jax.random.normal(k_img, (2, 3, 16, 16), dtype=jnp.float32)   # NCHW
    params = init_params(k_par, embed_size=embed_size)

    fwd = jax.jit(functools.partial(encoder_cnn_forward, embed_size=embed_size))
    out = jax.block_until_ready(fwd(params, images))

    assert out.shape == (2, embed_size), out.shape
    assert out.dtype == jnp.float32
    assert bool(jnp.all(jnp.isfinite(out)))
    print("KERNEL_OK")
</pallas_src>

<mosaic_0001>
module attributes {stable_mosaic.version = 11 : i64} {
  func.func @_stem_pool_reduce_kernel(%arg0: i32, %arg1: i32, %arg2: memref<1x64x147xbf16, #tpu.memory_space<vmem>>, %arg3: memref<1x8x147xbf16, #tpu.memory_space<vmem>>, %arg4: memref<147x128xbf16, #tpu.memory_space<vmem>>, %arg5: memref<1x128xf32, #tpu.memory_space<vmem>>, %arg6: memref<128x128xbf16, #tpu.memory_space<vmem>>, %arg7: memref<1x128xf32, #tpu.memory_space<vmem>>, %arg8: memref<1x32x128xbf16, #tpu.memory_space<vmem>>, %arg9: memref<1x32x128xbf16, #tpu.memory_space<vmem>>) attributes {dimension_semantics = [#tpu.dimension_semantics<parallel>, #tpu.dimension_semantics<parallel>], iteration_bounds = array<i64: 2, 1>, scalar_prefetch = 0 : i64, scratch_operands = 0 : i64, tpu.core_type = #tpu.core_type<tc>, window_params = [{transform_indices = @transform_0, window_bounds = array<i64: 1, 64, 147>}, {transform_indices = @transform_1, window_bounds = array<i64: 1, 8, 147>}, {pipeline_mode = #tpu.pipeline_mode<synchronous>, transform_indices = @transform_2, window_bounds = array<i64: 147, 128>}, {pipeline_mode = #tpu.pipeline_mode<synchronous>, transform_indices = @transform_3, window_bounds = array<i64: 1, 128>}, {pipeline_mode = #tpu.pipeline_mode<synchronous>, transform_indices = @transform_4, window_bounds = array<i64: 128, 128>}, {pipeline_mode = #tpu.pipeline_mode<synchronous>, transform_indices = @transform_5, window_bounds = array<i64: 1, 128>}, {transform_indices = @transform_6, window_bounds = array<i64: 1, 32, 128>}, {transform_indices = @transform_7, window_bounds = array<i64: 1, 32, 128>}]} {
    %c0 = arith.constant 0 : index
    %c0_0 = arith.constant 0 : index
    %c0_1 = arith.constant 0 : index
    %0 = vector.load %arg2[%c0, %c0_0, %c0_1] : memref<1x64x147xbf16, #tpu.memory_space<vmem>>, vector<1x64x147xbf16>
    %1 = vector.shape_cast %0 : vector<1x64x147xbf16> to vector<64x147xbf16>
    %c0_2 = arith.constant 0 : index
    %c0_3 = arith.constant 0 : index
    %2 = vector.load %arg4[%c0_2, %c0_3] : memref<147x128xbf16, #tpu.memory_space<vmem>>, vector<147x128xbf16>
    %cst = arith.constant dense<0.000000e+00> : vector<64x128xf32>
    %3 = tpu.matmul %1, %2, %cst {dimension_numbers = #tpu.dot_dimension_numbers<[1], [0], [0], [1], [0, 0, 1, 1], [], []>} : vector<64x147xbf16>, vector<147x128xbf16>, vector<64x128xf32> -> vector<64x128xf32>
    %c0_4 = arith.constant 0 : index
    %c0_5 = arith.constant 0 : index
    %4 = vector.load %arg5[%c0_4, %c0_5] : memref<1x128xf32, #tpu.memory_space<vmem>>, vector<1x128xf32>
    %5 = vector.broadcast %4 : vector<1x128xf32> to vector<64x128xf32>
    %6 = arith.addf %3, %5 : vector<64x128xf32>
    %cst_6 = arith.constant 0.000000e+00 : f32
    %7 = vector.broadcast %cst_6 : f32 to vector<64x128xf32>
    %8 = arith.maximumf %6, %7 : vector<64x128xf32>
    %9 = arith.truncf %8 : vector<64x128xf32> to vector<64x128xbf16>
    %c0_7 = arith.constant 0 : index
    %c0_8 = arith.constant 0 : index
    %c0_9 = arith.constant 0 : index
    %10 = vector.load %arg3[%c0_7, %c0_8, %c0_9] : memref<1x8x147xbf16, #tpu.memory_space<vmem>>, vector<1x8x147xbf16>
    %11 = vector.shape_cast %10 : vector<1x8x147xbf16> to vector<8x147xbf16>
    %c0_10 = arith.constant 0 : index
    %c0_11 = arith.constant 0 : index
    %12 = vector.load %arg4[%c0_10, %c0_11] : memref<147x128xbf16, #tpu.memory_space<vmem>>, vector<147x128xbf16>
    %cst_12 = arith.constant dense<0.000000e+00> : vector<8x128xf32>
    %13 = tpu.matmul %11, %12, %cst_12 {dimension_numbers = #tpu.dot_dimension_numbers<[1], [0], [0], [1], [0, 0, 1, 1], [], []>} : vector<8x147xbf16>, vector<147x128xbf16>, vector<8x128xf32> -> vector<8x128xf32>
    %c0_13 = arith.constant 0 : index
    %c0_14 = arith.constant 0 : index
    %14 = vector.load %arg5[%c0_13, %c0_14] : memref<1x128xf32, #tpu.memory_space<vmem>>, vector<1x128xf32>
    %15 = vector.broadcast %14 : vector<1x128xf32> to vector<8x128xf32>
    %16 = arith.addf %13, %15 : vector<8x128xf32>
    %cst_15 = arith.constant 0.000000e+00 : f32
    %17 = vector.broadcast %cst_15 : f32 to vector<8x128xf32>
    %18 = arith.maximumf %16, %17 : vector<8x128xf32>
    %19 = arith.truncf %18 : vector<8x128xf32> to vector<8x128xbf16>
    %20 = tpu.concatenate %19, %9 in 0 : vector<8x128xbf16>, vector<64x128xbf16> -> vector<72x128xbf16>
    %cst_16 = arith.constant 0.000000e+00 : bf16
    %21 = vector.broadcast %cst_16 : bf16 to vector<1x128xbf16>
    %cst_17 = arith.constant 0.000000e+00 : bf16
    %22 = vector.broadcast %cst_17 : bf16 to vector<4x128xbf16>
    %23 = vector.extract_strided_slice %20 {offsets = [0, 0], sizes = [4, 128], strides = [1, 1]} : vector<72x128xbf16> to vector<4x128xbf16>
    %24 = vector.extract_strided_slice %20 {offsets = [4, 0], sizes = [4, 128], strides = [1, 1]} : vector<72x128xbf16> to vector<4x128xbf16>
    %25 = vector.extract_strided_slice %20 {offsets = [4, 0], sizes = [3, 128], strides = [1, 1]} : vector<72x128xbf16> to vector<3x128xbf16>
    %26 = tpu.concatenate %21, %25 in 0 : vector<1x128xbf16>, vector<3x128xbf16> -> vector<4x128xbf16>
    %27 = arith.maximumf %23, %24 : vector<4x128xbf16>
    %28 = arith.maximumf %27, %26 : vector<4x128xbf16>
    %29 = vector.extract_strided_slice %20 {offsets = [8, 0], sizes = [4, 128], strides = [1, 1]} : vector<72x128xbf16> to vector<4x128xbf16>
    %30 = vector.extract_strided_slice %20 {offsets = [12, 0], sizes = [4, 128], strides = [1, 1]} : vector<72x128xbf16> to vector<4x128xbf16>
    %31 = vector.extract_strided_slice %20 {offsets = [12, 0], sizes = [3, 128], strides = [1, 1]} : vector<72x128xbf16> to vector<3x128xbf16>
    %32 = tpu.concatenate %21, %31 in 0 : vector<1x128xbf16>, vector<3x128xbf16> -> vector<4x128xbf16>
    %33 = arith.maximumf %29, %30 : vector<4x128xbf16>
    %34 = arith.maximumf %33, %32 : vector<4x128xbf16>
    %35 = arith.maximumf %28, %34 : vector<4x128xbf16>
    %36 = vector.extract_strided_slice %20 {offsets = [16, 0], sizes = [4, 128], strides = [1, 1]} : vector<72x128xbf16> to vector<4x128xbf16>
    %37 = vector.extract_strided_slice %20 {offsets = [20, 0], sizes = [4, 128], strides = [1, 1]} : vector<72x128xbf16> to vector<4x128xbf16>
    %38 = vector.extract_strided_slice %20 {offsets = [20, 0], sizes = [3, 128], strides = [1, 1]} : vector<72x128xbf16> to vector<3x128xbf16>
    %39 = tpu.concatenate %21, %38 in 0 : vector<1x128xbf16>, vector<3x128xbf16> -> vector<4x128xbf16>
    %40 = arith.maximumf %36, %37 : vector<4x128xbf16>
    %41 = arith.maximumf %40, %39 : vector<4x128xbf16>
    %42 = arith.maximumf %35, %41 : vector<4x128xbf16>
    %43 = tpu.concatenate %42, %22 in 0 : vector<4x128xbf16>, vector<4x128xbf16> -> vector<8x128xbf16>
    %44 = vector.extract_strided_slice %20 {offsets = [16, 0], sizes = [4, 128], strides = [1, 1]} : vector<72x128xbf16> to vector<4x128xbf16>
    %45 = vector.extract_strided_slice %20 {offsets = [20, 0], sizes = [4, 128], strides = [1, 1]} : vector<72x128xbf16> to vector<4x128xbf16>
    %46 = vector.extract_strided_slice %20 {offsets = [20, 0], sizes = [3, 128], strides = [1, 1]} : vector<72x128xbf16> to vector<3x128xbf16>
    %47 = tpu.concatenate %21, %46 in 0 : vector<1x128xbf16>, vector<3x128xbf16> -> vector<4x128xbf16>
    %48 = arith.maximumf %44, %45 : vector<4x128xbf16>
    %49 = arith.maximumf %48, %47 : vector<4x128xbf16>
    %50 = vector.extract_strided_slice %20 {offsets = [24, 0], sizes = [4, 128], strides = [1, 1]} : vector<72x128xbf16> to vector<4x128xbf16>
    %51 = vector.extract_strided_slice %20 {offsets = [28, 0], sizes = [4, 128], strides = [1, 1]} : vector<72x128xbf16> to vector<4x128xbf16>
    %52 = vector.extract_strided_slice %20 {offsets = [28, 0], sizes = [3, 128], strides = [1, 1]} : vector<72x128xbf16> to vector<3x128xbf16>
    %53 = tpu.concatenate %21, %52 in 0 : vector<1x128xbf16>, vector<3x128xbf16> -> vector<4x128xbf16>
    %54 = arith.maximumf %50, %51 : vector<4x128xbf16>
    %55 = arith.maximumf %54, %53 : vector<4x128xbf16>
    %56 = arith.maximumf %49, %55 : vector<4x128xbf16>
    %57 = vector.extract_strided_slice %20 {offsets = [32, 0], sizes = [4, 128], strides = [1, 1]} : vector<72x128xbf16> to vector<4x128xbf16>
    %58 = vector.extract_strided_slice %20 {offsets = [36, 0], sizes = [4, 128], strides = [1, 1]} : vector<72x128xbf16> to vector<4x128xbf16>
    %59 = vector.extract_strided_slice %20 {offsets = [36, 0], sizes = [3, 128], strides = [1, 1]} : vector<72x128xbf16> to vector<3x128xbf16>
    %60 = tpu.concatenate %21, %59 in 0 : vector<1x128xbf16>, vector<3x128xbf16> -> vector<4x128xbf16>
    %61 = arith.maximumf %57, %58 : vector<4x128xbf16>
    %62 = arith.maximumf %61, %60 : vector<4x128xbf16>
    %63 = arith.maximumf %56, %62 : vector<4x128xbf16>
    %64 = tpu.concatenate %63, %22 in 0 : vector<4x128xbf16>, vector<4x128xbf16> -> vector<8x128xbf16>
    %65 = vector.extract_strided_slice %20 {offsets = [32, 0], sizes = [4, 128], strides = [1, 1]} : vector<72x128xbf16> to vector<4x128xbf16>
    %66 = vector.extract_strided_slice %20 {offsets = [36, 0], sizes = [4, 128], strides = [1, 1]} : vector<72x128xbf16> to vector<4x128xbf16>
    %67 = vector.extract_strided_slice %20 {offsets = [36, 0], sizes = [3, 128], strides = [1, 1]} : vector<72x128xbf16> to vector<3x128xbf16>
    %68 = tpu.concatenate %21, %67 in 0 : vector<1x128xbf16>, vector<3x128xbf16> -> vector<4x128xbf16>
    %69 = arith.maximumf %65, %66 : vector<4x128xbf16>
    %70 = arith.maximumf %69, %68 : vector<4x128xbf16>
    %71 = vector.extract_strided_slice %20 {offsets = [40, 0], sizes = [4, 128], strides = [1, 1]} : vector<72x128xbf16> to vector<4x128xbf16>
    %72 = vector.extract_strided_slice %20 {offsets = [44, 0], sizes = [4, 128], strides = [1, 1]} : vector<72x128xbf16> to vector<4x128xbf16>
    %73 = vector.extract_strided_slice %20 {offsets = [44, 0], sizes = [3, 128], strides = [1, 1]} : vector<72x128xbf16> to vector<3x128xbf16>
    %74 = tpu.concatenate %21, %73 in 0 : vector<1x128xbf16>, vector<3x128xbf16> -> vector<4x128xbf16>
    %75 = arith.maximumf %71, %72 : vector<4x128xbf16>
    %76 = arith.maximumf %75, %74 : vector<4x128xbf16>
    %77 = arith.maximumf %70, %76 : vector<4x128xbf16>
    %78 = vector.extract_strided_slice %20 {offsets = [48, 0], sizes = [4, 128], strides = [1, 1]} : vector<72x128xbf16> to vector<4x128xbf16>
    %79 = vector.extract_strided_slice %20 {offsets = [52, 0], sizes = [4, 128], strides = [1, 1]} : vector<72x128xbf16> to vector<4x128xbf16>
    %80 = vector.extract_strided_slice %20 {offsets = [52, 0], sizes = [3, 128], strides = [1, 1]} : vector<72x128xbf16> to vector<3x128xbf16>
    %81 = tpu.concatenate %21, %80 in 0 : vector<1x128xbf16>, vector<3x128xbf16> -> vector<4x128xbf16>
    %82 = arith.maximumf %78, %79 : vector<4x128xbf16>
    %83 = arith.maximumf %82, %81 : vector<4x128xbf16>
    %84 = arith.maximumf %77, %83 : vector<4x128xbf16>
    %85 = tpu.concatenate %84, %22 in 0 : vector<4x128xbf16>, vector<4x128xbf16> -> vector<8x128xbf16>
    %86 = vector.extract_strided_slice %20 {offsets = [48, 0], sizes = [4, 128], strides = [1, 1]} : vector<72x128xbf16> to vector<4x128xbf16>
    %87 = vector.extract_strided_slice %20 {offsets = [52, 0], sizes = [4, 128], strides = [1, 1]} : vector<72x128xbf16> to vector<4x128xbf16>
    %88 = vector.extract_strided_slice %20 {offsets = [52, 0], sizes = [3, 128], strides = [1, 1]} : vector<72x128xbf16> to vector<3x128xbf16>
    %89 = tpu.concatenate %21, %88 in 0 : vector<1x128xbf16>, vector<3x128xbf16> -> vector<4x128xbf16>
    %90 = arith.maximumf %86, %87 : vector<4x128xbf16>
    %91 = arith.maximumf %90, %89 : vector<4x128xbf16>
    %92 = vector.extract_strided_slice %20 {offsets = [56, 0], sizes = [4, 128], strides = [1, 1]} : vector<72x128xbf16> to vector<4x128xbf16>
    %93 = vector.extract_strided_slice %20 {offsets = [60, 0], sizes = [4, 128], strides = [1, 1]} : vector<72x128xbf16> to vector<4x128xbf16>
    %94 = vector.extract_strided_slice %20 {offsets = [60, 0], sizes = [3, 128], strides = [1, 1]} : vector<72x128xbf16> to vector<3x128xbf16>
    %95 = tpu.concatenate %21, %94 in 0 : vector<1x128xbf16>, vector<3x128xbf16> -> vector<4x128xbf16>
    %96 = arith.maximumf %92, %93 : vector<4x128xbf16>
    %97 = arith.maximumf %96, %95 : vector<4x128xbf16>
    %98 = arith.maximumf %91, %97 : vector<4x128xbf16>
    %99 = vector.extract_strided_slice %20 {offsets = [64, 0], sizes = [4, 128], strides = [1, 1]} : vector<72x128xbf16> to vector<4x128xbf16>
    %100 = vector.extract_strided_slice %20 {offsets = [68, 0], sizes = [4, 128], strides = [1, 1]} : vector<72x128xbf16> to vector<4x128xbf16>
    %101 = vector.extract_strided_slice %20 {offsets = [68, 0], sizes = [3, 128], strides = [1, 1]} : vector<72x128xbf16> to vector<3x128xbf16>
    %102 = tpu.concatenate %21, %101 in 0 : vector<1x128xbf16>, vector<3x128xbf16> -> vector<4x128xbf16>
    %103 = arith.maximumf %99, %100 : vector<4x128xbf16>
    %104 = arith.maximumf %103, %102 : vector<4x128xbf16>
    %105 = arith.maximumf %98, %104 : vector<4x128xbf16>
    %106 = tpu.concatenate %105, %22 in 0 : vector<4x128xbf16>, vector<4x128xbf16> -> vector<8x128xbf16>
    %107 = tpu.concatenate %43, %64, %85, %106 in 0 : vector<8x128xbf16>, vector<8x128xbf16>, vector<8x128xbf16>, vector<8x128xbf16> -> vector<32x128xbf16>
    %c0_18 = arith.constant 0 : index
    %c0_19 = arith.constant 0 : index
    %c0_20 = arith.constant 0 : index
    %108 = vector.load %arg8[%c0_18, %c0_19, %c0_20] : memref<1x32x128xbf16, #tpu.memory_space<vmem>>, vector<1x32x128xbf16>
    %109 = vector.shape_cast %108 : vector<1x32x128xbf16> to vector<32x128xbf16>
    %110 = vector.shape_cast %107 : vector<32x128xbf16> to vector<1x32x128xbf16>
    tpu.vector_store %arg8[%c0_18, %c0_19, %c0_20], %110 {strides = array<i32>} : memref<1x32x128xbf16, #tpu.memory_space<vmem>>, vector<1x32x128xbf16>,
    %c0_21 = arith.constant 0 : index
    %c0_22 = arith.constant 0 : index
    %111 = vector.load %arg6[%c0_21, %c0_22] : memref<128x128xbf16, #tpu.memory_space<vmem>>, vector<128x128xbf16>
    %cst_23 = arith.constant dense<0.000000e+00> : vector<32x128xf32>
    %112 = tpu.matmul %107, %111, %cst_23 {dimension_numbers = #tpu.dot_dimension_numbers<[1], [0], [0], [1], [0, 0, 1, 1], [], []>} : vector<32x128xbf16>, vector<128x128xbf16>, vector<32x128xf32> -> vector<32x128xf32>
    %c0_24 = arith.constant 0 : index
    %c0_25 = arith.constant 0 : index
    %113 = vector.load %arg7[%c0_24, %c0_25] : memref<1x128xf32, #tpu.memory_space<vmem>>, vector<1x128xf32>
    %114 = vector.broadcast %113 : vector<1x128xf32> to vector<32x128xf32>
    %115 = arith.addf %112, %114 : vector<32x128xf32>
    %cst_26 = arith.constant 0.000000e+00 : f32
    %116 = vector.broadcast %cst_26 : f32 to vector<32x128xf32>
    %117 = arith.maximumf %115, %116 : vector<32x128xf32>
    %118 = tpu.iota {dimensions = array<i32: 0>} : vector<32x1xi32>
    %c8_i32 = arith.constant 8 : i32
    %c0_i32 = arith.constant 0 : i32
    %119 = arith.cmpi eq, %c8_i32, %c0_i32 : i32
    %c1_i32 = arith.constant 1 : i32
    %120 = arith.select %119, %c1_i32, %c8_i32 : i32
    %121 = vector.broadcast %120 : i32 to vector<32x1xi32>
    %122 = arith.remsi %118, %121 : vector<32x1xi32>
    %c0_i32_27 = arith.constant 0 : i32
    %123 = vector.broadcast %c0_i32_27 : i32 to vector<32x1xi32>
    %124 = arith.cmpi ne, %122, %123 : vector<32x1xi32>
    %c0_i32_28 = arith.constant 0 : i32
    %125 = vector.broadcast %c0_i32_28 : i32 to vector<32x1xi32>
    %126 = arith.cmpi slt, %122, %125 : vector<32x1xi32>
    %c0_i32_29 = arith.constant 0 : i32
    %127 = arith.cmpi slt, %120, %c0_i32_29 : i32
    %128 = vector.broadcast %127 : i1 to vector<32x1xi1>
    %129 = vector.broadcast %128 : vector<32x1xi1> to vector<32x1xi1>
    %130 = arith.xori %126, %129 : vector<32x1xi1>
    %131 = arith.andi %130, %124 : vector<32x1xi1>
    %132 = vector.broadcast %120 : i32 to vector<32x1xi32>
    %133 = arith.addi %122, %132 : vector<32x1xi32>
    %134 = arith.select %131, %133, %122 : vector<32x1xi1>, vector<32x1xi32>
    %c4_i32 = arith.constant 4 : i32
    %135 = vector.broadcast %c4_i32 : i32 to vector<32x1xi32>
    %136 = arith.cmpi slt, %134, %135 : vector<32x1xi32>
    %cst_30 = arith.constant 0.000000e+00 : f32
    %137 = vector.shape_cast %136 : vector<32x1xi1> to vector<32x1xi1>
    %138 = vector.broadcast %137 : vector<32x1xi1> to vector<32x128xi1>
    %139 = vector.broadcast %cst_30 : f32 to vector<32x128xf32>
    %140 = arith.select %138, %117, %139 : vector<32x128xi1>, vector<32x128xf32>
    %141 = arith.truncf %140 : vector<32x128xf32> to vector<32x128xbf16>
    %c0_31 = arith.constant 0 : index
    %c0_32 = arith.constant 0 : index
    %c0_33 = arith.constant 0 : index
    %142 = vector.load %arg9[%c0_31, %c0_32, %c0_33] : memref<1x32x128xbf16, #tpu.memory_space<vmem>>, vector<1x32x128xbf16>
    %143 = vector.shape_cast %142 : vector<1x32x128xbf16> to vector<32x128xbf16>
    %144 = vector.shape_cast %141 : vector<32x128xbf16> to vector<1x32x128xbf16>
    tpu.vector_store %arg9[%c0_31, %c0_32, %c0_33], %144 {strides = array<i32>} : memref<1x32x128xbf16, #tpu.memory_space<vmem>>, vector<1x32x128xbf16>,
    return
  }
  func.func @transform_0(%arg0: i32, %arg1: i32) -> (i32, i32, i32) {
    %c0_i32 = arith.constant 0 : i32
    %c0_i32_0 = arith.constant 0 : i32
    return %arg0, %arg1, %c0_i32 : i32, i32, i32
  }
  func.func @transform_1(%arg0: i32, %arg1: i32) -> (i32, i32, i32) {
    %c2_i32 = arith.constant 2 : i32
    %0 = arith.muli %c2_i32, %arg1 : i32
    %c4_i32 = arith.constant 4 : i32
    %1 = arith.muli %0, %c4_i32 : i32
    %c1_i32 = arith.constant 1 : i32
    %2 = arith.subi %1, %c1_i32 : i32
    %c0_i32 = arith.constant 0 : i32
    %3 = arith.maxsi %2, %c0_i32 : i32
    %c0_i32_0 = arith.constant 0 : i32
    %c0_i32_1 = arith.constant 0 : i32
    return %arg0, %3, %c0_i32_0 : i32, i32, i32
  }
  func.func @transform_2(%arg0: i32, %arg1: i32) -> (i32, i32) {
    %c0_i32 = arith.constant 0 : i32
    %c0_i32_0 = arith.constant 0 : i32
    %c0_i32_1 = arith.constant 0 : i32
    return %c0_i32, %c0_i32_0 : i32, i32
  }
  func.func @transform_3(%arg0: i32, %arg1: i32) -> (i32, i32) {
    %c0_i32 = arith.constant 0 : i32
    %c0_i32_0 = arith.constant 0 : i32
    %c0_i32_1 = arith.constant 0 : i32
    return %c0_i32, %c0_i32_0 : i32, i32
  }
  func.func @transform_4(%arg0: i32, %arg1: i32) -> (i32, i32) {
    %c0_i32 = arith.constant 0 : i32
    %c0_i32_0 = arith.constant 0 : i32
    %c0_i32_1 = arith.constant 0 : i32
    return %c0_i32, %c0_i32_0 : i32, i32
  }
  func.func @transform_5(%arg0: i32, %arg1: i32) -> (i32, i32) {
    %c0_i32 = arith.constant 0 : i32
    %c0_i32_0 = arith.constant 0 : i32
    %c0_i32_1 = arith.constant 0 : i32
    return %c0_i32, %c0_i32_0 : i32, i32
  }
  func.func @transform_6(%arg0: i32, %arg1: i32) -> (i32, i32, i32) {
    %c0_i32 = arith.constant 0 : i32
    %c0_i32_0 = arith.constant 0 : i32
    return %arg0, %arg1, %c0_i32 : i32, i32, i32
  }
  func.func @transform_7(%arg0: i32, %arg1: i32) -> (i32, i32, i32) {
    %c0_i32 = arith.constant 0 : i32
    %c0_i32_0 = arith.constant 0 : i32
    return %arg0, %arg1, %c0_i32 : i32, i32, i32
  }
}

module attributes {stable_mosaic.version = 11 : i64} {
  func.func @_res_embed_kernel(%arg0: i32, %arg1: i32, %arg2: memref<1x32x128xbf16, #tpu.memory_space<vmem>>, %arg3: memref<1x8x128xbf16, #tpu.memory_space<vmem>>, %arg4: memref<1x8x128xbf16, #tpu.memory_space<vmem>>, %arg5: memref<1x32x128xbf16, #tpu.memory_space<vmem>>, %arg6: memref<9x128x128xbf16, #tpu.memory_space<vmem>>, %arg7: memref<1x128xf32, #tpu.memory_space<vmem>>, %arg8: memref<128x256xbf16, #tpu.memory_space<vmem>>, %arg9: memref<1x256xf32, #tpu.memory_space<vmem>>, %arg10: memref<128x256xbf16, #tpu.memory_space<vmem>>, %arg11: memref<1x256xf32, #tpu.memory_space<vmem>>, %arg12: memref<256x128xbf16, #tpu.memory_space<vmem>>, %arg13: memref<1x128xf32, #tpu.memory_space<vmem>>, %arg14: memref<1x1x128xf32, #tpu.memory_space<vmem>>, %arg15: memref<1x256xf32, #tpu.memory_space<vmem>>) attributes {dimension_semantics = [#tpu.dimension_semantics<parallel>, #tpu.dimension_semantics<arbitrary>], iteration_bounds = array<i64: 2, 1>, scalar_prefetch = 0 : i64, scratch_operands = 1 : i64, tpu.core_type = #tpu.core_type<tc>, window_params = [{transform_indices = @transform_0, window_bounds = array<i64: 1, 32, 128>}, {transform_indices = @transform_1, window_bounds = array<i64: 1, 8, 128>}, {transform_indices = @transform_2, window_bounds = array<i64: 1, 8, 128>}, {transform_indices = @transform_3, window_bounds = array<i64: 1, 32, 128>}, {pipeline_mode = #tpu.pipeline_mode<synchronous>, transform_indices = @transform_4, window_bounds = array<i64: 9, 128, 128>}, {pipeline_mode = #tpu.pipeline_mode<synchronous>, transform_indices = @transform_5, window_bounds = array<i64: 1, 128>}, {pipeline_mode = #tpu.pipeline_mode<synchronous>, transform_indices = @transform_6, window_bounds = array<i64: 128, 256>}, {pipeline_mode = #tpu.pipeline_mode<synchronous>, transform_indices = @transform_7, window_bounds = array<i64: 1, 256>}, {pipeline_mode = #tpu.pipeline_mode<synchronous>, transform_indices = @transform_8, window_bounds = array<i64: 128, 256>}, {pipeline_mode = #tpu.pipeline_mode<synchronous>, transform_indices = @transform_9, window_bounds = array<i64: 1, 256>}, {pipeline_mode = #tpu.pipeline_mode<synchronous>, transform_indices = @transform_10, window_bounds = array<i64: 256, 128>}, {pipeline_mode = #tpu.pipeline_mode<synchronous>, transform_indices = @transform_11, window_bounds = array<i64: 1, 128>}, {transform_indices = @transform_12, window_bounds = array<i64: 1, 1, 128>}]} {
    %c0_i32 = arith.constant 0 : i32
    %0 = arith.cmpi eq, %arg1, %c0_i32 : i32
    %1 = arith.extui %0 : i1 to i32
    %c0_i32_0 = arith.constant 0 : i32
    %2 = arith.cmpi ne, %1, %c0_i32_0 : i32
    scf.if %2 {
      %cst_70 = arith.constant 0.000000e+00 : f32
      %112 = vector.broadcast %cst_70 : f32 to vector<1x256xf32>
      %c0_71 = arith.constant 0 : index
      %c0_72 = arith.constant 0 : index
      %113 = vector.load %arg15[%c0_71, %c0_72] : memref<1x256xf32, #tpu.memory_space<vmem>>, vector<1x256xf32>
      tpu.vector_store %arg15[%c0_71, %c0_72], %112 {strides = array<i32>} : memref<1x256xf32, #tpu.memory_space<vmem>>, vector<1x256xf32>,
    } else {
    }
    %cst = arith.constant 0.000000e+00 : bf16
    %3 = vector.broadcast %cst : bf16 to vector<1x128xbf16>
    %c0_i32_1 = arith.constant 0 : i32
    %4 = arith.cmpi eq, %arg1, %c0_i32_1 : i32
    %cst_2 = arith.constant 0.000000e+00 : bf16
    %5 = vector.broadcast %cst_2 : bf16 to vector<8x128xbf16>
    %c0 = arith.constant 0 : index
    %c0_3 = arith.constant 0 : index
    %c0_4 = arith.constant 0 : index
    %6 = vector.load %arg3[%c0, %c0_3, %c0_4] : memref<1x8x128xbf16, #tpu.memory_space<vmem>>, vector<1x8x128xbf16>
    %7 = vector.shape_cast %6 : vector<1x8x128xbf16> to vector<8x128xbf16>
    %8 = arith.select %4, %5, %7 : vector<8x128xbf16>
    %c0_i32_5 = arith.constant 0 : i32
    %9 = arith.cmpi eq, %arg1, %c0_i32_5 : i32
    %cst_6 = arith.constant 0.000000e+00 : bf16
    %10 = vector.broadcast %cst_6 : bf16 to vector<8x128xbf16>
    %c0_7 = arith.constant 0 : index
    %c0_8 = arith.constant 0 : index
    %c0_9 = arith.constant 0 : index
    %11 = vector.load %arg4[%c0_7, %c0_8, %c0_9] : memref<1x8x128xbf16, #tpu.memory_space<vmem>>, vector<1x8x128xbf16>
    %12 = vector.shape_cast %11 : vector<1x8x128xbf16> to vector<8x128xbf16>
    %13 = arith.select %9, %10, %12 : vector<8x128xbf16>
    %c0_10 = arith.constant 0 : index
    %c0_11 = arith.constant 0 : index
    %c0_12 = arith.constant 0 : index
    %14 = vector.load %arg2[%c0_10, %c0_11, %c0_12] : memref<1x32x128xbf16, #tpu.memory_space<vmem>>, vector<1x32x128xbf16>
    %15 = vector.shape_cast %14 : vector<1x32x128xbf16> to vector<32x128xbf16>
    %16 = tpu.concatenate %3, %8, %15, %13, %3 in 0 : vector<1x128xbf16>, vector<8x128xbf16>, vector<32x128xbf16>, vector<8x128xbf16>, vector<1x128xbf16> -> vector<50x128xbf16>
    %cst_13 = arith.constant 0.000000e+00 : f32
    %17 = vector.broadcast %cst_13 : f32 to vector<32x128xf32>
    %18 = vector.extract_strided_slice %16 {offsets = [0, 0], sizes = [32, 128], strides = [1, 1]} : vector<50x128xbf16> to vector<32x128xbf16>
    %c0_14 = arith.constant 0 : index
    %c0_15 = arith.constant 0 : index
    %c0_16 = arith.constant 0 : index
    %19 = vector.load %arg6[%c0_14, %c0_15, %c0_16] : memref<9x128x128xbf16, #tpu.memory_space<vmem>>, vector<1x128x128xbf16>
    %20 = vector.shape_cast %19 : vector<1x128x128xbf16> to vector<128x128xbf16>
    %cst_17 = arith.constant dense<0.000000e+00> : vector<32x128xf32>
    %21 = tpu.matmul %18, %20, %cst_17 {dimension_numbers = #tpu.dot_dimension_numbers<[1], [0], [0], [1], [0, 0, 1, 1], [], []>} : vector<32x128xbf16>, vector<128x128xbf16>, vector<32x128xf32> -> vector<32x128xf32>
    %22 = arith.addf %17, %21 : vector<32x128xf32>
    %23 = vector.extract_strided_slice %16 {offsets = [1, 0], sizes = [32, 128], strides = [1, 1]} : vector<50x128xbf16> to vector<32x128xbf16>
    %c1 = arith.constant 1 : index
    %c0_18 = arith.constant 0 : index
    %c0_19 = arith.constant 0 : index
    %24 = vector.load %arg6[%c1, %c0_18, %c0_19] : memref<9x128x128xbf16, #tpu.memory_space<vmem>>, vector<1x128x128xbf16>
    %25 = vector.shape_cast %24 : vector<1x128x128xbf16> to vector<128x128xbf16>
    %cst_20 = arith.constant dense<0.000000e+00> : vector<32x128xf32>
    %26 = tpu.matmul %23, %25, %cst_20 {dimension_numbers = #tpu.dot_dimension_numbers<[1], [0], [0], [1], [0, 0, 1, 1], [], []>} : vector<32x128xbf16>, vector<128x128xbf16>, vector<32x128xf32> -> vector<32x128xf32>
    %27 = arith.addf %22, %26 : vector<32x128xf32>
    %28 = vector.extract_strided_slice %16 {offsets = [2, 0], sizes = [32, 128], strides = [1, 1]} : vector<50x128xbf16> to vector<32x128xbf16>
    %c2 = arith.constant 2 : index
    %c0_21 = arith.constant 0 : index
    %c0_22 = arith.constant 0 : index
    %29 = vector.load %arg6[%c2, %c0_21, %c0_22] : memref<9x128x128xbf16, #tpu.memory_space<vmem>>, vector<1x128x128xbf16>
    %30 = vector.shape_cast %29 : vector<1x128x128xbf16> to vector<128x128xbf16>
    %cst_23 = arith.constant dense<0.000000e+00> : vector<32x128xf32>
    %31 = tpu.matmul %28, %30, %cst_23 {dimension_numbers = #tpu.dot_dimension_numbers<[1], [0], [0], [1], [0, 0, 1, 1], [], []>} : vector<32x128xbf16>, vector<128x128xbf16>, vector<32x128xf32> -> vector<32x128xf32>
    %32 = arith.addf %27, %31 : vector<32x128xf32>
    %33 = vector.extract_strided_slice %16 {offsets = [8, 0], sizes = [32, 128], strides = [1, 1]} : vector<50x128xbf16> to vector<32x128xbf16>
    %c3 = arith.constant 3 : index
    %c0_24 = arith.constant 0 : index
    %c0_25 = arith.constant 0 : index
    %34 = vector.load %arg6[%c3, %c0_24, %c0_25] : memref<9x128x128xbf16, #tpu.memory_space<vmem>>, vector<1x128x128xbf16>
    %35 = vector.shape_cast %34 : vector<1x128x128xbf16> to vector<128x128xbf16>
    %cst_26 = arith.constant dense<0.000000e+00> : vector<32x128xf32>
    %36 = tpu.matmul %33, %35, %cst_26 {dimension_numbers = #tpu.dot_dimension_numbers<[1], [0], [0], [1], [0, 0, 1, 1], [], []>} : vector<32x128xbf16>, vector<128x128xbf16>, vector<32x128xf32> -> vector<32x128xf32>
    %37 = arith.addf %32, %36 : vector<32x128xf32>
    %38 = vector.extract_strided_slice %16 {offsets = [9, 0], sizes = [32, 128], strides = [1, 1]} : vector<50x128xbf16> to vector<32x128xbf16>
    %c4 = arith.constant 4 : index
    %c0_27 = arith.constant 0 : index
    %c0_28 = arith.constant 0 : index
    %39 = vector.load %arg6[%c4, %c0_27, %c0_28] : memref<9x128x128xbf16, #tpu.memory_space<vmem>>, vector<1x128x128xbf16>
    %40 = vector.shape_cast %39 : vector<1x128x128xbf16> to vector<128x128xbf16>
    %cst_29 = arith.constant dense<0.000000e+00> : vector<32x128xf32>
    %41 = tpu.matmul %38, %40, %cst_29 {dimension_numbers = #tpu.dot_dimension_numbers<[1], [0], [0], [1], [0, 0, 1, 1], [], []>} : vector<32x128xbf16>, vector<128x128xbf16>, vector<32x128xf32> -> vector<32x128xf32>
    %42 = arith.addf %37, %41 : vector<32x128xf32>
    %43 = vector.extract_strided_slice %16 {offsets = [10, 0], sizes = [32, 128], strides = [1, 1]} : vector<50x128xbf16> to vector<32x128xbf16>
    %c5 = arith.constant 5 : index
    %c0_30 = arith.constant 0 : index
    %c0_31 = arith.constant 0 : index
    %44 = vector.load %arg6[%c5, %c0_30, %c0_31] : memref<9x128x128xbf16, #tpu.memory_space<vmem>>, vector<1x128x128xbf16>
    %45 = vector.shape_cast %44 : vector<1x128x128xbf16> to vector<128x128xbf16>
    %cst_32 = arith.constant dense<0.000000e+00> : vector<32x128xf32>
    %46 = tpu.matmul %43, %45, %cst_32 {dimension_numbers = #tpu.dot_dimension_numbers<[1], [0], [0], [1], [0, 0, 1, 1], [], []>} : vector<32x128xbf16>, vector<128x128xbf16>, vector<32x128xf32> -> vector<32x128xf32>
    %47 = arith.addf %42, %46 : vector<32x128xf32>
    %48 = vector.extract_strided_slice %16 {offsets = [16, 0], sizes = [32, 128], strides = [1, 1]} : vector<50x128xbf16> to vector<32x128xbf16>
    %c6 = arith.constant 6 : index
    %c0_33 = arith.constant 0 : index
    %c0_34 = arith.constant 0 : index
    %49 = vector.load %arg6[%c6, %c0_33, %c0_34] : memref<9x128x128xbf16, #tpu.memory_space<vmem>>, vector<1x128x128xbf16>
    %50 = vector.shape_cast %49 : vector<1x128x128xbf16> to vector<128x128xbf16>
    %cst_35 = arith.constant dense<0.000000e+00> : vector<32x128xf32>
    %51 = tpu.matmul %48, %50, %cst_35 {dimension_numbers = #tpu.dot_dimension_numbers<[1], [0], [0], [1], [0, 0, 1, 1], [], []>} : vector<32x128xbf16>, vector<128x128xbf16>, vector<32x128xf32> -> vector<32x128xf32>
    %52 = arith.addf %47, %51 : vector<32x128xf32>
    %53 = vector.extract_strided_slice %16 {offsets = [17, 0], sizes = [32, 128], strides = [1, 1]} : vector<50x128xbf16> to vector<32x128xbf16>
    %c7 = arith.constant 7 : index
    %c0_36 = arith.constant 0 : index
    %c0_37 = arith.constant 0 : index
    %54 = vector.load %arg6[%c7, %c0_36, %c0_37] : memref<9x128x128xbf16, #tpu.memory_space<vmem>>, vector<1x128x128xbf16>
    %55 = vector.shape_cast %54 : vector<1x128x128xbf16> to vector<128x128xbf16>
    %cst_38 = arith.constant dense<0.000000e+00> : vector<32x128xf32>
    %56 = tpu.matmul %53, %55, %cst_38 {dimension_numbers = #tpu.dot_dimension_numbers<[1], [0], [0], [1], [0, 0, 1, 1], [], []>} : vector<32x128xbf16>, vector<128x128xbf16>, vector<32x128xf32> -> vector<32x128xf32>
    %57 = arith.addf %52, %56 : vector<32x128xf32>
    %58 = vector.extract_strided_slice %16 {offsets = [18, 0], sizes = [32, 128], strides = [1, 1]} : vector<50x128xbf16> to vector<32x128xbf16>
    %c8 = arith.constant 8 : index
    %c0_39 = arith.constant 0 : index
    %c0_40 = arith.constant 0 : index
    %59 = vector.load %arg6[%c8, %c0_39, %c0_40] : memref<9x128x128xbf16, #tpu.memory_space<vmem>>, vector<1x128x128xbf16>
    %60 = vector.shape_cast %59 : vector<1x128x128xbf16> to vector<128x128xbf16>
    %cst_41 = arith.constant dense<0.000000e+00> : vector<32x128xf32>
    %61 = tpu.matmul %58, %60, %cst_41 {dimension_numbers = #tpu.dot_dimension_numbers<[1], [0], [0], [1], [0, 0, 1, 1], [], []>} : vector<32x128xbf16>, vector<128x128xbf16>, vector<32x128xf32> -> vector<32x128xf32>
    %62 = arith.addf %57, %61 : vector<32x128xf32>
    %c0_42 = arith.constant 0 : index
    %c0_43 = arith.constant 0 : index
    %63 = vector.load %arg7[%c0_42, %c0_43] : memref<1x128xf32, #tpu.memory_space<vmem>>, vector<1x128xf32>
    %64 = vector.broadcast %63 : vector<1x128xf32> to vector<32x128xf32>
    %65 = arith.addf %62, %64 : vector<32x128xf32>
    %cst_44 = arith.constant 0.000000e+00 : f32
    %66 = vector.broadcast %cst_44 : f32 to vector<32x128xf32>
    %67 = arith.maximumf %65, %66 : vector<32x128xf32>
    %68 = arith.truncf %67 : vector<32x128xf32> to vector<32x128xbf16>
    %c0_45 = arith.constant 0 : index
    %c0_46 = arith.constant 0 : index
    %69 = vector.load %arg8[%c0_45, %c0_46] : memref<128x256xbf16, #tpu.memory_space<vmem>>, vector<128x256xbf16>
    %cst_47 = arith.constant dense<0.000000e+00> : vector<32x256xf32>
    %70 = tpu.matmul %68, %69, %cst_47 {dimension_numbers = #tpu.dot_dimension_numbers<[1], [0], [0], [1], [0, 0, 1, 1], [], []>} : vector<32x128xbf16>, vector<128x256xbf16>, vector<32x256xf32> -> vector<32x256xf32>
    %c0_48 = arith.constant 0 : index
    %c0_49 = arith.constant 0 : index
    %71 = vector.load %arg9[%c0_48, %c0_49] : memref<1x256xf32, #tpu.memory_space<vmem>>, vector<1x256xf32>
    %72 = vector.broadcast %71 : vector<1x256xf32> to vector<32x256xf32>
    %73 = arith.addf %70, %72 : vector<32x256xf32>
    %c0_50 = arith.constant 0 : index
    %c0_51 = arith.constant 0 : index
    %c0_52 = arith.constant 0 : index
    %74 = vector.load %arg5[%c0_50, %c0_51, %c0_52] : memref<1x32x128xbf16, #tpu.memory_space<vmem>>, vector<1x32x128xbf16>
    %75 = vector.shape_cast %74 : vector<1x32x128xbf16> to vector<32x128xbf16>
    %c0_53 = arith.constant 0 : index
    %c0_54 = arith.constant 0 : index
    %76 = vector.load %arg10[%c0_53, %c0_54] : memref<128x256xbf16, #tpu.memory_space<vmem>>, vector<128x256xbf16>
    %cst_55 = arith.constant dense<0.000000e+00> : vector<32x256xf32>
    %77 = tpu.matmul %75, %76, %cst_55 {dimension_numbers = #tpu.dot_dimension_numbers<[1], [0], [0], [1], [0, 0, 1, 1], [], []>} : vector<32x128xbf16>, vector<128x256xbf16>, vector<32x256xf32> -> vector<32x256xf32>
    %78 = arith.addf %73, %77 : vector<32x256xf32>
    %c0_56 = arith.constant 0 : index
    %c0_57 = arith.constant 0 : index
    %79 = vector.load %arg11[%c0_56, %c0_57] : memref<1x256xf32, #tpu.memory_space<vmem>>, vector<1x256xf32>
    %80 = vector.broadcast %79 : vector<1x256xf32> to vector<32x256xf32>
    %81 = arith.addf %78, %80 : vector<32x256xf32>
    %cst_58 = arith.constant 0.000000e+00 : f32
    %82 = vector.broadcast %cst_58 : f32 to vector<32x256xf32>
    %83 = arith.maximumf %81, %82 : vector<32x256xf32>
    %84 = tpu.iota {dimensions = array<i32: 1>} : vector<1x32xi32>
    %c8_i32 = arith.constant 8 : i32
    %c0_i32_59 = arith.constant 0 : i32
    %85 = arith.cmpi eq, %c8_i32, %c0_i32_59 : i32
    %c1_i32 = arith.constant 1 : i32
    %86 = arith.select %85, %c1_i32, %c8_i32 : i32
    %87 = vector.broadcast %86 : i32 to vector<1x32xi32>
    %88 = arith.remsi %84, %87 : vector<1x32xi32>
    %c0_i32_60 = arith.constant 0 : i32
    %89 = vector.broadcast %c0_i32_60 : i32 to vector<1x32xi32>
    %90 = arith.cmpi ne, %88, %89 : vector<1x32xi32>
    %c0_i32_61 = arith.constant 0 : i32
    %91 = vector.broadcast %c0_i32_61 : i32 to vector<1x32xi32>
    %92 = arith.cmpi slt, %88, %91 : vector<1x32xi32>
    %c0_i32_62 = arith.constant 0 : i32
    %93 = arith.cmpi slt, %86, %c0_i32_62 : i32
    %94 = vector.broadcast %93 : i1 to vector<1x32xi1>
    %95 = vector.broadcast %94 : vector<1x32xi1> to vector<1x32xi1>
    %96 = arith.xori %92, %95 : vector<1x32xi1>
    %97 = arith.andi %96, %90 : vector<1x32xi1>
    %98 = vector.broadcast %86 : i32 to vector<1x32xi32>
    %99 = arith.addi %88, %98 : vector<1x32xi32>
    %100 = arith.select %97, %99, %88 : vector<1x32xi1>, vector<1x32xi32>
    %c4_i32 = arith.constant 4 : i32
    %101 = vector.broadcast %c4_i32 : i32 to vector<1x32xi32>
    %102 = arith.cmpi slt, %100, %101 : vector<1x32xi32>
    %103 = arith.extui %102 : vector<1x32xi1> to vector<1x32xi32>
    %104 = arith.sitofp %103 : vector<1x32xi32> to vector<1x32xf32>
    %c0_63 = arith.constant 0 : index
    %c0_64 = arith.constant 0 : index
    %105 = vector.load %arg15[%c0_63, %c0_64] : memref<1x256xf32, #tpu.memory_space<vmem>>, vector<1x256xf32>
    %cst_65 = arith.constant dense<0.000000e+00> : vector<1x256xf32>
    %106 = tpu.matmul %104, %83, %cst_65 {dimension_numbers = #tpu.dot_dimension_numbers<[1], [0], [0], [1], [0, 0, 1, 1], [], []>} : vector<1x32xf32>, vector<32x256xf32>, vector<1x256xf32> -> vector<1x256xf32>
    %107 = arith.addf %105, %106 : vector<1x256xf32>
    %c0_66 = arith.constant 0 : index
    %c0_67 = arith.constant 0 : index
    %108 = vector.load %arg15[%c0_66, %c0_67] : memref<1x256xf32, #tpu.memory_space<vmem>>, vector<1x256xf32>
    tpu.vector_store %arg15[%c0_66, %c0_67], %107 {strides = array<i32>} : memref<1x256xf32, #tpu.memory_space<vmem>>, vector<1x256xf32>,
    %c0_i32_68 = arith.constant 0 : i32
    %109 = arith.cmpi eq, %arg1, %c0_i32_68 : i32
    %110 = arith.extui %109 : i1 to i32
    %c0_i32_69 = arith.constant 0 : i32
    %111 = arith.cmpi ne, %110, %c0_i32_69 : i32
    scf.if %111 {
      %c0_70 = arith.constant 0 : index
      %c0_71 = arith.constant 0 : index
      %112 = vector.load %arg15[%c0_70, %c0_71] : memref<1x256xf32, #tpu.memory_space<vmem>>, vector<1x256xf32>
      %cst_72 = arith.constant 6.250000e-02 : f32
      %113 = vector.broadcast %cst_72 : f32 to vector<1x256xf32>
      %114 = arith.mulf %112, %113 : vector<1x256xf32>
      %115 = arith.truncf %114 : vector<1x256xf32> to vector<1x256xbf16>
      %c0_73 = arith.constant 0 : index
      %c0_74 = arith.constant 0 : index
      %116 = vector.load %arg12[%c0_73, %c0_74] : memref<256x128xbf16, #tpu.memory_space<vmem>>, vector<256x128xbf16>
      %cst_75 = arith.constant dense<0.000000e+00> : vector<1x128xf32>
      %117 = tpu.matmul %115, %116, %cst_75 {dimension_numbers = #tpu.dot_dimension_numbers<[1], [0], [0], [1], [0, 0, 1, 1], [], []>} : vector<1x256xbf16>, vector<256x128xbf16>, vector<1x128xf32> -> vector<1x128xf32>
      %c0_76 = arith.constant 0 : index
      %c0_77 = arith.constant 0 : index
      %118 = vector.load %arg13[%c0_76, %c0_77] : memref<1x128xf32, #tpu.memory_space<vmem>>, vector<1x128xf32>
      %119 = arith.addf %117, %118 : vector<1x128xf32>
      %c0_78 = arith.constant 0 : index
      %c0_79 = arith.constant 0 : index
      %c0_80 = arith.constant 0 : index
      %120 = vector.load %arg14[%c0_78, %c0_79, %c0_80] : memref<1x1x128xf32, #tpu.memory_space<vmem>>, vector<1x1x128xf32>
      %121 = vector.shape_cast %120 : vector<1x1x128xf32> to vector<1x128xf32>
      %122 = vector.shape_cast %119 : vector<1x128xf32> to vector<1x1x128xf32>
      tpu.vector_store %arg14[%c0_78, %c0_79, %c0_80], %122 {strides = array<i32>} : memref<1x1x128xf32, #tpu.memory_space<vmem>>, vector<1x1x128xf32>,
    } else {
    }
    return
  }
  func.func @transform_0(%arg0: i32, %arg1: i32) -> (i32, i32, i32) {
    %c0_i32 = arith.constant 0 : i32
    %c0_i32_0 = arith.constant 0 : i32
    return %arg0, %arg1, %c0_i32 : i32, i32, i32
  }
  func.func @transform_1(%arg0: i32, %arg1: i32) -> (i32, i32, i32) {
    %c4_i32 = arith.constant 4 : i32
    %0 = arith.muli %arg1, %c4_i32 : i32
    %c1_i32 = arith.constant 1 : i32
    %1 = arith.subi %0, %c1_i32 : i32
    %c0_i32 = arith.constant 0 : i32
    %2 = arith.maxsi %1, %c0_i32 : i32
    %c0_i32_0 = arith.constant 0 : i32
    %c0_i32_1 = arith.constant 0 : i32
    return %arg0, %2, %c0_i32_0 : i32, i32, i32
  }
  func.func @transform_2(%arg0: i32, %arg1: i32) -> (i32, i32, i32) {
    %c1_i32 = arith.constant 1 : i32
    %0 = arith.addi %arg1, %c1_i32 : i32
    %c4_i32 = arith.constant 4 : i32
    %1 = arith.muli %0, %c4_i32 : i32
    %c3_i32 = arith.constant 3 : i32
    %2 = arith.minsi %1, %c3_i32 : i32
    %c0_i32 = arith.constant 0 : i32
    %c0_i32_0 = arith.constant 0 : i32
    return %arg0, %2, %c0_i32 : i32, i32, i32
  }
  func.func @transform_3(%arg0: i32, %arg1: i32) -> (i32, i32, i32) {
    %c0_i32 = arith.constant 0 : i32
    %c0_i32_0 = arith.constant 0 : i32
    return %arg0, %arg1, %c0_i32 : i32, i32, i32
  }
  func.func @transform_4(%arg0: i32, %arg1: i32) -> (i32, i32, i32) {
    %c0_i32 = arith.constant 0 : i32
    %c0_i32_0 = arith.constant 0 : i32
    %c0_i32_1 = arith.constant 0 : i32
    %c0_i32_2 = arith.constant 0 : i32
    return %c0_i32, %c0_i32_0, %c0_i32_1 : i32, i32, i32
  }
  func.func @transform_5(%arg0: i32, %arg1: i32) -> (i32, i32) {
    %c0_i32 = arith.constant 0 : i32
    %c0_i32_0 = arith.constant 0 : i32
    %c0_i32_1 = arith.constant 0 : i32
    return %c0_i32, %c0_i32_0 : i32, i32
  }
  func.func @transform_6(%arg0: i32, %arg1: i32) -> (i32, i32) {
    %c0_i32 = arith.constant 0 : i32
    %c0_i32_0 = arith.constant 0 : i32
    %c0_i32_1 = arith.constant 0 : i32
    return %c0_i32, %c0_i32_0 : i32, i32
  }
  func.func @transform_7(%arg0: i32, %arg1: i32) -> (i32, i32) {
    %c0_i32 = arith.constant 0 : i32
    %c0_i32_0 = arith.constant 0 : i32
    %c0_i32_1 = arith.constant 0 : i32
    return %c0_i32, %c0_i32_0 : i32, i32
  }
  func.func @transform_8(%arg0: i32, %arg1: i32) -> (i32, i32) {
    %c0_i32 = arith.constant 0 : i32
    %c0_i32_0 = arith.constant 0 : i32
    %c0_i32_1 = arith.constant 0 : i32
    return %c0_i32, %c0_i32_0 : i32, i32
  }
  func.func @transform_9(%arg0: i32, %arg1: i32) -> (i32, i32) {
    %c0_i32 = arith.constant 0 : i32
    %c0_i32_0 = arith.constant 0 : i32
    %c0_i32_1 = arith.constant 0 : i32
    return %c0_i32, %c0_i32_0 : i32, i32
  }
  func.func @transform_10(%arg0: i32, %arg1: i32) -> (i32, i32) {
    %c0_i32 = arith.constant 0 : i32
    %c0_i32_0 = arith.constant 0 : i32
    %c0_i32_1 = arith.constant 0 : i32
    return %c0_i32, %c0_i32_0 : i32, i32
  }
  func.func @transform_11(%arg0: i32, %arg1: i32) -> (i32, i32) {
    %c0_i32 = arith.constant 0 : i32
    %c0_i32_0 = arith.constant 0 : i32
    %c0_i32_1 = arith.constant 0 : i32
    return %c0_i32, %c0_i32_0 : i32, i32
  }
  func.func @transform_12(%arg0: i32, %arg1: i32) -> (i32, i32, i32) {
    %c0_i32 = arith.constant 0 : i32
    %c0_i32_0 = arith.constant 0 : i32
    %c0_i32_1 = arith.constant 0 : i32
    return %arg0, %c0_i32, %c0_i32_0 : i32, i32, i32
  }
}

</mosaic_0001>

<llo_original>
// kernel: encoder_cnn_forward.2
$region0: #{encoder_cnn_forward.2}
  #allocation0 [shape = 'u32[]', space=smem, size = 0x4, offset = 0x4, fixed_abs, tag = 'smem constant byte address 0x4 - core index']
  #allocation1 [shape = 'u32[144,128]{1,0:T(1,128)}', space=vmem, size = 0x12000, scoped, tag = 'internal scratch']
  %s0 = inlined_call_operand.vmem [shape: bf16[2,64,147], index: 0, kind: input, shape index: {}, may-alias: {0,1}]
  %s1 = inlined_call_operand.vmem [shape: bf16[2,64,147], index: 1, kind: input, shape index: {}, may-alias: {0,1}]
  %s2 = inlined_call_operand.vmem [shape: bf16[147,128], index: 2, kind: input, shape index: {}]
  %s3 = inlined_call_operand.vmem [shape: f32[1,128], index: 3, kind: input, shape index: {}]
  %s4 = inlined_call_operand.vmem [shape: bf16[128,128], index: 4, kind: input, shape index: {}]
  %s5 = inlined_call_operand.vmem [shape: f32[1,128], index: 5, kind: input, shape index: {}]
  %s6 = inlined_call_operand.vmem [shape: bf16[2,32,128], index: 6, kind: output, shape index: {0}]
  %s7 = inlined_call_operand.vmem [shape: bf16[2,32,128], index: 7, kind: output, shape index: {1}]
  %8 = xla_tuple %s6, %s7
  %s9 = sld [smem:[#allocation0]]
  $region65: #{encoder_cnn_forward.2} parent=0
    _
  %s11 = ssub.s32 1, %s9
  %s12 = scalar_select 0, %s11, %s9
  loop: start=0, step=1, limit=4
  $region2: #{encoder_cnn_forward.2} parent=0 // loop_pre_header
    _
  $region3: #{encoder_cnn_forward.2} parent=0 // loop_header
    %s14 = sphi 0, %s18
    %p15 = scmp.ge.s32.totalorder %s14, 4
    %s21 = sphi 0, %s33
    %s22 = sphi 0, %s29
    %s23 = sphi 0, %s21
    %s24 = sphi 0, %s22
    %s25 = sphi 0, %s23
    %s26 = sphi 0, %s24
    %s38 = sphi 0, %s40
    %s41 = sphi 0, %s38
    %s42 = sphi 0, %s41
    %s58 = sphi 0, %s42
    %s74 = sphi 0, %s76
    %s77 = sphi 0, %s74
    %s78 = sphi 0, %s77
    %s94 = sphi 0, %s78
    %s98 = sphi 0, %s98
    %s100 = sphi 0, %s98
    %s101 = sphi 0, %s100
    %s115 = sphi 0, %s101
    %s119 = sphi 0, %s119
    %s121 = sphi 0, %s119
    %s122 = sphi 0, %s121
    %s136 = sphi 0, %s122
    %s140 = sphi 0, %s140
    %s142 = sphi 0, %s140
    %s143 = sphi 0, %s142
    %s157 = sphi 0, %s143
    %s161 = sphi 0, %s161
    %s163 = sphi 0, %s161
    %s164 = sphi 0, %s163
    %s178 = sphi 0, %s164
    %s186 = sphi 0, %s188
    %s189 = sphi 0, %s186
    %s190 = sphi 0, %s189
    %s206 = sphi 0, %s190
    %s214 = sphi 0, %s216
    %s217 = sphi 0, %s214
    %s218 = sphi 0, %s217
    %s234 = sphi 0, %s218
  $region4: #{encoder_cnn_forward.2} parent=0 // loop_header_branch
    %17 = sbr.rel (%p15) target = $region8
  $region5: #{encoder_cnn_forward.2} parent=0 // loop_body
    %s19 = ssub.s32 %s14, 1
    %s20 = ssub.s32 %s14, 2
    %s27 = sadd.s32 1, %s22
    %p28 = scmp.ge.s32.totalorder %s27, 1
    %s29 = scalar_select %p28, 0, %s27
    %s30 = sadd.s32 1, %s21
    %s31 = scalar_select %p28, %s30, %s21
    %p32 = scmp.ge.s32.totalorder %s31, 2
    %s33 = scalar_select %p32, 0, %s31
    %s34 = ssub.s32 %s21, %s33
    %s35 = ssub.s32 %s22, %s29
    %s36 = sor.u32 %s34, %s35
    %p37 = scmp.eq.s32.totalorder %s36, 0
    %s39 = sadd.s32 %s38, 1
    %s40 = scalar_select %p37, %s38, %s39
    %p43 = pneg %p37
    %p44 = scmp.eq.s32.totalorder %s14, 1
    %p45 = por %p43, %p44
    %p46 = scmp.ne.s32.totalorder %s38, %s41
    %p47 = scmp.eq.s32.totalorder %s14, 0
    %p48 = por %p46, %p47
    %p49 = scmp.ne.s32.totalorder %s38, %s41
    %p50 = scmp.eq.s32.totalorder %s19, 1
    %p51 = por %p49, %p50
    %p52 = scmp.ne.s32.totalorder %s41, %s42
    %p53 = scmp.eq.s32.totalorder %s19, 0
    %p54 = por %p52, %p53
    %p55 = scmp.ne.s32.totalorder %s41, %s42
    %p56 = scmp.eq.s32.totalorder %s20, 1
    %p57 = por %p55, %p56
    %p59 = scmp.ne.s32.totalorder %s42, %s58
    %p60 = scmp.eq.s32.totalorder %s20, 0
    %p61 = por %p59, %p60
    %s62 = smul.u32 %s22, 8
    %s63 = ssub.s32 %s62, 1
    %p64 = scmp.gt.s32.totalorder %s63, 0
    %s65 = scalar_select %p64, %s63, 0
    %s66 = smul.u32 %s29, 8
    %s67 = ssub.s32 %s66, 1
    %p68 = scmp.gt.s32.totalorder %s67, 0
    %s69 = scalar_select %p68, %s67, 0
    %s70 = ssub.s32 %s21, %s33
    %s71 = ssub.s32 %s65, %s69
    %s72 = sor.u32 %s70, %s71
    %p73 = scmp.eq.s32.totalorder %s72, 0
    %s75 = sadd.s32 %s74, 1
    %s76 = scalar_select %p73, %s74, %s75
    %p79 = pneg %p73
    %p80 = scmp.eq.s32.totalorder %s14, 1
    %p81 = por %p79, %p80
    %p82 = scmp.ne.s32.totalorder %s74, %s77
    %p83 = scmp.eq.s32.totalorder %s14, 0
    %p84 = por %p82, %p83
    %p85 = scmp.ne.s32.totalorder %s74, %s77
    %p86 = scmp.eq.s32.totalorder %s19, 1
    %p87 = por %p85, %p86
    %p88 = scmp.ne.s32.totalorder %s77, %s78
    %p89 = scmp.eq.s32.totalorder %s19, 0
    %p90 = por %p88, %p89
    %p91 = scmp.ne.s32.totalorder %s77, %s78
    %p92 = scmp.eq.s32.totalorder %s20, 1
    %p93 = por %p91, %p92
    %p95 = scmp.ne.s32.totalorder %s78, %s94
    %p96 = scmp.eq.s32.totalorder %s20, 0
    %p97 = por %p95, %p96
    %s99 = sadd.s32 %s98, 1
    %p102 = scmp.eq.s32.totalorder %s14, 1
    %p103 = scmp.ne.s32.totalorder %s98, %s100
    %p104 = scmp.eq.s32.totalorder %s14, 0
    %p105 = por %p103, %p104
    %p106 = scmp.ne.s32.totalorder %s98, %s100
    %p107 = scmp.eq.s32.totalorder %s19, 1
    %p108 = por %p106, %p107
    %p109 = scmp.ne.s32.totalorder %s100, %s101
    %p110 = scmp.eq.s32.totalorder %s19, 0
    %p111 = por %p109, %p110
    %p112 = scmp.ne.s32.totalorder %s100, %s101
    %p113 = scmp.eq.s32.totalorder %s20, 1
    %p114 = por %p112, %p113
    %p116 = scmp.ne.s32.totalorder %s101, %s115
    %p117 = scmp.eq.s32.totalorder %s20, 0
    %p118 = por %p116, %p117
    %s120 = sadd.s32 %s119, 1
    %p123 = scmp.eq.s32.totalorder %s14, 1
    %p124 = scmp.ne.s32.totalorder %s119, %s121
    %p125 = scmp.eq.s32.totalorder %s14, 0
    %p126 = por %p124, %p125
    %p127 = scmp.ne.s32.totalorder %s119, %s121
    %p128 = scmp.eq.s32.totalorder %s19, 1
    %p129 = por %p127, %p128
    %p130 = scmp.ne.s32.totalorder %s121, %s122
    %p131 = scmp.eq.s32.totalorder %s19, 0
    %p132 = por %p130, %p131
    %p133 = scmp.ne.s32.totalorder %s121, %s122
    %p134 = scmp.eq.s32.totalorder %s20, 1
    %p135 = por %p133, %p134
    %p137 = scmp.ne.s32.totalorder %s122, %s136
    %p138 = scmp.eq.s32.totalorder %s20, 0
    %p139 = por %p137, %p138
    %s141 = sadd.s32 %s140, 1
    %p144 = scmp.eq.s32.totalorder %s14, 1
    %p145 = scmp.ne.s32.totalorder %s140, %s142
    %p146 = scmp.eq.s32.totalorder %s14, 0
    %p147 = por %p145, %p146
    %p148 = scmp.ne.s32.totalorder %s140, %s142
    %p149 = scmp.eq.s32.totalorder %s19, 1
    %p150 = por %p148, %p149
    %p151 = scmp.ne.s32.totalorder %s142, %s143
    %p152 = scmp.eq.s32.totalorder %s19, 0
    %p153 = por %p151, %p152
    %p154 = scmp.ne.s32.totalorder %s142, %s143
    %p155 = scmp.eq.s32.totalorder %s20, 1
    %p156 = por %p154, %p155
    %p158 = scmp.ne.s32.totalorder %s143, %s157
    %p159 = scmp.eq.s32.totalorder %s20, 0
    %p160 = por %p158, %p159
    %s162 = sadd.s32 %s161, 1
    %p165 = scmp.eq.s32.totalorder %s14, 1
    %p166 = scmp.ne.s32.totalorder %s161, %s163
    %p167 = scmp.eq.s32.totalorder %s14, 0
    %p168 = por %p166, %p167
    %p169 = scmp.ne.s32.totalorder %s161, %s163
    %p170 = scmp.eq.s32.totalorder %s19, 1
    %p171 = por %p169, %p170
    %p172 = scmp.ne.s32.totalorder %s163, %s164
    %p173 = scmp.eq.s32.totalorder %s19, 0
    %p174 = por %p172, %p173
    %p175 = scmp.ne.s32.totalorder %s163, %s164
    %p176 = scmp.eq.s32.totalorder %s20, 1
    %p177 = por %p175, %p176
    %p179 = scmp.ne.s32.totalorder %s164, %s178
    %p180 = scmp.eq.s32.totalorder %s20, 0
    %p181 = por %p179, %p180
    %s182 = ssub.s32 %s21, %s33
    %s183 = ssub.s32 %s22, %s29
    %s184 = sor.u32 %s182, %s183
    %p185 = scmp.eq.s32.totalorder %s184, 0
    %s187 = sadd.s32 %s186, 1
    %s188 = scalar_select %p185, %s186, %s187
    %p191 = pneg %p185
    %p192 = scmp.eq.s32.totalorder %s14, 1
    %p193 = por %p191, %p192
    %p194 = scmp.ne.s32.totalorder %s186, %s189
    %p195 = scmp.eq.s32.totalorder %s14, 0
    %p196 = por %p194, %p195
    %p197 = scmp.ne.s32.totalorder %s186, %s189
    %p198 = scmp.eq.s32.totalorder %s19, 1
    %p199 = por %p197, %p198
    %p200 = scmp.ne.s32.totalorder %s189, %s190
    %p201 = scmp.eq.s32.totalorder %s19, 0
    %p202 = por %p200, %p201
    %p203 = scmp.ne.s32.totalorder %s189, %s190
    %p204 = scmp.eq.s32.totalorder %s20, 1
    %p205 = por %p203, %p204
    %p207 = scmp.ne.s32.totalorder %s190, %s206
    %p208 = scmp.eq.s32.totalorder %s20, 0
    %p209 = por %p207, %p208
    %s210 = ssub.s32 %s21, %s33
    %s211 = ssub.s32 %s22, %s29
    %s212 = sor.u32 %s210, %s211
    %p213 = scmp.eq.s32.totalorder %s212, 0
    %s215 = sadd.s32 %s214, 1
    %s216 = scalar_select %p213, %s214, %s215
    %p219 = pneg %p213
    %p220 = scmp.eq.s32.totalorder %s14, 1
    %p221 = por %p219, %p220
    %p222 = scmp.ne.s32.totalorder %s214, %s217
    %p223 = scmp.eq.s32.totalorder %s14, 0
    %p224 = por %p222, %p223
    %p225 = scmp.ne.s32.totalorder %s214, %s217
    %p226 = scmp.eq.s32.totalorder %s19, 1
    %p227 = por %p225, %p226
    %p228 = scmp.ne.s32.totalorder %s217, %s218
    %p229 = scmp.eq.s32.totalorder %s19, 0
    %p230 = por %p228, %p229
    %p231 = scmp.ne.s32.totalorder %s217, %s218
    %p232 = scmp.eq.s32.totalorder %s20, 1
    %p233 = por %p231, %p232
    %p235 = scmp.ne.s32.totalorder %s218, %s234
    %p236 = scmp.eq.s32.totalorder %s20, 0
    %p237 = por %p235, %p236
    %p238 = scmp.le.s32.totalorder 1, %s14
    %p239 = scmp.lt.s32.totalorder %s14, 3
    %p240 = pnand %p238, %p239
    %p241 = pneg %p240
    // Predicated region
    $region9: #{encoder_cnn_forward.2} parent=5 // pred_check
      _
    $region10: #{encoder_cnn_forward.2} parent=5 // pred_check_branch
      %243 = sbr.rel (%p240) target = $region12
    $region11: #{encoder_cnn_forward.2} parent=5 // pred_region
      %s244 = ssub.s32 %s14, 1
      // Predicated region
      $region13: #{encoder_cnn_forward.2} parent=11 // pred_check
        %p245 = pneg %p111
      $region14: #{encoder_cnn_forward.2} parent=11 // pred_check_branch
        %247 = sbr.rel (%p245) target = $region16
      $region15: #{encoder_cnn_forward.2} parent=11 // pred_region
        _
      $region16: #{encoder_cnn_forward.2} parent=11 // pred_fallthru
        _
      // Predicated region
      $region17: #{encoder_cnn_forward.2} parent=11 // pred_check
        %p248 = pneg %p132
      $region18: #{encoder_cnn_forward.2} parent=11 // pred_check_branch
        %250 = sbr.rel (%p248) target = $region20
      $region19: #{encoder_cnn_forward.2} parent=11 // pred_region
        _
      $region20: #{encoder_cnn_forward.2} parent=11 // pred_fallthru
        _
      // Predicated region
      $region21: #{encoder_cnn_forward.2} parent=11 // pred_check
        %p251 = pneg %p153
      $region22: #{encoder_cnn_forward.2} parent=11 // pred_check_branch
        %253 = sbr.rel (%p251) target = $region24
      $region23: #{encoder_cnn_forward.2} parent=11 // pred_region
        _
      $region24: #{encoder_cnn_forward.2} parent=11 // pred_fallthru
        _
      // Predicated region
      $region25: #{encoder_cnn_forward.2} parent=11 // pred_check
        %p254 = pneg %p174
      $region26: #{encoder_cnn_forward.2} parent=11 // pred_check_branch
        %256 = sbr.rel (%p254) target = $region28
      $region27: #{encoder_cnn_forward.2} parent=11 // pred_region
        _
      $region28: #{encoder_cnn_forward.2} parent=11 // pred_fallthru
        _
    $region12: #{encoder_cnn_forward.2} parent=5 // pred_fallthru
      _
    %p257 = scmp.lt.s32.totalorder %s14, 2
    // Predicated region
    $region29: #{encoder_cnn_forward.2} parent=5 // pred_check
      %p258 = pneg %p257
    $region30: #{encoder_cnn_forward.2} parent=5 // pred_check_branch
      %260 = sbr.rel (%p258) target = $region32
    $region31: #{encoder_cnn_forward.2} parent=5 // pred_region
      // Predicated region
      $region33: #{encoder_cnn_forward.2} parent=31 // pred_check
        %p261 = pneg %p48
      $region34: #{encoder_cnn_forward.2} parent=31 // pred_check_branch
        %263 = sbr.rel (%p261) target = $region36
      $region35: #{encoder_cnn_forward.2} parent=31 // pred_region
        %s264 = smul.u32 8, %s22
        %p265 = scmp.lt.s32.totalorder %s21, 1
        %s266 = scalar_select %p265, %s21, 1
        %p267 = scmp.lt.s32.totalorder %s264, 7
        %s268 = scalar_select %p267, %s264, 7
        %s269 = smul.addr %s268, 2
        %s270 = smul.addr %s266, 16
        %s271 = sadd.s32 %s269, %s270
        %s272 = smul.addr %s271, 4
        %s273 = scalar_lea.vmem %s0, %s272
        %s274 = smul.u32 8, %s22
      $region36: #{encoder_cnn_forward.2} parent=31 // pred_fallthru
        _
      // Predicated region
      $region37: #{encoder_cnn_forward.2} parent=31 // pred_check
        %p275 = pneg %p84
      $region38: #{encoder_cnn_forward.2} parent=31 // pred_check_branch
        %277 = sbr.rel (%p275) target = $region40
      $region39: #{encoder_cnn_forward.2} parent=31 // pred_region
        %s278 = smul.u32 %s22, 8
        %s279 = ssub.s32 %s278, 1
        %p280 = scmp.gt.s32.totalorder %s279, 0
        %s281 = scalar_select %p280, %s279, 0
        %p282 = scmp.lt.s32.totalorder %s21, 1
        %s283 = scalar_select %p282, %s21, 1
        %p284 = scmp.lt.s32.totalorder %s281, 7
        %s285 = scalar_select %p284, %s281, 7
        %s286 = smul.addr %s285, 2
        %s287 = smul.addr %s283, 16
        %s288 = sadd.s32 %s286, %s287
        %s289 = smul.addr %s288, 4
        %s290 = scalar_lea.vmem %s1, %s289
        %s291 = smul.u32 %s22, 8
        %s292 = ssub.s32 %s291, 1
        %p293 = scmp.gt.s32.totalorder %s292, 0
        %s294 = scalar_select %p293, %s292, 0
      $region40: #{encoder_cnn_forward.2} parent=31 // pred_fallthru
        _
    $region32: #{encoder_cnn_forward.2} parent=5 // pred_fallthru
      _
    %p295 = scmp.le.s32.totalorder 1, %s14
    %p296 = scmp.lt.s32.totalorder %s14, 3
    %p297 = pnand %p295, %p296
    %p298 = pneg %p297
    // Predicated region
    $region41: #{encoder_cnn_forward.2} parent=5 // pred_check
      _
    $region42: #{encoder_cnn_forward.2} parent=5 // pred_check_branch
      %300 = sbr.rel (%p297) target = $region44
    $region43: #{encoder_cnn_forward.2} parent=5 // pred_region
      %s301 = ssub.s32 %s14, 1
      %s302 = smul.u32 8, %s24
      %p303 = scmp.lt.s32.totalorder %s23, 1
      %s304 = scalar_select %p303, %s23, 1
      %p305 = scmp.lt.s32.totalorder %s302, 7
      %s306 = scalar_select %p305, %s302, 7
      %s307 = smul.addr %s306, 2
      %s308 = smul.addr %s304, 16
      %s309 = sadd.s32 %s307, %s308
      %s310 = smul.addr %s309, 4
      %s311 = scalar_lea.vmem %s0, %s310
      %p312 = pneg %p54
      %p313 = pneg %p51
      %s314 = smul.u32 %s24, 8
      %s315 = ssub.s32 %s314, 1
      %p316 = scmp.gt.s32.totalorder %s315, 0
      %s317 = scalar_select %p316, %s315, 0
      %p318 = scmp.lt.s32.totalorder %s23, 1
      %s319 = scalar_select %p318, %s23, 1
      %p320 = scmp.lt.s32.totalorder %s317, 7
      %s321 = scalar_select %p320, %s317, 7
      %s322 = smul.addr %s321, 2
      %s323 = smul.addr %s319, 16
      %s324 = sadd.s32 %s322, %s323
      %s325 = smul.addr %s324, 4
      %s326 = scalar_lea.vmem %s1, %s325
      %p327 = pneg %p90
      %p328 = pneg %p87
      %p329 = pneg %p111
      %p330 = pneg %p108
      %p331 = pneg %p132
      %p332 = pneg %p129
      %p333 = pneg %p153
      %p334 = pneg %p150
      %p335 = pneg %p174
      %p336 = pneg %p171
      %p337 = pneg %p202
      %p338 = pneg %p199
      %s339 = smul.u32 4, %s24
      %p340 = scmp.lt.s32.totalorder %s23, 1
      %s341 = scalar_select %p340, %s23, 1
      %p342 = scmp.lt.s32.totalorder %s339, 3
      %s343 = scalar_select %p342, %s339, 3
      %s344 = smul.addr %s341, 4
      %s345 = sadd.s32 %s343, %s344
      %s346 = smul.addr %s345, 4
      %s347 = scalar_lea.vmem %s6, %s346
      %p348 = pneg %p230
      %p349 = pneg %p227
      %s350 = smul.u32 4, %s24
      %p351 = scmp.lt.s32.totalorder %s23, 1
      %s352 = scalar_select %p351, %s23, 1
      %p353 = scmp.lt.s32.totalorder %s350, 3
      %s354 = scalar_select %p353, %s350, 3
      %s355 = smul.addr %s352, 4
      %s356 = sadd.s32 %s354, %s355
      %s357 = smul.addr %s356, 4
      %s358 = scalar_lea.vmem %s7, %s357
      %s359 = smul.u32 8, %s24
      %p360 = scmp.lt.s32.totalorder %s23, 1
      %s361 = scalar_select %p360, %s23, 1
      %p362 = scmp.lt.s32.totalorder %s359, 7
      %s363 = scalar_select %p362, %s359, 7
      %s364 = smul.addr %s363, 2
      %s365 = smul.addr %s361, 16
      %s366 = sadd.s32 %s364, %s365
      %s367 = smul.addr %s366, 4
      %s368 = scalar_lea.vmem %s0, %s367
      %s369 = smul.u32 8, %s24
      %s370 = smul.u32 %s24, 8
      %s371 = ssub.s32 %s370, 1
      %p372 = scmp.gt.s32.totalorder %s371, 0
      %s373 = scalar_select %p372, %s371, 0
      %p374 = scmp.lt.s32.totalorder %s23, 1
      %s375 = scalar_select %p374, %s23, 1
      %p376 = scmp.lt.s32.totalorder %s373, 7
      %s377 = scalar_select %p376, %s373, 7
      %s378 = smul.addr %s377, 2
      %s379 = smul.addr %s375, 16
      %s380 = sadd.s32 %s378, %s379
      %s381 = smul.addr %s380, 4
      %s382 = scalar_lea.vmem %s1, %s381
      %s383 = smul.u32 %s24, 8
      %s384 = ssub.s32 %s383, 1
      %p385 = scmp.gt.s32.totalorder %s384, 0
      %s386 = scalar_select %p385, %s384, 0
      %s387 = smul.u32 4, %s24
      %p388 = scmp.lt.s32.totalorder %s23, 1
      %s389 = scalar_select %p388, %s23, 1
      %p390 = scmp.lt.s32.totalorder %s387, 3
      %s391 = scalar_select %p390, %s387, 3
      %s392 = smul.addr %s389, 4
      %s393 = sadd.s32 %s391, %s392
      %s394 = smul.addr %s393, 4
      %s395 = scalar_lea.vmem %s6, %s394
      %s396 = smul.u32 4, %s24
      %s397 = smul.u32 4, %s24
      %p398 = scmp.lt.s32.totalorder %s23, 1
      %s399 = scalar_select %p398, %s23, 1
      %p400 = scmp.lt.s32.totalorder %s397, 3
      %s401 = scalar_select %p400, %s397, 3
      %s402 = smul.addr %s399, 4
      %s403 = sadd.s32 %s401, %s402
      %s404 = smul.addr %s403, 4
      %s405 = scalar_lea.vmem %s7, %s404
      %s406 = smul.u32 4, %s24
      %v408 = vld [vmem:[%s368] sm:$0xff]
      %v409 = vld [vmem:[%s368 + $0x8] sm:$0xff]
      %v410 = vld [vmem:[%s368 + $0x10] sm:$0xff]
      %v411 = vld [vmem:[%s368 + $0x18] sm:$0xff]
      %v412 = vld [vmem:[%s368 + $0x20] sm:$0xff]
      %v413 = vld [vmem:[%s368 + $0x28] sm:$0xff]
      %v414 = vld [vmem:[%s368 + $0x30] sm:$0xff]
      %v415 = vld [vmem:[%s368 + $0x38] sm:$0xff]
      %v416 = vld [vmem:[%s2] sm:$0xf]
      %v417 = vld [vmem:[%s2 + $0x4] sm:$0xf]
      %v418 = vld [vmem:[%s2 + $0x8] sm:$0xf]
      %v419 = vld [vmem:[%s2 + $0xc] sm:$0xf]
      %v420 = vld [vmem:[%s2 + $0x10] sm:$0xf]
      %v421 = vld [vmem:[%s2 + $0x14] sm:$0xf]
      %v422 = vld [vmem:[%s2 + $0x18] sm:$0xf]
      %v423 = vld [vmem:[%s2 + $0x1c] sm:$0xf]
      %v424 = vld [vmem:[%s2 + $0x20] sm:$0xf]
      %v425 = vld [vmem:[%s2 + $0x24] sm:$0xf]
      %v426 = vld [vmem:[%s2 + $0x28] sm:$0xf]
      %v427 = vld [vmem:[%s2 + $0x2c] sm:$0xf]
      %v428 = vld [vmem:[%s2 + $0x30] sm:$0xf]
      %v429 = vld [vmem:[%s2 + $0x34] sm:$0xf]
      %v430 = vld [vmem:[%s2 + $0x38] sm:$0xf]
      %v431 = vld [vmem:[%s2 + $0x3c] sm:$0xf]
      %v432 = vld [vmem:[%s2 + $0x40] sm:$0xf]
      %v433 = vld [vmem:[%s2 + $0x44] sm:$0xf]
      %v434 = vld [vmem:[%s2 + $0x48] sm:$0x3]
      %v435 = vld [vmem:[%s3] sm:$0x1]
      %v437 = vlaneseq
      %v438 = vshrl.u32 %v437, 7
      %v439 = vsub.s32 0, %v438
      %v440 = vrot.slane %v435, %v439
      %v450 = vunpack.c.l.b16 %v408
      %v451 = vunpack.c.h.b16 %v408
      %v452 = vunpack.c.l.b16 %v409
      %v453 = vunpack.c.h.b16 %v409
      %v454 = vunpack.c.l.b16 %v410
      %v455 = vunpack.c.h.b16 %v410
      %v456 = vunpack.c.l.b16 %v411
      %v457 = vunpack.c.h.b16 %v411
      %v458 = vunpack.c.l.b16 %v412
      %v459 = vunpack.c.h.b16 %v412
      %v460 = vunpack.c.l.b16 %v413
      %v461 = vunpack.c.h.b16 %v413
      %v462 = vunpack.c.l.b16 %v414
      %v463 = vunpack.c.h.b16 %v414
      %v464 = vunpack.c.l.b16 %v415
      %v465 = vunpack.c.h.b16 %v415
      %v466 = vpack.c.b16 %v452, %v450
      %v467 = vpack.c.b16 %v453, %v451
      %v468 = vpack.c.b16 %v456, %v454
      %v469 = vpack.c.b16 %v457, %v455
      %v470 = vpack.c.b16 %v460, %v458
      %v471 = vpack.c.b16 %v461, %v459
      %v472 = vpack.c.b16 %v464, %v462
      %v473 = vpack.c.b16 %v465, %v463
      %v497 = vunpack.c.l.b16 %v416
      %v498 = vunpack.c.l.b16 %v417
      %v499 = vunpack.c.l.b16 %v418
      %v500 = vunpack.c.l.b16 %v419
      %v501 = vunpack.c.l.b16 %v420
      %v502 = vunpack.c.l.b16 %v421
      %v503 = vunpack.c.l.b16 %v422
      %v504 = vunpack.c.l.b16 %v423
      %v505 = vunpack.c.l.b16 %v424
      %v506 = vunpack.c.l.b16 %v425
      %v507 = vunpack.c.l.b16 %v426
      %v508 = vunpack.c.l.b16 %v427
      %v509 = vunpack.c.l.b16 %v428
      %v510 = vunpack.c.l.b16 %v429
      %v511 = vunpack.c.l.b16 %v430
      %v512 = vunpack.c.l.b16 %v431
      %v513 = vunpack.c.l.b16 %v432
      %v514 = vunpack.c.l.b16 %v433
      %v515 = vunpack.c.l.b16 %v434
      %v516 = vpack.c.b16 %v498, %v497
      %v517 = vpack.c.b16 %v500, %v499
      %v518 = vpack.c.b16 %v502, %v501
      %v519 = vpack.c.b16 %v504, %v503
      %v520 = vpack.c.b16 %v506, %v505
      %v521 = vpack.c.b16 %v508, %v507
      %v522 = vpack.c.b16 %v510, %v509
      %v523 = vpack.c.b16 %v512, %v511
      %v524 = vpack.c.b16 %v514, %v513
      %v525 = vpack.c.b16 %v515, %v515
      %vm535 = vcmask 154624
      %v537 = vsel %vm535, %v467, 0
      %v540 = vsel %vm535, %v469, 0
      %v543 = vsel %vm535, %v471, 0
      %v546 = vsel %vm535, %v473, 0
      %vm548 = vcmask 1040384
      %vm549 = vcmask 1041408
      %v550 = vsel %vm548, 4294967295, 65535
      %v551 = vsel %vm549, %v550, 0
      %v553 = vand.u32 %v525, %v551
      %555 = vmatprep.subr.bf16.mxu0 0
      %556 = vmatpush1.bf16.msra.mxu0 %v523
      %557 = vmatprep.subr.bf16.mxu0 0
      %558 = vmatpush1.bf16.msra.mxu0 %v522
      %559 = vmatprep.subr.bf16.mxu0 0
      %560 = vmatpush1.bf16.msra.mxu0 %v521
      %561 = vmatprep.subr.bf16.mxu0 0
      %562 = vmatpush1.bf16.msra.mxu0 %v520
      %563 = vmatprep.subr.bf16.mxu0 0
      %564 = vmatpush1.bf16.msra.mxu0 %v519
      %565 = vmatprep.subr.bf16.mxu0 0
      %566 = vmatpush1.bf16.msra.mxu0 %v518
      %567 = vmatprep.subr.bf16.mxu0 0
      %568 = vmatpush1.bf16.msra.mxu0 %v517
      %569 = vmatprep.subr.bf16.mxu0 0
      %570 = vmatpush1.bf16.msra.mxu0 %v516
      %571 = vmatprep.subr.bf16.mxu0 0
      %572 = vmatpush2.bf16.msra.mxu0 0
      %573 = vmatprep.subr.bf16.mxu0 0
      %574 = vmatpush2.bf16.msra.mxu0 0
      %575 = vmatprep.subr.bf16.mxu0 0
      %576 = vmatpush2.bf16.msra.mxu0 0
      %577 = vmatprep.subr.bf16.mxu0 0
      %578 = vmatpush2.bf16.msra.mxu0 0
      %579 = vmatprep.subr.bf16.mxu0 0
      %580 = vmatpush2.bf16.msra.mxu0 0
      %581 = vmatprep.subr.bf16.mxu0 0
      %582 = vmatpush2.bf16.msra.mxu0 0
      %583 = vmatprep.subr.bf16.mxu0 0
      %584 = vmatpush2.bf16.msra.mxu0 %v553
      %585 = vmatprep.subr.bf16.mxu0 0
      %586 = vmatpush2.bf16.msra.mxu0 %v524
      %587 = vmatprep.mubr.bf16.mxu0 %v537
      %588 = vmatmul.mubr.bf16.gmra.mxu0 %v466
      %v589 = vpop.f32.mrf.mxu0
      %v590 = vadd.f32 %v440, %v589
      %v591 = vpop.f32.mrf.mxu0
      %v592 = vpop.f32.mrf.mxu0
      %v593 = vadd.f32 %v440, %v592
      %v594 = vpop.f32.mrf.mxu0
      %595 = vmatprep.mubr.bf16.mxu0 %v540
      %596 = vmatmul.mubr.bf16.gmra.mxu0 %v468
      %v597 = vpop.f32.mrf.mxu0
      %v598 = vadd.f32 %v440, %v597
      %v599 = vpop.f32.mrf.mxu0
      %v600 = vpop.f32.mrf.mxu0
      %v601 = vadd.f32 %v440, %v600
      %v602 = vpop.f32.mrf.mxu0
      %603 = vmatprep.mubr.bf16.mxu0 %v543
      %604 = vmatmul.mubr.bf16.gmra.mxu0 %v470
      %v605 = vpop.f32.mrf.mxu0
      %v606 = vadd.f32 %v440, %v605
      %v607 = vpop.f32.mrf.mxu0
      %v608 = vpop.f32.mrf.mxu0
      %v609 = vadd.f32 %v440, %v608
      %v610 = vpop.f32.mrf.mxu0
      %611 = vmatprep.mubr.bf16.mxu0 %v546
      %612 = vmatmul.mubr.bf16.gmra.mxu0 %v472
      %v613 = vpop.f32.mrf.mxu0
      %v614 = vadd.f32 %v440, %v613
      %v615 = vpop.f32.mrf.mxu0
      %v616 = vpop.f32.mrf.mxu0
      %v617 = vadd.f32 %v440, %v616
      %v618 = vpop.f32.mrf.mxu0
      %619 = vdwg.mxu0
      %v620 = vmax.f32 %v590, 0.0
      %v621 = vmax.f32 %v593, 0.0
      %v622 = vmax.f32 %v598, 0.0
      %v623 = vmax.f32 %v601, 0.0
      %v624 = vmax.f32 %v606, 0.0
      %v625 = vmax.f32 %v609, 0.0
      %v626 = vmax.f32 %v614, 0.0
      %v627 = vmax.f32 %v617, 0.0
      %v628 = vpack.c.bf16 %v621, %v620
      %v629 = vpack.c.bf16 %v623, %v622
      %v630 = vpack.c.bf16 %v625, %v624
      %v631 = vpack.c.bf16 %v627, %v626
      %v632 = vld [vmem:[%s382] sm:$0xff]
      %v634 = vunpack.c.l.b16 %v632
      %v635 = vunpack.c.h.b16 %v632
      %v636 = vpack.c.b16 %v634, %v634
      %v637 = vpack.c.b16 %v635, %v635
      %v640 = vsel %vm535, %v637, 0
      %642 = vmatprep.subr.bf16.mxu0 0
      %643 = vmatpush1.bf16.msra.mxu0 %v523
      %644 = vmatprep.subr.bf16.mxu0 0
      %645 = vmatpush1.bf16.msra.mxu0 %v522
      %646 = vmatprep.subr.bf16.mxu0 0
      %647 = vmatpush1.bf16.msra.mxu0 %v521
      %648 = vmatprep.subr.bf16.mxu0 0
      %649 = vmatpush1.bf16.msra.mxu0 %v520
      %650 = vmatprep.subr.bf16.mxu0 0
      %651 = vmatpush1.bf16.msra.mxu0 %v519
      %652 = vmatprep.subr.bf16.mxu0 0
      %653 = vmatpush1.bf16.msra.mxu0 %v518
      %654 = vmatprep.subr.bf16.mxu0 0
      %655 = vmatpush1.bf16.msra.mxu0 %v517
      %656 = vmatprep.subr.bf16.mxu0 0
      %657 = vmatpush1.bf16.msra.mxu0 %v516
      %658 = vmatprep.subr.bf16.mxu0 0
      %659 = vmatpush2.bf16.msra.mxu0 0
      %660 = vmatprep.subr.bf16.mxu0 0
      %661 = vmatpush2.bf16.msra.mxu0 0
      %662 = vmatprep.subr.bf16.mxu0 0
      %663 = vmatpush2.bf16.msra.mxu0 0
      %664 = vmatprep.subr.bf16.mxu0 0
      %665 = vmatpush2.bf16.msra.mxu0 0
      %666 = vmatprep.subr.bf16.mxu0 0
      %667 = vmatpush2.bf16.msra.mxu0 0
      %668 = vmatprep.subr.bf16.mxu0 0
      %669 = vmatpush2.bf16.msra.mxu0 0
      %670 = vmatprep.subr.bf16.mxu0 0
      %671 = vmatpush2.bf16.msra.mxu0 %v553
      %672 = vmatprep.subr.bf16.mxu0 0
      %673 = vmatpush2.bf16.msra.mxu0 %v524
      %674 = vmatprep.mubr.bf16.mxu0 %v640
      %675 = vmatmul.mubr.bf16.gmra.mxu0 %v636
      %v676 = vpop.f32.mrf.mxu0
      %v677 = vadd.f32 %v440, %v676
      %v678 = vpop.f32.mrf.mxu0
      %v679 = vpop.f32.mrf.mxu0
      %v680 = vpop.f32.mrf.mxu0
      %681 = vdwg.mxu0
      %v682 = vmax.f32 %v677, 0.0
      %v683 = vpack.c.bf16 %v682, %v682
      %vm688 = vcmask 1043456
      %v689 = vrot.slane %v628, 4
      %v690 = vrot.slane %v629, 4
      %v691 = vsel %vm688, %v689, %v690
      %v692 = vrot.slane %v630, 4
      %v693 = vsel %vm688, %v690, %v692
      %v694 = vrot.slane %v631, 4
      %v695 = vsel %vm688, %v692, %v694
      %vm700 = vcmask 1043456
      %v703 = vsel %vm700, %v683, %v689
      %v705 = vshrl.u32 %v703, 16
      %v707 = vrot.slane %v705, 1
      %v708 = vshll.u32 %v703, 16
      %v710 = vrot.slane %v708, 2
      %v711 = vor.u32 %v707, %v710
      %vm713 = vcmask 1040384
      %vm714 = vsmask.f32 256
      %vm715 = vmand %vm713, %vm714
      %v716 = vsel %vm715, 0, %v711
      %v718 = vrot.slane %v703, 2
      %v720 = vmax.bf16 %v703, %v718
      %v721 = vmax.bf16 %v720, %v716
      %v722 = vrot.slane %v705, 5
      %v723 = vrot.slane %v708, 6
      %v724 = vor.u32 %v722, %v723
      %v726 = vsel %vm715, 0, %v724
      %v728 = vrot.slane %v726, 4
      %v730 = vmax.bf16 %v720, %v728
      %v732 = vrot.slane %v730, 4
      %v734 = vmax.bf16 %v721, %v732
      %v736 = vshrl.u32 %v691, 16
      %v738 = vrot.slane %v736, 1
      %v739 = vshll.u32 %v691, 16
      %v741 = vrot.slane %v739, 2
      %v742 = vor.u32 %v738, %v741
      %v744 = vsel %vm715, 0, %v742
      %v745 = vrot.slane %v691, 2
      %v747 = vmax.bf16 %v691, %v745
      %v748 = vmax.bf16 %v747, %v744
      %v749 = vmax.bf16 %v734, %v748
      %v752 = vsel %vm549, %v749, 0
      %v753 = vrot.slane %v736, 5
      %v754 = vrot.slane %v739, 6
      %v755 = vor.u32 %v753, %v754
      %v757 = vsel %vm715, 0, %v755
      %v759 = vrot.slane %v757, 4
      %v761 = vmax.bf16 %v747, %v759
      %v763 = vrot.slane %v761, 4
      %v765 = vmax.bf16 %v748, %v763
      %v767 = vshrl.u32 %v693, 16
      %v769 = vrot.slane %v767, 1
      %v770 = vshll.u32 %v693, 16
      %v772 = vrot.slane %v770, 2
      %v773 = vor.u32 %v769, %v772
      %v775 = vsel %vm715, 0, %v773
      %v776 = vrot.slane %v693, 2
      %v778 = vmax.bf16 %v693, %v776
      %v779 = vmax.bf16 %v778, %v775
      %v780 = vmax.bf16 %v765, %v779
      %v782 = vsel %vm549, %v780, 0
      %v783 = vrot.slane %v767, 5
      %v784 = vrot.slane %v770, 6
      %v785 = vor.u32 %v783, %v784
      %v787 = vsel %vm715, 0, %v785
      %v789 = vrot.slane %v787, 4
      %v791 = vmax.bf16 %v778, %v789
      %v793 = vrot.slane %v791, 4
      %v795 = vmax.bf16 %v779, %v793
      %v797 = vshrl.u32 %v695, 16
      %v799 = vrot.slane %v797, 1
      %v800 = vshll.u32 %v695, 16
      %v802 = vrot.slane %v800, 2
      %v803 = vor.u32 %v799, %v802
      %v805 = vsel %vm715, 0, %v803
      %v806 = vrot.slane %v695, 2
      %v808 = vmax.bf16 %v695, %v806
      %v809 = vmax.bf16 %v808, %v805
      %v810 = vmax.bf16 %v795, %v809
      %v812 = vsel %vm549, %v810, 0
      %v813 = vrot.slane %v797, 5
      %v814 = vrot.slane %v800, 6
      %v815 = vor.u32 %v813, %v814
      %v817 = vsel %vm715, 0, %v815
      %v819 = vrot.slane %v817, 4
      %v821 = vmax.bf16 %v808, %v819
      %v823 = vrot.slane %v821, 4
      %v825 = vmax.bf16 %v809, %v823
      %v827 = vshrl.u32 %v694, 16
      %v829 = vrot.slane %v827, 1
      %v830 = vshll.u32 %v694, 16
      %v832 = vrot.slane %v830, 2
      %v833 = vor.u32 %v829, %v832
      %v835 = vsel %vm715, 0, %v833
      %v836 = vrot.slane %v694, 2
      %v838 = vmax.bf16 %v694, %v836
      %v839 = vmax.bf16 %v838, %v835
      %v840 = vmax.bf16 %v825, %v839
      %v842 = vsel %vm549, %v840, 0
      %v844 = vrot.slane %v782, 4
      %v846 = vrot.slane %v842, 4
      %v848 = vsel %vm700, %v752, %v844
      %v851 = vsel %vm700, %v812, %v846
      %v855 = vunpack.c.l.b16 %v848
      %v856 = vunpack.c.h.b16 %v848
      %v857 = vunpack.c.l.b16 %v851
      %v858 = vunpack.c.h.b16 %v851
      %v859 = vpack.c.b16 %v855, %v855
      %v860 = vpack.c.b16 %v856, %v856
      %v861 = vpack.c.b16 %v857, %v857
      %v862 = vpack.c.b16 %v858, %v858
      %867 = vst [vmem:[%s395] sm:$0xf] %v859
      %868 = vst [vmem:[%s395 + $0x4] sm:$0xf] %v860
      %869 = vst [vmem:[%s395 + $0x8] sm:$0xf] %v861
      %870 = vst [vmem:[%s395 + $0xc] sm:$0xf] %v862
      %v871 = vld [vmem:[%s4] sm:$0xf]
      %v872 = vld [vmem:[%s4 + $0x4] sm:$0xf]
      %v873 = vld [vmem:[%s4 + $0x8] sm:$0xf]
      %v874 = vld [vmem:[%s4 + $0xc] sm:$0xf]
      %v875 = vld [vmem:[%s4 + $0x10] sm:$0xf]
      %v876 = vld [vmem:[%s4 + $0x14] sm:$0xf]
      %v877 = vld [vmem:[%s4 + $0x18] sm:$0xf]
      %v878 = vld [vmem:[%s4 + $0x1c] sm:$0xf]
      %v879 = vld [vmem:[%s4 + $0x20] sm:$0xf]
      %v880 = vld [vmem:[%s4 + $0x24] sm:$0xf]
      %v881 = vld [vmem:[%s4 + $0x28] sm:$0xf]
      %v882 = vld [vmem:[%s4 + $0x2c] sm:$0xf]
      %v883 = vld [vmem:[%s4 + $0x30] sm:$0xf]
      %v884 = vld [vmem:[%s4 + $0x34] sm:$0xf]
      %v885 = vld [vmem:[%s4 + $0x38] sm:$0xf]
      %v886 = vld [vmem:[%s4 + $0x3c] sm:$0xf]
      %v887 = vld [vmem:[%s5] sm:$0x1]
      %v889 = vlaneseq
      %v890 = vshrl.u32 %v889, 7
      %v891 = vsub.s32 0, %v890
      %v892 = vrot.slane %v887, %v891
      %v910 = vunpack.c.l.b16 %v871
      %v911 = vunpack.c.l.b16 %v872
      %v912 = vunpack.c.l.b16 %v873
      %v913 = vunpack.c.l.b16 %v874
      %v914 = vunpack.c.l.b16 %v875
      %v915 = vunpack.c.l.b16 %v876
      %v916 = vunpack.c.l.b16 %v877
      %v917 = vunpack.c.l.b16 %v878
      %v918 = vunpack.c.l.b16 %v879
      %v919 = vunpack.c.l.b16 %v880
      %v920 = vunpack.c.l.b16 %v881
      %v921 = vunpack.c.l.b16 %v882
      %v922 = vunpack.c.l.b16 %v883
      %v923 = vunpack.c.l.b16 %v884
      %v924 = vunpack.c.l.b16 %v885
      %v925 = vunpack.c.l.b16 %v886
      %v926 = vpack.c.b16 %v911, %v910
      %v927 = vpack.c.b16 %v913, %v912
      %v928 = vpack.c.b16 %v915, %v914
      %v929 = vpack.c.b16 %v917, %v916
      %v930 = vpack.c.b16 %v919, %v918
      %v931 = vpack.c.b16 %v921, %v920
      %v932 = vpack.c.b16 %v923, %v922
      %v933 = vpack.c.b16 %v925, %v924
      %942 = vmatprep.subr.bf16.mxu0 0
      %943 = vmatpush1.bf16.msra.mxu0 %v933
      %944 = vmatprep.subr.bf16.mxu0 0
      %945 = vmatpush1.bf16.msra.mxu0 %v932
      %946 = vmatprep.subr.bf16.mxu0 0
      %947 = vmatpush1.bf16.msra.mxu0 %v931
      %948 = vmatprep.subr.bf16.mxu0 0
      %949 = vmatpush1.bf16.msra.mxu0 %v930
      %950 = vmatprep.subr.bf16.mxu0 0
      %951 = vmatpush1.bf16.msra.mxu0 %v929
      %952 = vmatprep.subr.bf16.mxu0 0
      %953 = vmatpush1.bf16.msra.mxu0 %v928
      %954 = vmatprep.subr.bf16.mxu0 0
      %955 = vmatpush1.bf16.msra.mxu0 %v927
      %956 = vmatprep.subr.bf16.mxu0 0
      %957 = vmatpush1.bf16.msra.mxu0 %v926
      %958 = vmatprep.subr.bf16.mxu0 0
      %959 = vmatpush2.bf16.msra.mxu0 0
      %960 = vmatprep.subr.bf16.mxu0 0
      %961 = vmatpush2.bf16.msra.mxu0 0
      %962 = vmatprep.subr.bf16.mxu0 0
      %963 = vmatpush2.bf16.msra.mxu0 0
      %964 = vmatprep.subr.bf16.mxu0 0
      %965 = vmatpush2.bf16.msra.mxu0 0
      %966 = vmatprep.subr.bf16.mxu0 0
      %967 = vmatpush2.bf16.msra.mxu0 0
      %968 = vmatprep.subr.bf16.mxu0 0
      %969 = vmatpush2.bf16.msra.mxu0 0
      %970 = vmatprep.subr.bf16.mxu0 0
      %971 = vmatpush2.bf16.msra.mxu0 0
      %972 = vmatprep.subr.bf16.mxu0 0
      %973 = vmatpush2.bf16.msra.mxu0 0
      %974 = vmatprep.mubr.bf16.mxu0 0
      %975 = vmatmul.mubr.bf16.gmra.mxu0 %v848
      %v976 = vpop.f32.mrf.mxu0
      %v977 = vadd.f32 %v892, %v976
      %v978 = vpop.f32.mrf.mxu0
      %v979 = vpop.f32.mrf.mxu0
      %v980 = vadd.f32 %v892, %v979
      %v981 = vpop.f32.mrf.mxu0
      %982 = vmatprep.mubr.bf16.mxu0 0
      %983 = vmatmul.mubr.bf16.gmra.mxu0 %v851
      %v984 = vpop.f32.mrf.mxu0
      %v985 = vadd.f32 %v892, %v984
      %v986 = vpop.f32.mrf.mxu0
      %v987 = vpop.f32.mrf.mxu0
      %v988 = vadd.f32 %v892, %v987
      %v989 = vpop.f32.mrf.mxu0
      %990 = vdwg.mxu0
      %v991 = vmax.f32 %v977, 0.0
      %v992 = vmax.f32 %v980, 0.0
      %v993 = vmax.f32 %v985, 0.0
      %v994 = vmax.f32 %v988, 0.0
      %v995 = vlaneseq
      %v996 = vshrl.u32 %v995, 7
      %v997 = vadd.s32 %v996, 8
      %v998 = vadd.s32 %v996, 16
      %v999 = vadd.s32 %v996, 24
      %vm1000 = vcmp.lt.s32.totalorder %v996, 0
      %v1001 = vsub.s32 0, %v996
      %v1002 = vsel %vm1000, %v1001, %v996
      %v1003 = vshrl.u32 %v1002, 3
      %v1004 = vand.u32 %v1002, 7
      %v1005 = vsub.s32 0, %v1004
      %v1006 = vsel %vm1000, %v1005, %v1004
      %vm1007 = vcmp.lt.s32.totalorder %v997, 0
      %v1008 = vsub.s32 0, %v997
      %v1009 = vsel %vm1007, %v1008, %v997
      %v1010 = vshrl.u32 %v1009, 3
      %v1011 = vand.u32 %v1009, 7
      %v1012 = vsub.s32 0, %v1011
      %v1013 = vsel %vm1007, %v1012, %v1011
      %vm1014 = vcmp.lt.s32.totalorder %v998, 0
      %v1015 = vsub.s32 0, %v998
      %v1016 = vsel %vm1014, %v1015, %v998
      %v1017 = vshrl.u32 %v1016, 3
      %v1018 = vand.u32 %v1016, 7
      %v1019 = vsub.s32 0, %v1018
      %v1020 = vsel %vm1014, %v1019, %v1018
      %vm1021 = vcmp.lt.s32.totalorder %v999, 0
      %v1022 = vsub.s32 0, %v999
      %v1023 = vsel %vm1021, %v1022, %v999
      %v1024 = vshrl.u32 %v1023, 3
      %v1025 = vand.u32 %v1023, 7
      %v1026 = vsub.s32 0, %v1025
      %v1027 = vsel %vm1021, %v1026, %v1025
      %vm1028 = vcmp.ne.s32.totalorder %v1006, 0
      %vm1029 = vcmp.ne.s32.totalorder %v1013, 0
      %vm1030 = vcmp.ne.s32.totalorder %v1020, 0
      %vm1031 = vcmp.ne.s32.totalorder %v1027, 0
      %vm1032 = vcmp.lt.s32.totalorder %v1006, 0
      %vm1033 = vcmp.lt.s32.totalorder %v1013, 0
      %vm1034 = vcmp.lt.s32.totalorder %v1020, 0
      %vm1035 = vcmp.lt.s32.totalorder %v1027, 0
      %vm1036 = vmand %vm1032, %vm1028
      %vm1037 = vmand %vm1033, %vm1029
      %vm1038 = vmand %vm1034, %vm1030
      %vm1039 = vmand %vm1035, %vm1031
      %v1040 = vadd.s32 %v1006, 8
      %v1041 = vadd.s32 %v1013, 8
      %v1042 = vadd.s32 %v1020, 8
      %v1043 = vadd.s32 %v1027, 8
      %v1044 = vsel %vm1036, %v1040, %v1006
      %v1045 = vsel %vm1037, %v1041, %v1013
      %v1046 = vsel %vm1038, %v1042, %v1020
      %v1047 = vsel %vm1039, %v1043, %v1027
      %vm1048 = vcmp.lt.s32.totalorder %v1044, 4
      %vm1049 = vcmp.lt.s32.totalorder %v1045, 4
      %vm1050 = vcmp.lt.s32.totalorder %v1046, 4
      %vm1051 = vcmp.lt.s32.totalorder %v1047, 4
      %v1052 = vsel %vm1048, 1, 0
      %v1053 = vsel %vm1049, 1, 0
      %v1054 = vsel %vm1050, 1, 0
      %v1055 = vsel %vm1051, 1, 0
      %vm1056 = vcmp.eq.s32.totalorder %v1052, 1
      %vm1057 = vcmp.eq.s32.totalorder %v1053, 1
      %vm1058 = vcmp.eq.s32.totalorder %v1054, 1
      %vm1059 = vcmp.eq.s32.totalorder %v1055, 1
      %v1060 = vsel %vm1056, %v991, 0.0
      %v1061 = vsel %vm1057, %v992, 0.0
      %v1062 = vsel %vm1058, %v993, 0.0
      %v1063 = vsel %vm1059, %v994, 0.0
      %v1064 = vpack.c.bf16 %v1061, %v1060
      %v1065 = vpack.c.bf16 %v1063, %v1062
      %v1068 = vunpack.c.l.b16 %v1064
      %v1069 = vunpack.c.h.b16 %v1064
      %v1070 = vunpack.c.l.b16 %v1065
      %v1071 = vunpack.c.h.b16 %v1065
      %v1072 = vpack.c.b16 %v1068, %v1068
      %v1073 = vpack.c.b16 %v1069, %v1069
      %v1074 = vpack.c.b16 %v1070, %v1070
      %v1075 = vpack.c.b16 %v1071, %v1071
      %1080 = vst [vmem:[%s405] sm:$0xf] %v1072
      %1081 = vst [vmem:[%s405 + $0x4] sm:$0xf] %v1073
      %1082 = vst [vmem:[%s405 + $0x8] sm:$0xf] %v1074
      %1083 = vst [vmem:[%s405 + $0xc] sm:$0xf] %v1075
      %s1084 = smul.u32 4, %s24
      %p1085 = scmp.lt.s32.totalorder %s23, 1
      %s1086 = scalar_select %p1085, %s23, 1
      %p1087 = scmp.lt.s32.totalorder %s1084, 3
      %s1088 = scalar_select %p1087, %s1084, 3
      %s1089 = smul.addr %s1086, 4
      %s1090 = sadd.s32 %s1088, %s1089
      %s1091 = smul.addr %s1090, 4
      %s1092 = scalar_lea.vmem %s6, %s1091
      %s1093 = smul.u32 4, %s24
      %p1094 = scmp.lt.s32.totalorder %s23, 1
      %s1095 = scalar_select %p1094, %s23, 1
      %p1096 = scmp.lt.s32.totalorder %s1093, 3
      %s1097 = scalar_select %p1096, %s1093, 3
      %s1098 = smul.addr %s1095, 4
      %s1099 = sadd.s32 %s1097, %s1098
      %s1100 = smul.addr %s1099, 4
      %s1101 = scalar_lea.vmem %s7, %s1100
      // Predicated region
      $region45: #{encoder_cnn_forward.2} parent=43 // pred_check
        %p1102 = pneg %p199
      $region46: #{encoder_cnn_forward.2} parent=43 // pred_check_branch
        %1104 = sbr.rel (%p1102) target = $region48
      $region47: #{encoder_cnn_forward.2} parent=43 // pred_region
        %s1105 = smul.u32 4, %s24
      $region48: #{encoder_cnn_forward.2} parent=43 // pred_fallthru
        _
      // Predicated region
      $region49: #{encoder_cnn_forward.2} parent=43 // pred_check
        %p1106 = pneg %p227
      $region50: #{encoder_cnn_forward.2} parent=43 // pred_check_branch
        %1108 = sbr.rel (%p1106) target = $region52
      $region51: #{encoder_cnn_forward.2} parent=43 // pred_region
        %s1109 = smul.u32 4, %s24
      $region52: #{encoder_cnn_forward.2} parent=43 // pred_fallthru
        _
    $region44: #{encoder_cnn_forward.2} parent=5 // pred_fallthru
      _
    %p1110 = scmp.le.s32.totalorder 2, %s14
    // Predicated region
    $region53: #{encoder_cnn_forward.2} parent=5 // pred_check
      %p1111 = pneg %p1110
    $region54: #{encoder_cnn_forward.2} parent=5 // pred_check_branch
      %1113 = sbr.rel (%p1111) target = $region56
    $region55: #{encoder_cnn_forward.2} parent=5 // pred_region
      %s1114 = ssub.s32 %s14, 2
      // Predicated region
      $region57: #{encoder_cnn_forward.2} parent=55 // pred_check
        %p1115 = pneg %p205
      $region58: #{encoder_cnn_forward.2} parent=55 // pred_check_branch
        %1117 = sbr.rel (%p1115) target = $region60
      $region59: #{encoder_cnn_forward.2} parent=55 // pred_region
        %s1118 = smul.u32 4, %s26
        %p1119 = scmp.lt.s32.totalorder %s25, 1
        %s1120 = scalar_select %p1119, %s25, 1
        %p1121 = scmp.lt.s32.totalorder %s1118, 3
        %s1122 = scalar_select %p1121, %s1118, 3
        %s1123 = smul.addr %s1120, 4
        %s1124 = sadd.s32 %s1122, %s1123
        %s1125 = smul.addr %s1124, 4
        %s1126 = scalar_lea.vmem %s6, %s1125
      $region60: #{encoder_cnn_forward.2} parent=55 // pred_fallthru
        _
      // Predicated region
      $region61: #{encoder_cnn_forward.2} parent=55 // pred_check
        %p1127 = pneg %p233
      $region62: #{encoder_cnn_forward.2} parent=55 // pred_check_branch
        %1129 = sbr.rel (%p1127) target = $region64
      $region63: #{encoder_cnn_forward.2} parent=55 // pred_region
        %s1130 = smul.u32 4, %s26
        %p1131 = scmp.lt.s32.totalorder %s25, 1
        %s1132 = scalar_select %p1131, %s25, 1
        %p1133 = scmp.lt.s32.totalorder %s1130, 3
        %s1134 = scalar_select %p1133, %s1130, 3
        %s1135 = smul.addr %s1132, 4
        %s1136 = sadd.s32 %s1134, %s1135
        %s1137 = smul.addr %s1136, 4
        %s1138 = scalar_lea.vmem %s7, %s1137
      $region64: #{encoder_cnn_forward.2} parent=55 // pred_fallthru
        _
    $region56: #{encoder_cnn_forward.2} parent=5 // pred_fallthru
      _
  $region6: #{encoder_cnn_forward.2} parent=0 // loop_footer
    %s18 = sadd.s32 1, %s14
  $region7: #{encoder_cnn_forward.2} parent=0 // loop_footer_branch
    %13 = sbr.rel target = $region3
  $region8: #{encoder_cnn_forward.2} parent=0 // loop_exit
    _

// kernel: encoder_cnn_forward.3
$region0: #{encoder_cnn_forward.3}
  #allocation0 [shape = 'u32[]', space=smem, size = 0x4, offset = 0x4, fixed_abs, tag = 'smem constant byte address 0x4 - core index']
  #allocation1 [shape = 'u32[144,128]{1,0:T(1,128)}', space=vmem, size = 0x12000, scoped, tag = 'internal scratch']
  #allocation2 [shape = 'f32[1,256]{1,0:T(1,128)}', space=vmem, size = 0x400, scoped, tag = 'scratch operand']
  %s0 = inlined_call_operand.vmem [shape: bf16[2,32,128], index: 0, kind: input, shape index: {}, may-alias: {0,1,2}]
  %s1 = inlined_call_operand.vmem [shape: bf16[2,32,128], index: 1, kind: input, shape index: {}, may-alias: {0,1,2}]
  %s2 = inlined_call_operand.vmem [shape: bf16[2,32,128], index: 2, kind: input, shape index: {}, may-alias: {0,1,2}]
  %s3 = inlined_call_operand.vmem [shape: bf16[2,32,128], index: 3, kind: input, shape index: {}]
  %s4 = inlined_call_operand.vmem [shape: bf16[9,128,128], index: 4, kind: input, shape index: {}]
  %s5 = inlined_call_operand.vmem [shape: f32[1,128], index: 5, kind: input, shape index: {}]
  %s6 = inlined_call_operand.vmem [shape: bf16[128,256], index: 6, kind: input, shape index: {}]
  %s7 = inlined_call_operand.vmem [shape: f32[1,256], index: 7, kind: input, shape index: {}]
  %s8 = inlined_call_operand.vmem [shape: bf16[128,256], index: 8, kind: input, shape index: {}]
  %s9 = inlined_call_operand.vmem [shape: f32[1,256], index: 9, kind: input, shape index: {}]
  %s10 = inlined_call_operand.vmem [shape: bf16[256,128], index: 10, kind: input, shape index: {}]
  %s11 = inlined_call_operand.vmem [shape: f32[1,128], index: 11, kind: input, shape index: {}]
  %s12 = inlined_call_operand.hbm [shape: f32[2,1,128], index: 12, kind: output, shape index: {}]
  %s13 = sld [smem:[#allocation0]]
  $region89: #{encoder_cnn_forward.3} parent=0
    _
  %s15 = ssub.s32 1, %s13
  %s16 = scalar_select 0, %s15, %s13
  $region1: #{encoder_cnn_forward.3} parent=0
    #allocation3 [shape = 'u8[1024]{0}', space=vmem, size = 0x400, scoped, tag = 'output window, operand 0']
    #allocation4 [shape = 's32[2]{0}', space=sflag, size = 0x8, scoped, tag = 'scoped memory for encoder_cnn_forward.3']
    %17 = vsyncpa [#allocation4], 0
    %s18 = scalar_lea.sflag [#allocation4], 1
    %19 = vsyncpa %s18, 0
    loop: start=0, step=1, limit=4
    $region2: #{encoder_cnn_forward.3} parent=1 // loop_pre_header
      _
    $region3: #{encoder_cnn_forward.3} parent=1 // loop_header
      %s21 = sphi 0, %s25
      %p22 = scmp.ge.s32.totalorder %s21, 4
      %s28 = sphi 0, %s40
      %s29 = sphi 0, %s36
      %s30 = sphi 0, %s28
      %s31 = sphi 0, %s29
      %s32 = sphi 0, %s30
      %s33 = sphi 0, %s31
      %s45 = sphi 0, %s47
      %s48 = sphi 0, %s45
      %s49 = sphi 0, %s48
      %s65 = sphi 0, %s49
      %s81 = sphi 0, %s83
      %s84 = sphi 0, %s81
      %s85 = sphi 0, %s84
      %s101 = sphi 0, %s85
      %s117 = sphi 0, %s119
      %s120 = sphi 0, %s117
      %s121 = sphi 0, %s120
      %s137 = sphi 0, %s121
      %s145 = sphi 0, %s147
      %s148 = sphi 0, %s145
      %s149 = sphi 0, %s148
      %s165 = sphi 0, %s149
      %s169 = sphi 0, %s169
      %s171 = sphi 0, %s169
      %s172 = sphi 0, %s171
      %s186 = sphi 0, %s172
      %s190 = sphi 0, %s190
      %s192 = sphi 0, %s190
      %s193 = sphi 0, %s192
      %s207 = sphi 0, %s193
      %s211 = sphi 0, %s211
      %s213 = sphi 0, %s211
      %s214 = sphi 0, %s213
      %s228 = sphi 0, %s214
      %s232 = sphi 0, %s232
      %s234 = sphi 0, %s232
      %s235 = sphi 0, %s234
      %s249 = sphi 0, %s235
      %s253 = sphi 0, %s253
      %s255 = sphi 0, %s253
      %s256 = sphi 0, %s255
      %s270 = sphi 0, %s256
      %s274 = sphi 0, %s274
      %s276 = sphi 0, %s274
      %s277 = sphi 0, %s276
      %s291 = sphi 0, %s277
      %s295 = sphi 0, %s295
      %s297 = sphi 0, %s295
      %s298 = sphi 0, %s297
      %s312 = sphi 0, %s298
      %s316 = sphi 0, %s316
      %s318 = sphi 0, %s316
      %s319 = sphi 0, %s318
      %s333 = sphi 0, %s319
      %s339 = sphi 0, %s341
      %s342 = sphi 0, %s339
      %s343 = sphi 0, %s342
      %s359 = sphi 0, %s343
    $region4: #{encoder_cnn_forward.3} parent=1 // loop_header_branch
      %24 = sbr.rel (%p22) target = $region8
    $region5: #{encoder_cnn_forward.3} parent=1 // loop_body
      %s26 = ssub.s32 %s21, 1
      %s27 = ssub.s32 %s21, 2
      %s34 = sadd.s32 1, %s29
      %p35 = scmp.ge.s32.totalorder %s34, 1
      %s36 = scalar_select %p35, 0, %s34
      %s37 = sadd.s32 1, %s28
      %s38 = scalar_select %p35, %s37, %s28
      %p39 = scmp.ge.s32.totalorder %s38, 2
      %s40 = scalar_select %p39, 0, %s38
      %s41 = ssub.s32 %s28, %s40
      %s42 = ssub.s32 %s29, %s36
      %s43 = sor.u32 %s41, %s42
      %p44 = scmp.eq.s32.totalorder %s43, 0
      %s46 = sadd.s32 %s45, 1
      %s47 = scalar_select %p44, %s45, %s46
      %p50 = pneg %p44
      %p51 = scmp.eq.s32.totalorder %s21, 1
      %p52 = por %p50, %p51
      %p53 = scmp.ne.s32.totalorder %s45, %s48
      %p54 = scmp.eq.s32.totalorder %s21, 0
      %p55 = por %p53, %p54
      %p56 = scmp.ne.s32.totalorder %s45, %s48
      %p57 = scmp.eq.s32.totalorder %s26, 1
      %p58 = por %p56, %p57
      %p59 = scmp.ne.s32.totalorder %s48, %s49
      %p60 = scmp.eq.s32.totalorder %s26, 0
      %p61 = por %p59, %p60
      %p62 = scmp.ne.s32.totalorder %s48, %s49
      %p63 = scmp.eq.s32.totalorder %s27, 1
      %p64 = por %p62, %p63
      %p66 = scmp.ne.s32.totalorder %s49, %s65
      %p67 = scmp.eq.s32.totalorder %s27, 0
      %p68 = por %p66, %p67
      %s69 = smul.u32 %s29, 4
      %s70 = ssub.s32 %s69, 1
      %p71 = scmp.gt.s32.totalorder %s70, 0
      %s72 = scalar_select %p71, %s70, 0
      %s73 = smul.u32 %s36, 4
      %s74 = ssub.s32 %s73, 1
      %p75 = scmp.gt.s32.totalorder %s74, 0
      %s76 = scalar_select %p75, %s74, 0
      %s77 = ssub.s32 %s28, %s40
      %s78 = ssub.s32 %s72, %s76
      %s79 = sor.u32 %s77, %s78
      %p80 = scmp.eq.s32.totalorder %s79, 0
      %s82 = sadd.s32 %s81, 1
      %s83 = scalar_select %p80, %s81, %s82
      %p86 = pneg %p80
      %p87 = scmp.eq.s32.totalorder %s21, 1
      %p88 = por %p86, %p87
      %p89 = scmp.ne.s32.totalorder %s81, %s84
      %p90 = scmp.eq.s32.totalorder %s21, 0
      %p91 = por %p89, %p90
      %p92 = scmp.ne.s32.totalorder %s81, %s84
      %p93 = scmp.eq.s32.totalorder %s26, 1
      %p94 = por %p92, %p93
      %p95 = scmp.ne.s32.totalorder %s84, %s85
      %p96 = scmp.eq.s32.totalorder %s26, 0
      %p97 = por %p95, %p96
      %p98 = scmp.ne.s32.totalorder %s84, %s85
      %p99 = scmp.eq.s32.totalorder %s27, 1
      %p100 = por %p98, %p99
      %p102 = scmp.ne.s32.totalorder %s85, %s101
      %p103 = scmp.eq.s32.totalorder %s27, 0
      %p104 = por %p102, %p103
      %s105 = sadd.s32 %s29, 1
      %s106 = smul.u32 %s105, 4
      %p107 = scmp.lt.s32.totalorder %s106, 3
      %s108 = scalar_select %p107, %s106, 3
      %s109 = sadd.s32 %s36, 1
      %s110 = smul.u32 %s109, 4
      %p111 = scmp.lt.s32.totalorder %s110, 3
      %s112 = scalar_select %p111, %s110, 3
      %s113 = ssub.s32 %s28, %s40
      %s114 = ssub.s32 %s108, %s112
      %s115 = sor.u32 %s113, %s114
      %p116 = scmp.eq.s32.totalorder %s115, 0
      %s118 = sadd.s32 %s117, 1
      %s119 = scalar_select %p116, %s117, %s118
      %p122 = pneg %p116
      %p123 = scmp.eq.s32.totalorder %s21, 1
      %p124 = por %p122, %p123
      %p125 = scmp.ne.s32.totalorder %s117, %s120
      %p126 = scmp.eq.s32.totalorder %s21, 0
      %p127 = por %p125, %p126
      %p128 = scmp.ne.s32.totalorder %s117, %s120
      %p129 = scmp.eq.s32.totalorder %s26, 1
      %p130 = por %p128, %p129
      %p131 = scmp.ne.s32.totalorder %s120, %s121
      %p132 = scmp.eq.s32.totalorder %s26, 0
      %p133 = por %p131, %p132
      %p134 = scmp.ne.s32.totalorder %s120, %s121
      %p135 = scmp.eq.s32.totalorder %s27, 1
      %p136 = por %p134, %p135
      %p138 = scmp.ne.s32.totalorder %s121, %s137
      %p139 = scmp.eq.s32.totalorder %s27, 0
      %p140 = por %p138, %p139
      %s141 = ssub.s32 %s28, %s40
      %s142 = ssub.s32 %s29, %s36
      %s143 = sor.u32 %s141, %s142
      %p144 = scmp.eq.s32.totalorder %s143, 0
      %s146 = sadd.s32 %s145, 1
      %s147 = scalar_select %p144, %s145, %s146
      %p150 = pneg %p144
      %p151 = scmp.eq.s32.totalorder %s21, 1
      %p152 = por %p150, %p151
      %p153 = scmp.ne.s32.totalorder %s145, %s148
      %p154 = scmp.eq.s32.totalorder %s21, 0
      %p155 = por %p153, %p154
      %p156 = scmp.ne.s32.totalorder %s145, %s148
      %p157 = scmp.eq.s32.totalorder %s26, 1
      %p158 = por %p156, %p157
      %p159 = scmp.ne.s32.totalorder %s148, %s149
      %p160 = scmp.eq.s32.totalorder %s26, 0
      %p161 = por %p159, %p160
      %p162 = scmp.ne.s32.totalorder %s148, %s149
      %p163 = scmp.eq.s32.totalorder %s27, 1
      %p164 = por %p162, %p163
      %p166 = scmp.ne.s32.totalorder %s149, %s165
      %p167 = scmp.eq.s32.totalorder %s27, 0
      %p168 = por %p166, %p167
      %s170 = sadd.s32 %s169, 1
      %p173 = scmp.eq.s32.totalorder %s21, 1
      %p174 = scmp.ne.s32.totalorder %s169, %s171
      %p175 = scmp.eq.s32.totalorder %s21, 0
      %p176 = por %p174, %p175
      %p177 = scmp.ne.s32.totalorder %s169, %s171
      %p178 = scmp.eq.s32.totalorder %s26, 1
      %p179 = por %p177, %p178
      %p180 = scmp.ne.s32.totalorder %s171, %s172
      %p181 = scmp.eq.s32.totalorder %s26, 0
      %p182 = por %p180, %p181
      %p183 = scmp.ne.s32.totalorder %s171, %s172
      %p184 = scmp.eq.s32.totalorder %s27, 1
      %p185 = por %p183, %p184
      %p187 = scmp.ne.s32.totalorder %s172, %s186
      %p188 = scmp.eq.s32.totalorder %s27, 0
      %p189 = por %p187, %p188
      %s191 = sadd.s32 %s190, 1
      %p194 = scmp.eq.s32.totalorder %s21, 1
      %p195 = scmp.ne.s32.totalorder %s190, %s192
      %p196 = scmp.eq.s32.totalorder %s21, 0
      %p197 = por %p195, %p196
      %p198 = scmp.ne.s32.totalorder %s190, %s192
      %p199 = scmp.eq.s32.totalorder %s26, 1
      %p200 = por %p198, %p199
      %p201 = scmp.ne.s32.totalorder %s192, %s193
      %p202 = scmp.eq.s32.totalorder %s26, 0
      %p203 = por %p201, %p202
      %p204 = scmp.ne.s32.totalorder %s192, %s193
      %p205 = scmp.eq.s32.totalorder %s27, 1
      %p206 = por %p204, %p205
      %p208 = scmp.ne.s32.totalorder %s193, %s207
      %p209 = scmp.eq.s32.totalorder %s27, 0
      %p210 = por %p208, %p209
      %s212 = sadd.s32 %s211, 1
      %p215 = scmp.eq.s32.totalorder %s21, 1
      %p216 = scmp.ne.s32.totalorder %s211, %s213
      %p217 = scmp.eq.s32.totalorder %s21, 0
      %p218 = por %p216, %p217
      %p219 = scmp.ne.s32.totalorder %s211, %s213
      %p220 = scmp.eq.s32.totalorder %s26, 1
      %p221 = por %p219, %p220
      %p222 = scmp.ne.s32.totalorder %s213, %s214
      %p223 = scmp.eq.s32.totalorder %s26, 0
      %p224 = por %p222, %p223
      %p225 = scmp.ne.s32.totalorder %s213, %s214
      %p226 = scmp.eq.s32.totalorder %s27, 1
      %p227 = por %p225, %p226
      %p229 = scmp.ne.s32.totalorder %s214, %s228
      %p230 = scmp.eq.s32.totalorder %s27, 0
      %p231 = por %p229, %p230
      %s233 = sadd.s32 %s232, 1
      %p236 = scmp.eq.s32.totalorder %s21, 1
      %p237 = scmp.ne.s32.totalorder %s232, %s234
      %p238 = scmp.eq.s32.totalorder %s21, 0
      %p239 = por %p237, %p238
      %p240 = scmp.ne.s32.totalorder %s232, %s234
      %p241 = scmp.eq.s32.totalorder %s26, 1
      %p242 = por %p240, %p241
      %p243 = scmp.ne.s32.totalorder %s234, %s235
      %p244 = scmp.eq.s32.totalorder %s26, 0
      %p245 = por %p243, %p244
      %p246 = scmp.ne.s32.totalorder %s234, %s235
      %p247 = scmp.eq.s32.totalorder %s27, 1
      %p248 = por %p246, %p247
      %p250 = scmp.ne.s32.totalorder %s235, %s249
      %p251 = scmp.eq.s32.totalorder %s27, 0
      %p252 = por %p250, %p251
      %s254 = sadd.s32 %s253, 1
      %p257 = scmp.eq.s32.totalorder %s21, 1
      %p258 = scmp.ne.s32.totalorder %s253, %s255
      %p259 = scmp.eq.s32.totalorder %s21, 0
      %p260 = por %p258, %p259
      %p261 = scmp.ne.s32.totalorder %s253, %s255
      %p262 = scmp.eq.s32.totalorder %s26, 1
      %p263 = por %p261, %p262
      %p264 = scmp.ne.s32.totalorder %s255, %s256
      %p265 = scmp.eq.s32.totalorder %s26, 0
      %p266 = por %p264, %p265
      %p267 = scmp.ne.s32.totalorder %s255, %s256
      %p268 = scmp.eq.s32.totalorder %s27, 1
      %p269 = por %p267, %p268
      %p271 = scmp.ne.s32.totalorder %s256, %s270
      %p272 = scmp.eq.s32.totalorder %s27, 0
      %p273 = por %p271, %p272
      %s275 = sadd.s32 %s274, 1
      %p278 = scmp.eq.s32.totalorder %s21, 1
      %p279 = scmp.ne.s32.totalorder %s274, %s276
      %p280 = scmp.eq.s32.totalorder %s21, 0
      %p281 = por %p279, %p280
      %p282 = scmp.ne.s32.totalorder %s274, %s276
      %p283 = scmp.eq.s32.totalorder %s26, 1
      %p284 = por %p282, %p283
      %p285 = scmp.ne.s32.totalorder %s276, %s277
      %p286 = scmp.eq.s32.totalorder %s26, 0
      %p287 = por %p285, %p286
      %p288 = scmp.ne.s32.totalorder %s276, %s277
      %p289 = scmp.eq.s32.totalorder %s27, 1
      %p290 = por %p288, %p289
      %p292 = scmp.ne.s32.totalorder %s277, %s291
      %p293 = scmp.eq.s32.totalorder %s27, 0
      %p294 = por %p292, %p293
      %s296 = sadd.s32 %s295, 1
      %p299 = scmp.eq.s32.totalorder %s21, 1
      %p300 = scmp.ne.s32.totalorder %s295, %s297
      %p301 = scmp.eq.s32.totalorder %s21, 0
      %p302 = por %p300, %p301
      %p303 = scmp.ne.s32.totalorder %s295, %s297
      %p304 = scmp.eq.s32.totalorder %s26, 1
      %p305 = por %p303, %p304
      %p306 = scmp.ne.s32.totalorder %s297, %s298
      %p307 = scmp.eq.s32.totalorder %s26, 0
      %p308 = por %p306, %p307
      %p309 = scmp.ne.s32.totalorder %s297, %s298
      %p310 = scmp.eq.s32.totalorder %s27, 1
      %p311 = por %p309, %p310
      %p313 = scmp.ne.s32.totalorder %s298, %s312
      %p314 = scmp.eq.s32.totalorder %s27, 0
      %p315 = por %p313, %p314
      %s317 = sadd.s32 %s316, 1
      %p320 = scmp.eq.s32.totalorder %s21, 1
      %p321 = scmp.ne.s32.totalorder %s316, %s318
      %p322 = scmp.eq.s32.totalorder %s21, 0
      %p323 = por %p321, %p322
      %p324 = scmp.ne.s32.totalorder %s316, %s318
      %p325 = scmp.eq.s32.totalorder %s26, 1
      %p326 = por %p324, %p325
      %p327 = scmp.ne.s32.totalorder %s318, %s319
      %p328 = scmp.eq.s32.totalorder %s26, 0
      %p329 = por %p327, %p328
      %p330 = scmp.ne.s32.totalorder %s318, %s319
      %p331 = scmp.eq.s32.totalorder %s27, 1
      %p332 = por %p330, %p331
      %p334 = scmp.ne.s32.totalorder %s319, %s333
      %p335 = scmp.eq.s32.totalorder %s27, 0
      %p336 = por %p334, %p335
      %s337 = ssub.s32 %s28, %s40
      %p338 = scmp.eq.s32.totalorder %s337, 0
      %s340 = sadd.s32 %s339, 1
      %s341 = scalar_select %p338, %s339, %s340
      %p344 = pneg %p338
      %p345 = scmp.eq.s32.totalorder %s21, 1
      %p346 = por %p344, %p345
      %p347 = scmp.ne.s32.totalorder %s339, %s342
      %p348 = scmp.eq.s32.totalorder %s21, 0
      %p349 = por %p347, %p348
      %p350 = scmp.ne.s32.totalorder %s339, %s342
      %p351 = scmp.eq.s32.totalorder %s26, 1
      %p352 = por %p350, %p351
      %p353 = scmp.ne.s32.totalorder %s342, %s343
      %p354 = scmp.eq.s32.totalorder %s26, 0
      %p355 = por %p353, %p354
      %p356 = scmp.ne.s32.totalorder %s342, %s343
      %p357 = scmp.eq.s32.totalorder %s27, 1
      %p358 = por %p356, %p357
      %p360 = scmp.ne.s32.totalorder %s343, %s359
      %p361 = scmp.eq.s32.totalorder %s27, 0
      %p362 = por %p360, %p361
      %p363 = scmp.le.s32.totalorder 1, %s21
      %p364 = scmp.lt.s32.totalorder %s21, 3
      %p365 = pnand %p363, %p364
      %p366 = pneg %p365
      // Predicated region
      $region9: #{encoder_cnn_forward.3} parent=5 // pred_check
        _
      $region10: #{encoder_cnn_forward.3} parent=5 // pred_check_branch
        %368 = sbr.rel (%p365) target = $region12
      $region11: #{encoder_cnn_forward.3} parent=5 // pred_region
        %s369 = ssub.s32 %s21, 1
        // Predicated region
        $region13: #{encoder_cnn_forward.3} parent=11 // pred_check
          %p370 = pneg %p182
        $region14: #{encoder_cnn_forward.3} parent=11 // pred_check_branch
          %372 = sbr.rel (%p370) target = $region16
        $region15: #{encoder_cnn_forward.3} parent=11 // pred_region
          _
        $region16: #{encoder_cnn_forward.3} parent=11 // pred_fallthru
          _
        // Predicated region
        $region17: #{encoder_cnn_forward.3} parent=11 // pred_check
          %p373 = pneg %p203
        $region18: #{encoder_cnn_forward.3} parent=11 // pred_check_branch
          %375 = sbr.rel (%p373) target = $region20
        $region19: #{encoder_cnn_forward.3} parent=11 // pred_region
          _
        $region20: #{encoder_cnn_forward.3} parent=11 // pred_fallthru
          _
        // Predicated region
        $region21: #{encoder_cnn_forward.3} parent=11 // pred_check
          %p376 = pneg %p224
        $region22: #{encoder_cnn_forward.3} parent=11 // pred_check_branch
          %378 = sbr.rel (%p376) target = $region24
        $region23: #{encoder_cnn_forward.3} parent=11 // pred_region
          _
        $region24: #{encoder_cnn_forward.3} parent=11 // pred_fallthru
          _
        // Predicated region
        $region25: #{encoder_cnn_forward.3} parent=11 // pred_check
          %p379 = pneg %p245
        $region26: #{encoder_cnn_forward.3} parent=11 // pred_check_branch
          %381 = sbr.rel (%p379) target = $region28
        $region27: #{encoder_cnn_forward.3} parent=11 // pred_region
          _
        $region28: #{encoder_cnn_forward.3} parent=11 // pred_fallthru
          _
        // Predicated region
        $region29: #{encoder_cnn_forward.3} parent=11 // pred_check
          %p382 = pneg %p266
        $region30: #{encoder_cnn_forward.3} parent=11 // pred_check_branch
          %384 = sbr.rel (%p382) target = $region32
        $region31: #{encoder_cnn_forward.3} parent=11 // pred_region
          _
        $region32: #{encoder_cnn_forward.3} parent=11 // pred_fallthru
          _
        // Predicated region
        $region33: #{encoder_cnn_forward.3} parent=11 // pred_check
          %p385 = pneg %p287
        $region34: #{encoder_cnn_forward.3} parent=11 // pred_check_branch
          %387 = sbr.rel (%p385) target = $region36
        $region35: #{encoder_cnn_forward.3} parent=11 // pred_region
          _
        $region36: #{encoder_cnn_forward.3} parent=11 // pred_fallthru
          _
        // Predicated region
        $region37: #{encoder_cnn_forward.3} parent=11 // pred_check
          %p388 = pneg %p308
        $region38: #{encoder_cnn_forward.3} parent=11 // pred_check_branch
          %390 = sbr.rel (%p388) target = $region40
        $region39: #{encoder_cnn_forward.3} parent=11 // pred_region
          _
        $region40: #{encoder_cnn_forward.3} parent=11 // pred_fallthru
          _
        // Predicated region
        $region41: #{encoder_cnn_forward.3} parent=11 // pred_check
          %p391 = pneg %p329
        $region42: #{encoder_cnn_forward.3} parent=11 // pred_check_branch
          %393 = sbr.rel (%p391) target = $region44
        $region43: #{encoder_cnn_forward.3} parent=11 // pred_region
          _
        $region44: #{encoder_cnn_forward.3} parent=11 // pred_fallthru
          _
      $region12: #{encoder_cnn_forward.3} parent=5 // pred_fallthru
        _
      %p394 = scmp.lt.s32.totalorder %s21, 2
      // Predicated region
      $region45: #{encoder_cnn_forward.3} parent=5 // pred_check
        %p395 = pneg %p394
      $region46: #{encoder_cnn_forward.3} parent=5 // pred_check_branch
        %397 = sbr.rel (%p395) target = $region48
      $region47: #{encoder_cnn_forward.3} parent=5 // pred_region
        // Predicated region
        $region49: #{encoder_cnn_forward.3} parent=47 // pred_check
          %p398 = pneg %p55
        $region50: #{encoder_cnn_forward.3} parent=47 // pred_check_branch
          %400 = sbr.rel (%p398) target = $region52
        $region51: #{encoder_cnn_forward.3} parent=47 // pred_region
          %s401 = smul.u32 4, %s29
          %p402 = scmp.lt.s32.totalorder %s28, 1
          %s403 = scalar_select %p402, %s28, 1
          %p404 = scmp.lt.s32.totalorder %s401, 3
          %s405 = scalar_select %p404, %s401, 3
          %s406 = smul.addr %s403, 4
          %s407 = sadd.s32 %s405, %s406
          %s408 = smul.addr %s407, 4
          %s409 = scalar_lea.vmem %s0, %s408
          %s410 = smul.u32 4, %s29
        $region52: #{encoder_cnn_forward.3} parent=47 // pred_fallthru
          _
        // Predicated region
        $region53: #{encoder_cnn_forward.3} parent=47 // pred_check
          %p411 = pneg %p91
        $region54: #{encoder_cnn_forward.3} parent=47 // pred_check_branch
          %413 = sbr.rel (%p411) target = $region56
        $region55: #{encoder_cnn_forward.3} parent=47 // pred_region
          %s414 = smul.u32 %s29, 4
          %s415 = ssub.s32 %s414, 1
          %p416 = scmp.gt.s32.totalorder %s415, 0
          %s417 = scalar_select %p416, %s415, 0
          %p418 = scmp.lt.s32.totalorder %s28, 1
          %s419 = scalar_select %p418, %s28, 1
          %p420 = scmp.lt.s32.totalorder %s417, 3
          %s421 = scalar_select %p420, %s417, 3
          %s422 = smul.addr %s419, 4
          %s423 = sadd.s32 %s421, %s422
          %s424 = smul.addr %s423, 4
          %s425 = scalar_lea.vmem %s1, %s424
          %s426 = smul.u32 %s29, 4
          %s427 = ssub.s32 %s426, 1
          %p428 = scmp.gt.s32.totalorder %s427, 0
          %s429 = scalar_select %p428, %s427, 0
        $region56: #{encoder_cnn_forward.3} parent=47 // pred_fallthru
          _
        // Predicated region
        $region57: #{encoder_cnn_forward.3} parent=47 // pred_check
          %p430 = pneg %p127
        $region58: #{encoder_cnn_forward.3} parent=47 // pred_check_branch
          %432 = sbr.rel (%p430) target = $region60
        $region59: #{encoder_cnn_forward.3} parent=47 // pred_region
          %s433 = sadd.s32 %s29, 1
          %s434 = smul.u32 %s433, 4
          %p435 = scmp.lt.s32.totalorder %s434, 3
          %s436 = scalar_select %p435, %s434, 3
          %p437 = scmp.lt.s32.totalorder %s28, 1
          %s438 = scalar_select %p437, %s28, 1
          %p439 = scmp.lt.s32.totalorder %s436, 3
          %s440 = scalar_select %p439, %s436, 3
          %s441 = smul.addr %s438, 4
          %s442 = sadd.s32 %s440, %s441
          %s443 = smul.addr %s442, 4
          %s444 = scalar_lea.vmem %s2, %s443
          %s445 = sadd.s32 %s29, 1
          %s446 = smul.u32 %s445, 4
          %p447 = scmp.lt.s32.totalorder %s446, 3
          %s448 = scalar_select %p447, %s446, 3
        $region60: #{encoder_cnn_forward.3} parent=47 // pred_fallthru
          _
        // Predicated region
        $region61: #{encoder_cnn_forward.3} parent=47 // pred_check
          %p449 = pneg %p155
        $region62: #{encoder_cnn_forward.3} parent=47 // pred_check_branch
          %451 = sbr.rel (%p449) target = $region64
        $region63: #{encoder_cnn_forward.3} parent=47 // pred_region
          %s452 = smul.u32 4, %s29
          %p453 = scmp.lt.s32.totalorder %s28, 1
          %s454 = scalar_select %p453, %s28, 1
          %p455 = scmp.lt.s32.totalorder %s452, 3
          %s456 = scalar_select %p455, %s452, 3
          %s457 = smul.addr %s454, 4
          %s458 = sadd.s32 %s456, %s457
          %s459 = smul.addr %s458, 4
          %s460 = scalar_lea.vmem %s3, %s459
          %s461 = smul.u32 4, %s29
        $region64: #{encoder_cnn_forward.3} parent=47 // pred_fallthru
          _
      $region48: #{encoder_cnn_forward.3} parent=5 // pred_fallthru
        _
      %p462 = scmp.le.s32.totalorder 1, %s21
      %p463 = scmp.lt.s32.totalorder %s21, 3
      %p464 = pnand %p462, %p463
      %p465 = pneg %p464
      // Predicated region
      $region65: #{encoder_cnn_forward.3} parent=5 // pred_check
        _
      $region66: #{encoder_cnn_forward.3} parent=5 // pred_check_branch
        %467 = sbr.rel (%p464) target = $region68
      $region67: #{encoder_cnn_forward.3} parent=5 // pred_region
        %s468 = ssub.s32 %s21, 1
        %s469 = smul.u32 4, %s31
        %p470 = scmp.lt.s32.totalorder %s30, 1
        %s471 = scalar_select %p470, %s30, 1
        %p472 = scmp.lt.s32.totalorder %s469, 3
        %s473 = scalar_select %p472, %s469, 3
        %s474 = smul.addr %s471, 4
        %s475 = sadd.s32 %s473, %s474
        %s476 = smul.addr %s475, 4
        %s477 = scalar_lea.vmem %s0, %s476
        %p478 = pneg %p61
        %p479 = pneg %p58
        %s480 = smul.u32 %s31, 4
        %s481 = ssub.s32 %s480, 1
        %p482 = scmp.gt.s32.totalorder %s481, 0
        %s483 = scalar_select %p482, %s481, 0
        %p484 = scmp.lt.s32.totalorder %s30, 1
        %s485 = scalar_select %p484, %s30, 1
        %p486 = scmp.lt.s32.totalorder %s483, 3
        %s487 = scalar_select %p486, %s483, 3
        %s488 = smul.addr %s485, 4
        %s489 = sadd.s32 %s487, %s488
        %s490 = smul.addr %s489, 4
        %s491 = scalar_lea.vmem %s1, %s490
        %p492 = pneg %p97
        %p493 = pneg %p94
        %s494 = sadd.s32 %s31, 1
        %s495 = smul.u32 %s494, 4
        %p496 = scmp.lt.s32.totalorder %s495, 3
        %s497 = scalar_select %p496, %s495, 3
        %p498 = scmp.lt.s32.totalorder %s30, 1
        %s499 = scalar_select %p498, %s30, 1
        %p500 = scmp.lt.s32.totalorder %s497, 3
        %s501 = scalar_select %p500, %s497, 3
        %s502 = smul.addr %s499, 4
        %s503 = sadd.s32 %s501, %s502
        %s504 = smul.addr %s503, 4
        %s505 = scalar_lea.vmem %s2, %s504
        %p506 = pneg %p133
        %p507 = pneg %p130
        %s508 = smul.u32 4, %s31
        %p509 = scmp.lt.s32.totalorder %s30, 1
        %s510 = scalar_select %p509, %s30, 1
        %p511 = scmp.lt.s32.totalorder %s508, 3
        %s512 = scalar_select %p511, %s508, 3
        %s513 = smul.addr %s510, 4
        %s514 = sadd.s32 %s512, %s513
        %s515 = smul.addr %s514, 4
        %s516 = scalar_lea.vmem %s3, %s515
        %p517 = pneg %p161
        %p518 = pneg %p158
        %p519 = pneg %p182
        %p520 = pneg %p179
        %p521 = pneg %p203
        %p522 = pneg %p200
        %p523 = pneg %p224
        %p524 = pneg %p221
        %p525 = pneg %p245
        %p526 = pneg %p242
        %p527 = pneg %p266
        %p528 = pneg %p263
        %p529 = pneg %p287
        %p530 = pneg %p284
        %p531 = pneg %p308
        %p532 = pneg %p305
        %p533 = pneg %p329
        %p534 = pneg %p326
        %p535 = pneg %p355
        %p536 = pneg %p352
        %s537 = sand.u32 %s342, 1
        %s538 = scalar_lea.sflag [#allocation4], %s537
        %s539 = sand.u32 %s342, 1
        %s540 = scalar_lea.vmem [#allocation3], %s539
        %s541 = smul.u32 4, %s31
        %p542 = scmp.lt.s32.totalorder %s30, 1
        %s543 = scalar_select %p542, %s30, 1
        %p544 = scmp.lt.s32.totalorder %s541, 3
        %s545 = scalar_select %p544, %s541, 3
        %s546 = smul.addr %s543, 4
        %s547 = sadd.s32 %s545, %s546
        %s548 = smul.addr %s547, 4
        %s549 = scalar_lea.vmem %s0, %s548
        %s550 = smul.u32 4, %s31
        %s551 = smul.u32 %s31, 4
        %s552 = ssub.s32 %s551, 1
        %p553 = scmp.gt.s32.totalorder %s552, 0
        %s554 = scalar_select %p553, %s552, 0
        %p555 = scmp.lt.s32.totalorder %s30, 1
        %s556 = scalar_select %p555, %s30, 1
        %p557 = scmp.lt.s32.totalorder %s554, 3
        %s558 = scalar_select %p557, %s554, 3
        %s559 = smul.addr %s556, 4
        %s560 = sadd.s32 %s558, %s559
        %s561 = smul.addr %s560, 4
        %s562 = scalar_lea.vmem %s1, %s561
        %s563 = smul.u32 %s31, 4
        %s564 = ssub.s32 %s563, 1
        %p565 = scmp.gt.s32.totalorder %s564, 0
        %s566 = scalar_select %p565, %s564, 0
        %s567 = sadd.s32 %s31, 1
        %s568 = smul.u32 %s567, 4
        %p569 = scmp.lt.s32.totalorder %s568, 3
        %s570 = scalar_select %p569, %s568, 3
        %p571 = scmp.lt.s32.totalorder %s30, 1
        %s572 = scalar_select %p571, %s30, 1
        %p573 = scmp.lt.s32.totalorder %s570, 3
        %s574 = scalar_select %p573, %s570, 3
        %s575 = smul.addr %s572, 4
        %s576 = sadd.s32 %s574, %s575
        %s577 = smul.addr %s576, 4
        %s578 = scalar_lea.vmem %s2, %s577
        %s579 = sadd.s32 %s31, 1
        %s580 = smul.u32 %s579, 4
        %p581 = scmp.lt.s32.totalorder %s580, 3
        %s582 = scalar_select %p581, %s580, 3
        %s583 = smul.u32 4, %s31
        %p584 = scmp.lt.s32.totalorder %s30, 1
        %s585 = scalar_select %p584, %s30, 1
        %p586 = scmp.lt.s32.totalorder %s583, 3
        %s587 = scalar_select %p586, %s583, 3
        %s588 = smul.addr %s585, 4
        %s589 = sadd.s32 %s587, %s588
        %s590 = smul.addr %s589, 4
        %s591 = scalar_lea.vmem %s3, %s590
        %s592 = smul.u32 4, %s31
        %p594 = scmp.eq.s32.totalorder %s31, 0
        // Predicated region
        $region69: #{encoder_cnn_forward.3} parent=67 // pred_check
          %p595 = pneg %p594
        $region70: #{encoder_cnn_forward.3} parent=67 // pred_check_branch
          %597 = sbr.rel (%p595) target = $region72
        $region71: #{encoder_cnn_forward.3} parent=67 // pred_region
          %v598 = vlaneseq
          %vm599 = vcmp.ge.s32.totalorder %v598, 0
          %vm600 = vcmp.lt.s32.totalorder %v598, 256
          %vm601 = vmand %vm599, %vm600
          %602 = vst.msk [vmem:[#allocation2] sm:$0x3] %vm601, 0.0
        $region72: #{encoder_cnn_forward.3} parent=67 // pred_fallthru
          _
        %v603 = vld [vmem:[%s562] sm:$0xf]
        %s604 = scalar_select %p594, 1, 0
        %v605 = vstv %s604
        %vm606 = vcmp.eq.s32.totalorder %v605, 1
        %v607 = vsel %vm606, 0, %v603
        %v608 = vld [vmem:[%s578] sm:$0xf]
        %v609 = vsel %vm606, 0, %v608
        %v610 = vld [vmem:[%s549] sm:$0xf]
        %v611 = vld [vmem:[%s549 + $0x4] sm:$0xf]
        %v612 = vld [vmem:[%s549 + $0x8] sm:$0xf]
        %v613 = vld [vmem:[%s549 + $0xc] sm:$0xf]
        %v615 = vunpack.c.l.b16 %v607
        %v616 = vpack.c.b16 %v615, %v615
        %v618 = vshrl.u32 %v616, 16
        %v620 = vrot.slane %v618, 7
        %v621 = vshll.u32 %v616, 16
        %v623 = vor.u32 %v620, %v621
        %v629 = vunpack.c.l.b16 %v610
        %v630 = vunpack.c.l.b16 %v611
        %v631 = vunpack.c.l.b16 %v612
        %v632 = vunpack.c.l.b16 %v613
        %v633 = vpack.c.b16 %v630, %v629
        %v634 = vpack.c.b16 %v632, %v631
        %vm635 = vsmask.f32 4352
        %v637 = vshrl.u32 %v633, 16
        %v639 = vrot.slane %v637, 3
        %v640 = vshll.u32 %v633, 16
        %v642 = vrot.slane %v640, 4
        %v643 = vor.u32 %v639, %v642
        %v645 = vshrl.u32 %v634, 16
        %v647 = vrot.slane %v645, 3
        %v648 = vshll.u32 %v634, 16
        %v650 = vrot.slane %v648, 4
        %v651 = vor.u32 %v647, %v650
        %v652 = vsel %vm635, %v643, %v651
        %v657 = vunpack.c.l.b16 %v609
        %v658 = vpack.c.b16 %v657, %v657
        %v660 = vshrl.u32 %v658, 16
        %v662 = vrot.slane %v660, 3
        %v663 = vshll.u32 %v658, 16
        %v665 = vrot.slane %v663, 4
        %v666 = vor.u32 %v662, %v665
        %vm669 = vcmask 1040384
        %vm670 = vsmask.f32 256
        %vm671 = vmand %vm669, %vm670
        %v672 = vsel %vm671, 0, %v623
        %vm673 = vcmask 1044480
        %vm674 = vmand %vm673, %vm635
        %v675 = vsel %vm674, %v672, %v643
        %v676 = vsel %vm674, %v651, %v666
        %v677 = vsel %vm671, %v662, 0
        %v678 = vld [vmem:[%s4] sm:$0xf]
        %v679 = vld [vmem:[%s4 + $0x4] sm:$0xf]
        %v680 = vld [vmem:[%s4 + $0x8] sm:$0xf]
        %v681 = vld [vmem:[%s4 + $0xc] sm:$0xf]
        %v682 = vld [vmem:[%s4 + $0x10] sm:$0xf]
        %v683 = vld [vmem:[%s4 + $0x14] sm:$0xf]
        %v684 = vld [vmem:[%s4 + $0x18] sm:$0xf]
        %v685 = vld [vmem:[%s4 + $0x1c] sm:$0xf]
        %v686 = vld [vmem:[%s4 + $0x20] sm:$0xf]
        %v687 = vld [vmem:[%s4 + $0x24] sm:$0xf]
        %v688 = vld [vmem:[%s4 + $0x28] sm:$0xf]
        %v689 = vld [vmem:[%s4 + $0x2c] sm:$0xf]
        %v690 = vld [vmem:[%s4 + $0x30] sm:$0xf]
        %v691 = vld [vmem:[%s4 + $0x34] sm:$0xf]
        %v692 = vld [vmem:[%s4 + $0x38] sm:$0xf]
        %v693 = vld [vmem:[%s4 + $0x3c] sm:$0xf]
        %s694 = scalar_lea.vmem %s4, 64
        %v695 = vld [vmem:[%s694] sm:$0xf]
        %v696 = vld [vmem:[%s694 + $0x4] sm:$0xf]
        %v697 = vld [vmem:[%s694 + $0x8] sm:$0xf]
        %v698 = vld [vmem:[%s694 + $0xc] sm:$0xf]
        %v699 = vld [vmem:[%s694 + $0x10] sm:$0xf]
        %v700 = vld [vmem:[%s694 + $0x14] sm:$0xf]
        %v701 = vld [vmem:[%s694 + $0x18] sm:$0xf]
        %v702 = vld [vmem:[%s694 + $0x1c] sm:$0xf]
        %v703 = vld [vmem:[%s694 + $0x20] sm:$0xf]
        %v704 = vld [vmem:[%s694 + $0x24] sm:$0xf]
        %v705 = vld [vmem:[%s694 + $0x28] sm:$0xf]
        %v706 = vld [vmem:[%s694 + $0x2c] sm:$0xf]
        %v707 = vld [vmem:[%s694 + $0x30] sm:$0xf]
        %v708 = vld [vmem:[%s694 + $0x34] sm:$0xf]
        %v709 = vld [vmem:[%s694 + $0x38] sm:$0xf]
        %v710 = vld [vmem:[%s694 + $0x3c] sm:$0xf]
        %vm711 = vsmask.f32 7424
        %v713 = vshrl.u32 %v675, 16
        %v715 = vshll.u32 %v675, 16
        %v717 = vrot.slane %v715, 1
        %v718 = vor.u32 %v713, %v717
        %v720 = vshll.u32 %v652, 16
        %v722 = vrot.slane %v720, 1
        %v723 = vsel %vm711, %v718, %v722
        %v724 = vshrl.u32 %v652, 16
        %v726 = vor.u32 %v724, %v722
        %v728 = vshll.u32 %v676, 16
        %v730 = vrot.slane %v728, 1
        %v731 = vsel %vm711, %v726, %v730
        %v750 = vunpack.c.l.b16 %v695
        %v751 = vunpack.c.l.b16 %v696
        %v752 = vunpack.c.l.b16 %v697
        %v753 = vunpack.c.l.b16 %v698
        %v754 = vunpack.c.l.b16 %v699
        %v755 = vunpack.c.l.b16 %v700
        %v756 = vunpack.c.l.b16 %v701
        %v757 = vunpack.c.l.b16 %v702
        %v758 = vunpack.c.l.b16 %v703
        %v759 = vunpack.c.l.b16 %v704
        %v760 = vunpack.c.l.b16 %v705
        %v761 = vunpack.c.l.b16 %v706
        %v762 = vunpack.c.l.b16 %v707
        %v763 = vunpack.c.l.b16 %v708
        %v764 = vunpack.c.l.b16 %v709
        %v765 = vunpack.c.l.b16 %v710
        %v766 = vpack.c.b16 %v751, %v750
        %v767 = vpack.c.b16 %v753, %v752
        %v768 = vpack.c.b16 %v755, %v754
        %v769 = vpack.c.b16 %v757, %v756
        %v770 = vpack.c.b16 %v759, %v758
        %v771 = vpack.c.b16 %v761, %v760
        %v772 = vpack.c.b16 %v763, %v762
        %v773 = vpack.c.b16 %v765, %v764
        %782 = vmatprep.subr.bf16.mxu0 0
        %783 = vmatpush1.bf16.msra.mxu0 %v773
        %784 = vmatprep.subr.bf16.mxu0 0
        %785 = vmatpush1.bf16.msra.mxu0 %v772
        %786 = vmatprep.subr.bf16.mxu0 0
        %787 = vmatpush1.bf16.msra.mxu0 %v771
        %788 = vmatprep.subr.bf16.mxu0 0
        %789 = vmatpush1.bf16.msra.mxu0 %v770
        %790 = vmatprep.subr.bf16.mxu0 0
        %791 = vmatpush1.bf16.msra.mxu0 %v769
        %792 = vmatprep.subr.bf16.mxu0 0
        %793 = vmatpush1.bf16.msra.mxu0 %v768
        %794 = vmatprep.subr.bf16.mxu0 0
        %795 = vmatpush1.bf16.msra.mxu0 %v767
        %796 = vmatprep.subr.bf16.mxu0 0
        %797 = vmatpush1.bf16.msra.mxu0 %v766
        %798 = vmatprep.subr.bf16.mxu0 0
        %799 = vmatpush2.bf16.msra.mxu0 0
        %800 = vmatprep.subr.bf16.mxu0 0
        %801 = vmatpush2.bf16.msra.mxu0 0
        %802 = vmatprep.subr.bf16.mxu0 0
        %803 = vmatpush2.bf16.msra.mxu0 0
        %804 = vmatprep.subr.bf16.mxu0 0
        %805 = vmatpush2.bf16.msra.mxu0 0
        %806 = vmatprep.subr.bf16.mxu0 0
        %807 = vmatpush2.bf16.msra.mxu0 0
        %808 = vmatprep.subr.bf16.mxu0 0
        %809 = vmatpush2.bf16.msra.mxu0 0
        %810 = vmatprep.subr.bf16.mxu0 0
        %811 = vmatpush2.bf16.msra.mxu0 0
        %812 = vmatprep.subr.bf16.mxu0 0
        %813 = vmatpush2.bf16.msra.mxu0 0
        %814 = vmatprep.mubr.bf16.mxu0 0
        %815 = vmatmul.mubr.bf16.gmra.mxu0 %v723
        %v816 = vpop.f32.mrf.mxu0
        %v817 = vadd.f32 0.0, %v816
        %v818 = vpop.f32.mrf.mxu0
        %v819 = vpop.f32.mrf.mxu0
        %v820 = vadd.f32 0.0, %v819
        %v821 = vpop.f32.mrf.mxu0
        %822 = vmatprep.mubr.bf16.mxu0 0
        %823 = vmatmul.mubr.bf16.gmra.mxu0 %v731
        %v824 = vpop.f32.mrf.mxu0
        %v825 = vadd.f32 0.0, %v824
        %v826 = vpop.f32.mrf.mxu0
        %v827 = vpop.f32.mrf.mxu0
        %v828 = vadd.f32 0.0, %v827
        %v829 = vpop.f32.mrf.mxu0
        %830 = vdwg.mxu0
        %v847 = vunpack.c.l.b16 %v678
        %v848 = vunpack.c.l.b16 %v679
        %v849 = vunpack.c.l.b16 %v680
        %v850 = vunpack.c.l.b16 %v681
        %v851 = vunpack.c.l.b16 %v682
        %v852 = vunpack.c.l.b16 %v683
        %v853 = vunpack.c.l.b16 %v684
        %v854 = vunpack.c.l.b16 %v685
        %v855 = vunpack.c.l.b16 %v686
        %v856 = vunpack.c.l.b16 %v687
        %v857 = vunpack.c.l.b16 %v688
        %v858 = vunpack.c.l.b16 %v689
        %v859 = vunpack.c.l.b16 %v690
        %v860 = vunpack.c.l.b16 %v691
        %v861 = vunpack.c.l.b16 %v692
        %v862 = vunpack.c.l.b16 %v693
        %v863 = vpack.c.b16 %v848, %v847
        %v864 = vpack.c.b16 %v850, %v849
        %v865 = vpack.c.b16 %v852, %v851
        %v866 = vpack.c.b16 %v854, %v853
        %v867 = vpack.c.b16 %v856, %v855
        %v868 = vpack.c.b16 %v858, %v857
        %v869 = vpack.c.b16 %v860, %v859
        %v870 = vpack.c.b16 %v862, %v861
        %879 = vmatprep.subr.bf16.mxu0 0
        %880 = vmatpush1.bf16.msra.mxu0 %v870
        %881 = vmatprep.subr.bf16.mxu0 0
        %882 = vmatpush1.bf16.msra.mxu0 %v869
        %883 = vmatprep.subr.bf16.mxu0 0
        %884 = vmatpush1.bf16.msra.mxu0 %v868
        %885 = vmatprep.subr.bf16.mxu0 0
        %886 = vmatpush1.bf16.msra.mxu0 %v867
        %887 = vmatprep.subr.bf16.mxu0 0
        %888 = vmatpush1.bf16.msra.mxu0 %v866
        %889 = vmatprep.subr.bf16.mxu0 0
        %890 = vmatpush1.bf16.msra.mxu0 %v865
        %891 = vmatprep.subr.bf16.mxu0 0
        %892 = vmatpush1.bf16.msra.mxu0 %v864
        %893 = vmatprep.subr.bf16.mxu0 0
        %894 = vmatpush1.bf16.msra.mxu0 %v863
        %895 = vmatprep.subr.bf16.mxu0 0
        %896 = vmatpush2.bf16.msra.mxu0 0
        %897 = vmatprep.subr.bf16.mxu0 0
        %898 = vmatpush2.bf16.msra.mxu0 0
        %899 = vmatprep.subr.bf16.mxu0 0
        %900 = vmatpush2.bf16.msra.mxu0 0
        %901 = vmatprep.subr.bf16.mxu0 0
        %902 = vmatpush2.bf16.msra.mxu0 0
        %903 = vmatprep.subr.bf16.mxu0 0
        %904 = vmatpush2.bf16.msra.mxu0 0
        %905 = vmatprep.subr.bf16.mxu0 0
        %906 = vmatpush2.bf16.msra.mxu0 0
        %907 = vmatprep.subr.bf16.mxu0 0
        %908 = vmatpush2.bf16.msra.mxu0 0
        %909 = vmatprep.subr.bf16.mxu0 0
        %910 = vmatpush2.bf16.msra.mxu0 0
        %911 = vmatprep.mubr.bf16.mxu0 0
        %912 = vmatmul.mubr.bf16.gmra.mxu0 %v675
        %v913 = vpop.f32.mrf.mxu0
        %v914 = vadd.f32 %v817, %v913
        %v915 = vpop.f32.mrf.mxu0
        %v916 = vpop.f32.mrf.mxu0
        %v917 = vadd.f32 %v820, %v916
        %v918 = vpop.f32.mrf.mxu0
        %919 = vmatprep.mubr.bf16.mxu0 0
        %920 = vmatmul.mubr.bf16.gmra.mxu0 %v652
        %v921 = vpop.f32.mrf.mxu0
        %v922 = vadd.f32 %v825, %v921
        %v923 = vpop.f32.mrf.mxu0
        %v924 = vpop.f32.mrf.mxu0
        %v925 = vadd.f32 %v828, %v924
        %v926 = vpop.f32.mrf.mxu0
        %927 = vdwg.mxu0
        %s928 = scalar_lea.vmem %s4, 128
        %v929 = vld [vmem:[%s928] sm:$0xf]
        %v930 = vld [vmem:[%s928 + $0x4] sm:$0xf]
        %v931 = vld [vmem:[%s928 + $0x8] sm:$0xf]
        %v932 = vld [vmem:[%s928 + $0xc] sm:$0xf]
        %v933 = vld [vmem:[%s928 + $0x10] sm:$0xf]
        %v934 = vld [vmem:[%s928 + $0x14] sm:$0xf]
        %v935 = vld [vmem:[%s928 + $0x18] sm:$0xf]
        %v936 = vld [vmem:[%s928 + $0x1c] sm:$0xf]
        %v937 = vld [vmem:[%s928 + $0x20] sm:$0xf]
        %v938 = vld [vmem:[%s928 + $0x24] sm:$0xf]
        %v939 = vld [vmem:[%s928 + $0x28] sm:$0xf]
        %v940 = vld [vmem:[%s928 + $0x2c] sm:$0xf]
        %v941 = vld [vmem:[%s928 + $0x30] sm:$0xf]
        %v942 = vld [vmem:[%s928 + $0x34] sm:$0xf]
        %v943 = vld [vmem:[%s928 + $0x38] sm:$0xf]
        %v944 = vld [vmem:[%s928 + $0x3c] sm:$0xf]
        %vm947 = vcmask 1046528
        %v948 = vrot.slane %v675, 1
        %v949 = vrot.slane %v652, 1
        %v950 = vsel %vm947, %v948, %v949
        %v951 = vrot.slane %v676, 1
        %v952 = vsel %vm947, %v949, %v951
        %v971 = vunpack.c.l.b16 %v929
        %v972 = vunpack.c.l.b16 %v930
        %v973 = vunpack.c.l.b16 %v931
        %v974 = vunpack.c.l.b16 %v932
        %v975 = vunpack.c.l.b16 %v933
        %v976 = vunpack.c.l.b16 %v934
        %v977 = vunpack.c.l.b16 %v935
        %v978 = vunpack.c.l.b16 %v936
        %v979 = vunpack.c.l.b16 %v937
        %v980 = vunpack.c.l.b16 %v938
        %v981 = vunpack.c.l.b16 %v939
        %v982 = vunpack.c.l.b16 %v940
        %v983 = vunpack.c.l.b16 %v941
        %v984 = vunpack.c.l.b16 %v942
        %v985 = vunpack.c.l.b16 %v943
        %v986 = vunpack.c.l.b16 %v944
        %v987 = vpack.c.b16 %v972, %v971
        %v988 = vpack.c.b16 %v974, %v973
        %v989 = vpack.c.b16 %v976, %v975
        %v990 = vpack.c.b16 %v978, %v977
        %v991 = vpack.c.b16 %v980, %v979
        %v992 = vpack.c.b16 %v982, %v981
        %v993 = vpack.c.b16 %v984, %v983
        %v994 = vpack.c.b16 %v986, %v985
        %1003 = vmatprep.subr.bf16.mxu0 0
        %1004 = vmatpush1.bf16.msra.mxu0 %v994
        %1005 = vmatprep.subr.bf16.mxu0 0
        %1006 = vmatpush1.bf16.msra.mxu0 %v993
        %1007 = vmatprep.subr.bf16.mxu0 0
        %1008 = vmatpush1.bf16.msra.mxu0 %v992
        %1009 = vmatprep.subr.bf16.mxu0 0
        %1010 = vmatpush1.bf16.msra.mxu0 %v991
        %1011 = vmatprep.subr.bf16.mxu0 0
        %1012 = vmatpush1.bf16.msra.mxu0 %v990
        %1013 = vmatprep.subr.bf16.mxu0 0
        %1014 = vmatpush1.bf16.msra.mxu0 %v989
        %1015 = vmatprep.subr.bf16.mxu0 0
        %1016 = vmatpush1.bf16.msra.mxu0 %v988
        %1017 = vmatprep.subr.bf16.mxu0 0
        %1018 = vmatpush1.bf16.msra.mxu0 %v987
        %1019 = vmatprep.subr.bf16.mxu0 0
        %1020 = vmatpush2.bf16.msra.mxu0 0
        %1021 = vmatprep.subr.bf16.mxu0 0
        %1022 = vmatpush2.bf16.msra.mxu0 0
        %1023 = vmatprep.subr.bf16.mxu0 0
        %1024 = vmatpush2.bf16.msra.mxu0 0
        %1025 = vmatprep.subr.bf16.mxu0 0
        %1026 = vmatpush2.bf16.msra.mxu0 0
        %1027 = vmatprep.subr.bf16.mxu0 0
        %1028 = vmatpush2.bf16.msra.mxu0 0
        %1029 = vmatprep.subr.bf16.mxu0 0
        %1030 = vmatpush2.bf16.msra.mxu0 0
        %1031 = vmatprep.subr.bf16.mxu0 0
        %1032 = vmatpush2.bf16.msra.mxu0 0
        %1033 = vmatprep.subr.bf16.mxu0 0
        %1034 = vmatpush2.bf16.msra.mxu0 0
        %1035 = vmatprep.mubr.bf16.mxu0 0
        %1036 = vmatmul.mubr.bf16.gmra.mxu0 %v950
        %v1037 = vpop.f32.mrf.mxu0
        %v1038 = vadd.f32 0.0, %v1037
        %v1039 = vpop.f32.mrf.mxu0
        %v1040 = vpop.f32.mrf.mxu0
        %v1041 = vadd.f32 0.0, %v1040
        %v1042 = vpop.f32.mrf.mxu0
        %1043 = vmatprep.mubr.bf16.mxu0 0
        %1044 = vmatmul.mubr.bf16.gmra.mxu0 %v952
        %v1045 = vpop.f32.mrf.mxu0
        %v1046 = vadd.f32 0.0, %v1045
        %v1047 = vpop.f32.mrf.mxu0
        %v1048 = vpop.f32.mrf.mxu0
        %v1049 = vadd.f32 0.0, %v1048
        %v1050 = vpop.f32.mrf.mxu0
        %1051 = vdwg.mxu0
        %v1052 = vadd.f32 %v914, %v1038
        %v1053 = vadd.f32 %v917, %v1041
        %v1054 = vadd.f32 %v922, %v1046
        %v1055 = vadd.f32 %v925, %v1049
        %s1056 = scalar_lea.vmem %s4, 192
        %v1057 = vld [vmem:[%s1056] sm:$0xf]
        %v1058 = vld [vmem:[%s1056 + $0x4] sm:$0xf]
        %v1059 = vld [vmem:[%s1056 + $0x8] sm:$0xf]
        %v1060 = vld [vmem:[%s1056 + $0xc] sm:$0xf]
        %v1061 = vld [vmem:[%s1056 + $0x10] sm:$0xf]
        %v1062 = vld [vmem:[%s1056 + $0x14] sm:$0xf]
        %v1063 = vld [vmem:[%s1056 + $0x18] sm:$0xf]
        %v1064 = vld [vmem:[%s1056 + $0x1c] sm:$0xf]
        %v1065 = vld [vmem:[%s1056 + $0x20] sm:$0xf]
        %v1066 = vld [vmem:[%s1056 + $0x24] sm:$0xf]
        %v1067 = vld [vmem:[%s1056 + $0x28] sm:$0xf]
        %v1068 = vld [vmem:[%s1056 + $0x2c] sm:$0xf]
        %v1069 = vld [vmem:[%s1056 + $0x30] sm:$0xf]
        %v1070 = vld [vmem:[%s1056 + $0x34] sm:$0xf]
        %v1071 = vld [vmem:[%s1056 + $0x38] sm:$0xf]
        %v1072 = vld [vmem:[%s1056 + $0x3c] sm:$0xf]
        %vm1073 = vcmask 1043456
        %v1074 = vrot.slane %v675, 4
        %v1075 = vrot.slane %v652, 4
        %v1076 = vsel %vm1073, %v1074, %v1075
        %v1077 = vrot.slane %v676, 4
        %v1078 = vsel %vm1073, %v1075, %v1077
        %v1097 = vunpack.c.l.b16 %v1057
        %v1098 = vunpack.c.l.b16 %v1058
        %v1099 = vunpack.c.l.b16 %v1059
        %v1100 = vunpack.c.l.b16 %v1060
        %v1101 = vunpack.c.l.b16 %v1061
        %v1102 = vunpack.c.l.b16 %v1062
        %v1103 = vunpack.c.l.b16 %v1063
        %v1104 = vunpack.c.l.b16 %v1064
        %v1105 = vunpack.c.l.b16 %v1065
        %v1106 = vunpack.c.l.b16 %v1066
        %v1107 = vunpack.c.l.b16 %v1067
        %v1108 = vunpack.c.l.b16 %v1068
        %v1109 = vunpack.c.l.b16 %v1069
        %v1110 = vunpack.c.l.b16 %v1070
        %v1111 = vunpack.c.l.b16 %v1071
        %v1112 = vunpack.c.l.b16 %v1072
        %v1113 = vpack.c.b16 %v1098, %v1097
        %v1114 = vpack.c.b16 %v1100, %v1099
        %v1115 = vpack.c.b16 %v1102, %v1101
        %v1116 = vpack.c.b16 %v1104, %v1103
        %v1117 = vpack.c.b16 %v1106, %v1105
        %v1118 = vpack.c.b16 %v1108, %v1107
        %v1119 = vpack.c.b16 %v1110, %v1109
        %v1120 = vpack.c.b16 %v1112, %v1111
        %1129 = vmatprep.subr.bf16.mxu0 0
        %1130 = vmatpush1.bf16.msra.mxu0 %v1120
        %1131 = vmatprep.subr.bf16.mxu0 0
        %1132 = vmatpush1.bf16.msra.mxu0 %v1119
        %1133 = vmatprep.subr.bf16.mxu0 0
        %1134 = vmatpush1.bf16.msra.mxu0 %v1118
        %1135 = vmatprep.subr.bf16.mxu0 0
        %1136 = vmatpush1.bf16.msra.mxu0 %v1117
        %1137 = vmatprep.subr.bf16.mxu0 0
        %1138 = vmatpush1.bf16.msra.mxu0 %v1116
        %1139 = vmatprep.subr.bf16.mxu0 0
        %1140 = vmatpush1.bf16.msra.mxu0 %v1115
        %1141 = vmatprep.subr.bf16.mxu0 0
        %1142 = vmatpush1.bf16.msra.mxu0 %v1114
        %1143 = vmatprep.subr.bf16.mxu0 0
        %1144 = vmatpush1.bf16.msra.mxu0 %v1113
        %1145 = vmatprep.subr.bf16.mxu0 0
        %1146 = vmatpush2.bf16.msra.mxu0 0
        %1147 = vmatprep.subr.bf16.mxu0 0
        %1148 = vmatpush2.bf16.msra.mxu0 0
        %1149 = vmatprep.subr.bf16.mxu0 0
        %1150 = vmatpush2.bf16.msra.mxu0 0
        %1151 = vmatprep.subr.bf16.mxu0 0
        %1152 = vmatpush2.bf16.msra.mxu0 0
        %1153 = vmatprep.subr.bf16.mxu0 0
        %1154 = vmatpush2.bf16.msra.mxu0 0
        %1155 = vmatprep.subr.bf16.mxu0 0
        %1156 = vmatpush2.bf16.msra.mxu0 0
        %1157 = vmatprep.subr.bf16.mxu0 0
        %1158 = vmatpush2.bf16.msra.mxu0 0
        %1159 = vmatprep.subr.bf16.mxu0 0
        %1160 = vmatpush2.bf16.msra.mxu0 0
        %1161 = vmatprep.mubr.bf16.mxu0 0
        %1162 = vmatmul.mubr.bf16.gmra.mxu0 %v1076
        %v1163 = vpop.f32.mrf.mxu0
        %v1164 = vadd.f32 0.0, %v1163
        %v1165 = vpop.f32.mrf.mxu0
        %v1166 = vpop.f32.mrf.mxu0
        %v1167 = vadd.f32 0.0, %v1166
        %v1168 = vpop.f32.mrf.mxu0
        %1169 = vmatprep.mubr.bf16.mxu0 0
        %1170 = vmatmul.mubr.bf16.gmra.mxu0 %v1078
        %v1171 = vpop.f32.mrf.mxu0
        %v1172 = vadd.f32 0.0, %v1171
        %v1173 = vpop.f32.mrf.mxu0
        %v1174 = vpop.f32.mrf.mxu0
        %v1175 = vadd.f32 0.0, %v1174
        %v1176 = vpop.f32.mrf.mxu0
        %1177 = vdwg.mxu0
        %v1178 = vadd.f32 %v1052, %v1164
        %v1179 = vadd.f32 %v1053, %v1167
        %v1180 = vadd.f32 %v1054, %v1172
        %v1181 = vadd.f32 %v1055, %v1175
        %s1182 = scalar_lea.vmem %s4, 256
        %v1183 = vld [vmem:[%s1182] sm:$0xf]
        %v1184 = vld [vmem:[%s1182 + $0x4] sm:$0xf]
        %v1185 = vld [vmem:[%s1182 + $0x8] sm:$0xf]
        %v1186 = vld [vmem:[%s1182 + $0xc] sm:$0xf]
        %v1187 = vld [vmem:[%s1182 + $0x10] sm:$0xf]
        %v1188 = vld [vmem:[%s1182 + $0x14] sm:$0xf]
        %v1189 = vld [vmem:[%s1182 + $0x18] sm:$0xf]
        %v1190 = vld [vmem:[%s1182 + $0x1c] sm:$0xf]
        %v1191 = vld [vmem:[%s1182 + $0x20] sm:$0xf]
        %v1192 = vld [vmem:[%s1182 + $0x24] sm:$0xf]
        %v1193 = vld [vmem:[%s1182 + $0x28] sm:$0xf]
        %v1194 = vld [vmem:[%s1182 + $0x2c] sm:$0xf]
        %v1195 = vld [vmem:[%s1182 + $0x30] sm:$0xf]
        %v1196 = vld [vmem:[%s1182 + $0x34] sm:$0xf]
        %v1197 = vld [vmem:[%s1182 + $0x38] sm:$0xf]
        %v1198 = vld [vmem:[%s1182 + $0x3c] sm:$0xf]
        %vm1199 = vsmask.f32 3328
        %v1200 = vrot.slane %v713, 4
        %v1201 = vrot.slane %v715, 5
        %v1202 = vor.u32 %v1200, %v1201
        %v1203 = vrot.slane %v724, 4
        %v1204 = vrot.slane %v720, 5
        %v1205 = vor.u32 %v1203, %v1204
        %v1206 = vsel %vm1199, %v1202, %v1205
        %v1207 = vshrl.u32 %v676, 16
        %v1209 = vrot.slane %v1207, 4
        %v1210 = vrot.slane %v728, 5
        %v1211 = vor.u32 %v1209, %v1210
        %v1212 = vsel %vm1199, %v1205, %v1211
        %v1231 = vunpack.c.l.b16 %v1183
        %v1232 = vunpack.c.l.b16 %v1184
        %v1233 = vunpack.c.l.b16 %v1185
        %v1234 = vunpack.c.l.b16 %v1186
        %v1235 = vunpack.c.l.b16 %v1187
        %v1236 = vunpack.c.l.b16 %v1188
        %v1237 = vunpack.c.l.b16 %v1189
        %v1238 = vunpack.c.l.b16 %v1190
        %v1239 = vunpack.c.l.b16 %v1191
        %v1240 = vunpack.c.l.b16 %v1192
        %v1241 = vunpack.c.l.b16 %v1193
        %v1242 = vunpack.c.l.b16 %v1194
        %v1243 = vunpack.c.l.b16 %v1195
        %v1244 = vunpack.c.l.b16 %v1196
        %v1245 = vunpack.c.l.b16 %v1197
        %v1246 = vunpack.c.l.b16 %v1198
        %v1247 = vpack.c.b16 %v1232, %v1231
        %v1248 = vpack.c.b16 %v1234, %v1233
        %v1249 = vpack.c.b16 %v1236, %v1235
        %v1250 = vpack.c.b16 %v1238, %v1237
        %v1251 = vpack.c.b16 %v1240, %v1239
        %v1252 = vpack.c.b16 %v1242, %v1241
        %v1253 = vpack.c.b16 %v1244, %v1243
        %v1254 = vpack.c.b16 %v1246, %v1245
        %1263 = vmatprep.subr.bf16.mxu0 0
        %1264 = vmatpush1.bf16.msra.mxu0 %v1254
        %1265 = vmatprep.subr.bf16.mxu0 0
        %1266 = vmatpush1.bf16.msra.mxu0 %v1253
        %1267 = vmatprep.subr.bf16.mxu0 0
        %1268 = vmatpush1.bf16.msra.mxu0 %v1252
        %1269 = vmatprep.subr.bf16.mxu0 0
        %1270 = vmatpush1.bf16.msra.mxu0 %v1251
        %1271 = vmatprep.subr.bf16.mxu0 0
        %1272 = vmatpush1.bf16.msra.mxu0 %v1250
        %1273 = vmatprep.subr.bf16.mxu0 0
        %1274 = vmatpush1.bf16.msra.mxu0 %v1249
        %1275 = vmatprep.subr.bf16.mxu0 0
        %1276 = vmatpush1.bf16.msra.mxu0 %v1248
        %1277 = vmatprep.subr.bf16.mxu0 0
        %1278 = vmatpush1.bf16.msra.mxu0 %v1247
        %1279 = vmatprep.subr.bf16.mxu0 0
        %1280 = vmatpush2.bf16.msra.mxu0 0
        %1281 = vmatprep.subr.bf16.mxu0 0
        %1282 = vmatpush2.bf16.msra.mxu0 0
        %1283 = vmatprep.subr.bf16.mxu0 0
        %1284 = vmatpush2.bf16.msra.mxu0 0
        %1285 = vmatprep.subr.bf16.mxu0 0
        %1286 = vmatpush2.bf16.msra.mxu0 0
        %1287 = vmatprep.subr.bf16.mxu0 0
        %1288 = vmatpush2.bf16.msra.mxu0 0
        %1289 = vmatprep.subr.bf16.mxu0 0
        %1290 = vmatpush2.bf16.msra.mxu0 0
        %1291 = vmatprep.subr.bf16.mxu0 0
        %1292 = vmatpush2.bf16.msra.mxu0 0
        %1293 = vmatprep.subr.bf16.mxu0 0
        %1294 = vmatpush2.bf16.msra.mxu0 0
        %1295 = vmatprep.mubr.bf16.mxu0 0
        %1296 = vmatmul.mubr.bf16.gmra.mxu0 %v1206
        %v1297 = vpop.f32.mrf.mxu0
        %v1298 = vadd.f32 0.0, %v1297
        %v1299 = vpop.f32.mrf.mxu0
        %v1300 = vpop.f32.mrf.mxu0
        %v1301 = vadd.f32 0.0, %v1300
        %v1302 = vpop.f32.mrf.mxu0
        %1303 = vmatprep.mubr.bf16.mxu0 0
        %1304 = vmatmul.mubr.bf16.gmra.mxu0 %v1212
        %v1305 = vpop.f32.mrf.mxu0
        %v1306 = vadd.f32 0.0, %v1305
        %v1307 = vpop.f32.mrf.mxu0
        %v1308 = vpop.f32.mrf.mxu0
        %v1309 = vadd.f32 0.0, %v1308
        %v1310 = vpop.f32.mrf.mxu0
        %1311 = vdwg.mxu0
        %v1312 = vadd.f32 %v1178, %v1298
        %v1313 = vadd.f32 %v1179, %v1301
        %v1314 = vadd.f32 %v1180, %v1306
        %v1315 = vadd.f32 %v1181, %v1309
        %s1316 = scalar_lea.vmem %s4, 320
        %v1317 = vld [vmem:[%s1316] sm:$0xf]
        %v1318 = vld [vmem:[%s1316 + $0x4] sm:$0xf]
        %v1319 = vld [vmem:[%s1316 + $0x8] sm:$0xf]
        %v1320 = vld [vmem:[%s1316 + $0xc] sm:$0xf]
        %v1321 = vld [vmem:[%s1316 + $0x10] sm:$0xf]
        %v1322 = vld [vmem:[%s1316 + $0x14] sm:$0xf]
        %v1323 = vld [vmem:[%s1316 + $0x18] sm:$0xf]
        %v1324 = vld [vmem:[%s1316 + $0x1c] sm:$0xf]
        %v1325 = vld [vmem:[%s1316 + $0x20] sm:$0xf]
        %v1326 = vld [vmem:[%s1316 + $0x24] sm:$0xf]
        %v1327 = vld [vmem:[%s1316 + $0x28] sm:$0xf]
        %v1328 = vld [vmem:[%s1316 + $0x2c] sm:$0xf]
        %v1329 = vld [vmem:[%s1316 + $0x30] sm:$0xf]
        %v1330 = vld [vmem:[%s1316 + $0x34] sm:$0xf]
        %v1331 = vld [vmem:[%s1316 + $0x38] sm:$0xf]
        %v1332 = vld [vmem:[%s1316 + $0x3c] sm:$0xf]
        %vm1333 = vcmask 1042432
        %v1334 = vrot.slane %v675, 5
        %v1335 = vrot.slane %v652, 5
        %v1336 = vsel %vm1333, %v1334, %v1335
        %v1337 = vrot.slane %v676, 5
        %v1338 = vsel %vm1333, %v1335, %v1337
        %v1357 = vunpack.c.l.b16 %v1317
        %v1358 = vunpack.c.l.b16 %v1318
        %v1359 = vunpack.c.l.b16 %v1319
        %v1360 = vunpack.c.l.b16 %v1320
        %v1361 = vunpack.c.l.b16 %v1321
        %v1362 = vunpack.c.l.b16 %v1322
        %v1363 = vunpack.c.l.b16 %v1323
        %v1364 = vunpack.c.l.b16 %v1324
        %v1365 = vunpack.c.l.b16 %v1325
        %v1366 = vunpack.c.l.b16 %v1326
        %v1367 = vunpack.c.l.b16 %v1327
        %v1368 = vunpack.c.l.b16 %v1328
        %v1369 = vunpack.c.l.b16 %v1329
        %v1370 = vunpack.c.l.b16 %v1330
        %v1371 = vunpack.c.l.b16 %v1331
        %v1372 = vunpack.c.l.b16 %v1332
        %v1373 = vpack.c.b16 %v1358, %v1357
        %v1374 = vpack.c.b16 %v1360, %v1359
        %v1375 = vpack.c.b16 %v1362, %v1361
        %v1376 = vpack.c.b16 %v1364, %v1363
        %v1377 = vpack.c.b16 %v1366, %v1365
        %v1378 = vpack.c.b16 %v1368, %v1367
        %v1379 = vpack.c.b16 %v1370, %v1369
        %v1380 = vpack.c.b16 %v1372, %v1371
        %1389 = vmatprep.subr.bf16.mxu0 0
        %1390 = vmatpush1.bf16.msra.mxu0 %v1380
        %1391 = vmatprep.subr.bf16.mxu0 0
        %1392 = vmatpush1.bf16.msra.mxu0 %v1379
        %1393 = vmatprep.subr.bf16.mxu0 0
        %1394 = vmatpush1.bf16.msra.mxu0 %v1378
        %1395 = vmatprep.subr.bf16.mxu0 0
        %1396 = vmatpush1.bf16.msra.mxu0 %v1377
        %1397 = vmatprep.subr.bf16.mxu0 0
        %1398 = vmatpush1.bf16.msra.mxu0 %v1376
        %1399 = vmatprep.subr.bf16.mxu0 0
        %1400 = vmatpush1.bf16.msra.mxu0 %v1375
        %1401 = vmatprep.subr.bf16.mxu0 0
        %1402 = vmatpush1.bf16.msra.mxu0 %v1374
        %1403 = vmatprep.subr.bf16.mxu0 0
        %1404 = vmatpush1.bf16.msra.mxu0 %v1373
        %1405 = vmatprep.subr.bf16.mxu0 0
        %1406 = vmatpush2.bf16.msra.mxu0 0
        %1407 = vmatprep.subr.bf16.mxu0 0
        %1408 = vmatpush2.bf16.msra.mxu0 0
        %1409 = vmatprep.subr.bf16.mxu0 0
        %1410 = vmatpush2.bf16.msra.mxu0 0
        %1411 = vmatprep.subr.bf16.mxu0 0
        %1412 = vmatpush2.bf16.msra.mxu0 0
        %1413 = vmatprep.subr.bf16.mxu0 0
        %1414 = vmatpush2.bf16.msra.mxu0 0
        %1415 = vmatprep.subr.bf16.mxu0 0
        %1416 = vmatpush2.bf16.msra.mxu0 0
        %1417 = vmatprep.subr.bf16.mxu0 0
        %1418 = vmatpush2.bf16.msra.mxu0 0
        %1419 = vmatprep.subr.bf16.mxu0 0
        %1420 = vmatpush2.bf16.msra.mxu0 0
        %1421 = vmatprep.mubr.bf16.mxu0 0
        %1422 = vmatmul.mubr.bf16.gmra.mxu0 %v1336
        %v1423 = vpop.f32.mrf.mxu0
        %v1424 = vadd.f32 0.0, %v1423
        %v1425 = vpop.f32.mrf.mxu0
        %v1426 = vpop.f32.mrf.mxu0
        %v1427 = vadd.f32 0.0, %v1426
        %v1428 = vpop.f32.mrf.mxu0
        %1429 = vmatprep.mubr.bf16.mxu0 0
        %1430 = vmatmul.mubr.bf16.gmra.mxu0 %v1338
        %v1431 = vpop.f32.mrf.mxu0
        %v1432 = vadd.f32 0.0, %v1431
        %v1433 = vpop.f32.mrf.mxu0
        %v1434 = vpop.f32.mrf.mxu0
        %v1435 = vadd.f32 0.0, %v1434
        %v1436 = vpop.f32.mrf.mxu0
        %1437 = vdwg.mxu0
        %v1438 = vadd.f32 %v1312, %v1424
        %v1439 = vadd.f32 %v1313, %v1427
        %v1440 = vadd.f32 %v1314, %v1432
        %v1441 = vadd.f32 %v1315, %v1435
        %s1442 = scalar_lea.vmem %s4, 384
        %v1443 = vld [vmem:[%s1442] sm:$0xf]
        %v1444 = vld [vmem:[%s1442 + $0x4] sm:$0xf]
        %v1445 = vld [vmem:[%s1442 + $0x8] sm:$0xf]
        %v1446 = vld [vmem:[%s1442 + $0xc] sm:$0xf]
        %v1447 = vld [vmem:[%s1442 + $0x10] sm:$0xf]
        %v1448 = vld [vmem:[%s1442 + $0x14] sm:$0xf]
        %v1449 = vld [vmem:[%s1442 + $0x18] sm:$0xf]
        %v1450 = vld [vmem:[%s1442 + $0x1c] sm:$0xf]
        %v1451 = vld [vmem:[%s1442 + $0x20] sm:$0xf]
        %v1452 = vld [vmem:[%s1442 + $0x24] sm:$0xf]
        %v1453 = vld [vmem:[%s1442 + $0x28] sm:$0xf]
        %v1454 = vld [vmem:[%s1442 + $0x2c] sm:$0xf]
        %v1455 = vld [vmem:[%s1442 + $0x30] sm:$0xf]
        %v1456 = vld [vmem:[%s1442 + $0x34] sm:$0xf]
        %v1457 = vld [vmem:[%s1442 + $0x38] sm:$0xf]
        %v1458 = vld [vmem:[%s1442 + $0x3c] sm:$0xf]
        %v1475 = vunpack.c.l.b16 %v1443
        %v1476 = vunpack.c.l.b16 %v1444
        %v1477 = vunpack.c.l.b16 %v1445
        %v1478 = vunpack.c.l.b16 %v1446
        %v1479 = vunpack.c.l.b16 %v1447
        %v1480 = vunpack.c.l.b16 %v1448
        %v1481 = vunpack.c.l.b16 %v1449
        %v1482 = vunpack.c.l.b16 %v1450
        %v1483 = vunpack.c.l.b16 %v1451
        %v1484 = vunpack.c.l.b16 %v1452
        %v1485 = vunpack.c.l.b16 %v1453
        %v1486 = vunpack.c.l.b16 %v1454
        %v1487 = vunpack.c.l.b16 %v1455
        %v1488 = vunpack.c.l.b16 %v1456
        %v1489 = vunpack.c.l.b16 %v1457
        %v1490 = vunpack.c.l.b16 %v1458
        %v1491 = vpack.c.b16 %v1476, %v1475
        %v1492 = vpack.c.b16 %v1478, %v1477
        %v1493 = vpack.c.b16 %v1480, %v1479
        %v1494 = vpack.c.b16 %v1482, %v1481
        %v1495 = vpack.c.b16 %v1484, %v1483
        %v1496 = vpack.c.b16 %v1486, %v1485
        %v1497 = vpack.c.b16 %v1488, %v1487
        %v1498 = vpack.c.b16 %v1490, %v1489
        %1507 = vmatprep.subr.bf16.mxu0 0
        %1508 = vmatpush1.bf16.msra.mxu0 %v1498
        %1509 = vmatprep.subr.bf16.mxu0 0
        %1510 = vmatpush1.bf16.msra.mxu0 %v1497
        %1511 = vmatprep.subr.bf16.mxu0 0
        %1512 = vmatpush1.bf16.msra.mxu0 %v1496
        %1513 = vmatprep.subr.bf16.mxu0 0
        %1514 = vmatpush1.bf16.msra.mxu0 %v1495
        %1515 = vmatprep.subr.bf16.mxu0 0
        %1516 = vmatpush1.bf16.msra.mxu0 %v1494
        %1517 = vmatprep.subr.bf16.mxu0 0
        %1518 = vmatpush1.bf16.msra.mxu0 %v1493
        %1519 = vmatprep.subr.bf16.mxu0 0
        %1520 = vmatpush1.bf16.msra.mxu0 %v1492
        %1521 = vmatprep.subr.bf16.mxu0 0
        %1522 = vmatpush1.bf16.msra.mxu0 %v1491
        %1523 = vmatprep.subr.bf16.mxu0 0
        %1524 = vmatpush2.bf16.msra.mxu0 0
        %1525 = vmatprep.subr.bf16.mxu0 0
        %1526 = vmatpush2.bf16.msra.mxu0 0
        %1527 = vmatprep.subr.bf16.mxu0 0
        %1528 = vmatpush2.bf16.msra.mxu0 0
        %1529 = vmatprep.subr.bf16.mxu0 0
        %1530 = vmatpush2.bf16.msra.mxu0 0
        %1531 = vmatprep.subr.bf16.mxu0 0
        %1532 = vmatpush2.bf16.msra.mxu0 0
        %1533 = vmatprep.subr.bf16.mxu0 0
        %1534 = vmatpush2.bf16.msra.mxu0 0
        %1535 = vmatprep.subr.bf16.mxu0 0
        %1536 = vmatpush2.bf16.msra.mxu0 0
        %1537 = vmatprep.subr.bf16.mxu0 0
        %1538 = vmatpush2.bf16.msra.mxu0 0
        %1539 = vmatprep.mubr.bf16.mxu0 0
        %1540 = vmatmul.mubr.bf16.gmra.mxu0 %v652
        %v1541 = vpop.f32.mrf.mxu0
        %v1542 = vadd.f32 0.0, %v1541
        %v1543 = vpop.f32.mrf.mxu0
        %v1544 = vpop.f32.mrf.mxu0
        %v1545 = vadd.f32 0.0, %v1544
        %v1546 = vpop.f32.mrf.mxu0
        %1547 = vmatprep.mubr.bf16.mxu0 0
        %1548 = vmatmul.mubr.bf16.gmra.mxu0 %v676
        %v1549 = vpop.f32.mrf.mxu0
        %v1550 = vadd.f32 0.0, %v1549
        %v1551 = vpop.f32.mrf.mxu0
        %v1552 = vpop.f32.mrf.mxu0
        %v1553 = vadd.f32 0.0, %v1552
        %v1554 = vpop.f32.mrf.mxu0
        %1555 = vdwg.mxu0
        %v1556 = vadd.f32 %v1438, %v1542
        %v1557 = vadd.f32 %v1439, %v1545
        %v1558 = vadd.f32 %v1440, %v1550
        %v1559 = vadd.f32 %v1441, %v1553
        %s1560 = scalar_lea.vmem %s4, 448
        %v1561 = vld [vmem:[%s1560] sm:$0xf]
        %v1562 = vld [vmem:[%s1560 + $0x4] sm:$0xf]
        %v1563 = vld [vmem:[%s1560 + $0x8] sm:$0xf]
        %v1564 = vld [vmem:[%s1560 + $0xc] sm:$0xf]
        %v1565 = vld [vmem:[%s1560 + $0x10] sm:$0xf]
        %v1566 = vld [vmem:[%s1560 + $0x14] sm:$0xf]
        %v1567 = vld [vmem:[%s1560 + $0x18] sm:$0xf]
        %v1568 = vld [vmem:[%s1560 + $0x1c] sm:$0xf]
        %v1569 = vld [vmem:[%s1560 + $0x20] sm:$0xf]
        %v1570 = vld [vmem:[%s1560 + $0x24] sm:$0xf]
        %v1571 = vld [vmem:[%s1560 + $0x28] sm:$0xf]
        %v1572 = vld [vmem:[%s1560 + $0x2c] sm:$0xf]
        %v1573 = vld [vmem:[%s1560 + $0x30] sm:$0xf]
        %v1574 = vld [vmem:[%s1560 + $0x34] sm:$0xf]
        %v1575 = vld [vmem:[%s1560 + $0x38] sm:$0xf]
        %v1576 = vld [vmem:[%s1560 + $0x3c] sm:$0xf]
        %v1577 = vor.u32 %v1207, %v730
        %v1579 = vshll.u32 %v677, 16
        %v1581 = vrot.slane %v1579, 1
        %v1582 = vsel %vm711, %v1577, %v1581
        %v1600 = vunpack.c.l.b16 %v1561
        %v1601 = vunpack.c.l.b16 %v1562
        %v1602 = vunpack.c.l.b16 %v1563
        %v1603 = vunpack.c.l.b16 %v1564
        %v1604 = vunpack.c.l.b16 %v1565
        %v1605 = vunpack.c.l.b16 %v1566
        %v1606 = vunpack.c.l.b16 %v1567
        %v1607 = vunpack.c.l.b16 %v1568
        %v1608 = vunpack.c.l.b16 %v1569
        %v1609 = vunpack.c.l.b16 %v1570
        %v1610 = vunpack.c.l.b16 %v1571
        %v1611 = vunpack.c.l.b16 %v1572
        %v1612 = vunpack.c.l.b16 %v1573
        %v1613 = vunpack.c.l.b16 %v1574
        %v1614 = vunpack.c.l.b16 %v1575
        %v1615 = vunpack.c.l.b16 %v1576
        %v1616 = vpack.c.b16 %v1601, %v1600
        %v1617 = vpack.c.b16 %v1603, %v1602
        %v1618 = vpack.c.b16 %v1605, %v1604
        %v1619 = vpack.c.b16 %v1607, %v1606
        %v1620 = vpack.c.b16 %v1609, %v1608
        %v1621 = vpack.c.b16 %v1611, %v1610
        %v1622 = vpack.c.b16 %v1613, %v1612
        %v1623 = vpack.c.b16 %v1615, %v1614
        %1632 = vmatprep.subr.bf16.mxu0 0
        %1633 = vmatpush1.bf16.msra.mxu0 %v1623
        %1634 = vmatprep.subr.bf16.mxu0 0
        %1635 = vmatpush1.bf16.msra.mxu0 %v1622
        %1636 = vmatprep.subr.bf16.mxu0 0
        %1637 = vmatpush1.bf16.msra.mxu0 %v1621
        %1638 = vmatprep.subr.bf16.mxu0 0
        %1639 = vmatpush1.bf16.msra.mxu0 %v1620
        %1640 = vmatprep.subr.bf16.mxu0 0
        %1641 = vmatpush1.bf16.msra.mxu0 %v1619
        %1642 = vmatprep.subr.bf16.mxu0 0
        %1643 = vmatpush1.bf16.msra.mxu0 %v1618
        %1644 = vmatprep.subr.bf16.mxu0 0
        %1645 = vmatpush1.bf16.msra.mxu0 %v1617
        %1646 = vmatprep.subr.bf16.mxu0 0
        %1647 = vmatpush1.bf16.msra.mxu0 %v1616
        %1648 = vmatprep.subr.bf16.mxu0 0
        %1649 = vmatpush2.bf16.msra.mxu0 0
        %1650 = vmatprep.subr.bf16.mxu0 0
        %1651 = vmatpush2.bf16.msra.mxu0 0
        %1652 = vmatprep.subr.bf16.mxu0 0
        %1653 = vmatpush2.bf16.msra.mxu0 0
        %1654 = vmatprep.subr.bf16.mxu0 0
        %1655 = vmatpush2.bf16.msra.mxu0 0
        %1656 = vmatprep.subr.bf16.mxu0 0
        %1657 = vmatpush2.bf16.msra.mxu0 0
        %1658 = vmatprep.subr.bf16.mxu0 0
        %1659 = vmatpush2.bf16.msra.mxu0 0
        %1660 = vmatprep.subr.bf16.mxu0 0
        %1661 = vmatpush2.bf16.msra.mxu0 0
        %1662 = vmatprep.subr.bf16.mxu0 0
        %1663 = vmatpush2.bf16.msra.mxu0 0
        %1664 = vmatprep.mubr.bf16.mxu0 0
        %1665 = vmatmul.mubr.bf16.gmra.mxu0 %v731
        %v1666 = vpop.f32.mrf.mxu0
        %v1667 = vadd.f32 0.0, %v1666
        %v1668 = vpop.f32.mrf.mxu0
        %v1669 = vpop.f32.mrf.mxu0
        %v1670 = vadd.f32 0.0, %v1669
        %v1671 = vpop.f32.mrf.mxu0
        %1672 = vmatprep.mubr.bf16.mxu0 0
        %1673 = vmatmul.mubr.bf16.gmra.mxu0 %v1582
        %v1674 = vpop.f32.mrf.mxu0
        %v1675 = vadd.f32 0.0, %v1674
        %v1676 = vpop.f32.mrf.mxu0
        %v1677 = vpop.f32.mrf.mxu0
        %v1678 = vadd.f32 0.0, %v1677
        %v1679 = vpop.f32.mrf.mxu0
        %1680 = vdwg.mxu0
        %v1681 = vadd.f32 %v1556, %v1667
        %v1682 = vadd.f32 %v1557, %v1670
        %v1683 = vadd.f32 %v1558, %v1675
        %v1684 = vadd.f32 %v1559, %v1678
        %s1685 = scalar_lea.vmem %s4, 512
        %v1686 = vld [vmem:[%s1685] sm:$0xf]
        %v1687 = vld [vmem:[%s1685 + $0x4] sm:$0xf]
        %v1688 = vld [vmem:[%s1685 + $0x8] sm:$0xf]
        %v1689 = vld [vmem:[%s1685 + $0xc] sm:$0xf]
        %v1690 = vld [vmem:[%s1685 + $0x10] sm:$0xf]
        %v1691 = vld [vmem:[%s1685 + $0x14] sm:$0xf]
        %v1692 = vld [vmem:[%s1685 + $0x18] sm:$0xf]
        %v1693 = vld [vmem:[%s1685 + $0x1c] sm:$0xf]
        %v1694 = vld [vmem:[%s1685 + $0x20] sm:$0xf]
        %v1695 = vld [vmem:[%s1685 + $0x24] sm:$0xf]
        %v1696 = vld [vmem:[%s1685 + $0x28] sm:$0xf]
        %v1697 = vld [vmem:[%s1685 + $0x2c] sm:$0xf]
        %v1698 = vld [vmem:[%s1685 + $0x30] sm:$0xf]
        %v1699 = vld [vmem:[%s1685 + $0x34] sm:$0xf]
        %v1700 = vld [vmem:[%s1685 + $0x38] sm:$0xf]
        %v1701 = vld [vmem:[%s1685 + $0x3c] sm:$0xf]
        %v1703 = vrot.slane %v677, 1
        %v1704 = vsel %vm947, %v951, %v1703
        %v1722 = vunpack.c.l.b16 %v1686
        %v1723 = vunpack.c.l.b16 %v1687
        %v1724 = vunpack.c.l.b16 %v1688
        %v1725 = vunpack.c.l.b16 %v1689
        %v1726 = vunpack.c.l.b16 %v1690
        %v1727 = vunpack.c.l.b16 %v1691
        %v1728 = vunpack.c.l.b16 %v1692
        %v1729 = vunpack.c.l.b16 %v1693
        %v1730 = vunpack.c.l.b16 %v1694
        %v1731 = vunpack.c.l.b16 %v1695
        %v1732 = vunpack.c.l.b16 %v1696
        %v1733 = vunpack.c.l.b16 %v1697
        %v1734 = vunpack.c.l.b16 %v1698
        %v1735 = vunpack.c.l.b16 %v1699
        %v1736 = vunpack.c.l.b16 %v1700
        %v1737 = vunpack.c.l.b16 %v1701
        %v1738 = vpack.c.b16 %v1723, %v1722
        %v1739 = vpack.c.b16 %v1725, %v1724
        %v1740 = vpack.c.b16 %v1727, %v1726
        %v1741 = vpack.c.b16 %v1729, %v1728
        %v1742 = vpack.c.b16 %v1731, %v1730
        %v1743 = vpack.c.b16 %v1733, %v1732
        %v1744 = vpack.c.b16 %v1735, %v1734
        %v1745 = vpack.c.b16 %v1737, %v1736
        %1754 = vmatprep.subr.bf16.mxu0 0
        %1755 = vmatpush1.bf16.msra.mxu0 %v1745
        %1756 = vmatprep.subr.bf16.mxu0 0
        %1757 = vmatpush1.bf16.msra.mxu0 %v1744
        %1758 = vmatprep.subr.bf16.mxu0 0
        %1759 = vmatpush1.bf16.msra.mxu0 %v1743
        %1760 = vmatprep.subr.bf16.mxu0 0
        %1761 = vmatpush1.bf16.msra.mxu0 %v1742
        %1762 = vmatprep.subr.bf16.mxu0 0
        %1763 = vmatpush1.bf16.msra.mxu0 %v1741
        %1764 = vmatprep.subr.bf16.mxu0 0
        %1765 = vmatpush1.bf16.msra.mxu0 %v1740
        %1766 = vmatprep.subr.bf16.mxu0 0
        %1767 = vmatpush1.bf16.msra.mxu0 %v1739
        %1768 = vmatprep.subr.bf16.mxu0 0
        %1769 = vmatpush1.bf16.msra.mxu0 %v1738
        %1770 = vmatprep.subr.bf16.mxu0 0
        %1771 = vmatpush2.bf16.msra.mxu0 0
        %1772 = vmatprep.subr.bf16.mxu0 0
        %1773 = vmatpush2.bf16.msra.mxu0 0
        %1774 = vmatprep.subr.bf16.mxu0 0
        %1775 = vmatpush2.bf16.msra.mxu0 0
        %1776 = vmatprep.subr.bf16.mxu0 0
        %1777 = vmatpush2.bf16.msra.mxu0 0
        %1778 = vmatprep.subr.bf16.mxu0 0
        %1779 = vmatpush2.bf16.msra.mxu0 0
        %1780 = vmatprep.subr.bf16.mxu0 0
        %1781 = vmatpush2.bf16.msra.mxu0 0
        %1782 = vmatprep.subr.bf16.mxu0 0
        %1783 = vmatpush2.bf16.msra.mxu0 0
        %1784 = vmatprep.subr.bf16.mxu0 0
        %1785 = vmatpush2.bf16.msra.mxu0 0
        %1786 = vmatprep.mubr.bf16.mxu0 0
        %1787 = vmatmul.mubr.bf16.gmra.mxu0 %v952
        %v1788 = vpop.f32.mrf.mxu0
        %v1789 = vadd.f32 0.0, %v1788
        %v1790 = vpop.f32.mrf.mxu0
        %v1791 = vpop.f32.mrf.mxu0
        %v1792 = vadd.f32 0.0, %v1791
        %v1793 = vpop.f32.mrf.mxu0
        %1794 = vmatprep.mubr.bf16.mxu0 0
        %1795 = vmatmul.mubr.bf16.gmra.mxu0 %v1704
        %v1796 = vpop.f32.mrf.mxu0
        %v1797 = vadd.f32 0.0, %v1796
        %v1798 = vpop.f32.mrf.mxu0
        %v1799 = vpop.f32.mrf.mxu0
        %v1800 = vadd.f32 0.0, %v1799
        %v1801 = vpop.f32.mrf.mxu0
        %1802 = vdwg.mxu0
        %v1803 = vadd.f32 %v1681, %v1789
        %v1804 = vadd.f32 %v1682, %v1792
        %v1805 = vadd.f32 %v1683, %v1797
        %v1806 = vadd.f32 %v1684, %v1800
        %v1807 = vld [vmem:[%s5] sm:$0x1]
        %v1809 = vlaneseq
        %v1810 = vshrl.u32 %v1809, 7
        %v1811 = vsub.s32 0, %v1810
        %v1812 = vrot.slane %v1807, %v1811
        %v1814 = vadd.f32 %v1803, %v1812
        %v1815 = vadd.f32 %v1804, %v1812
        %v1816 = vadd.f32 %v1805, %v1812
        %v1817 = vadd.f32 %v1806, %v1812
        %v1818 = vmax.f32 %v1814, 0.0
        %v1819 = vmax.f32 %v1815, 0.0
        %v1820 = vmax.f32 %v1816, 0.0
        %v1821 = vmax.f32 %v1817, 0.0
        %v1822 = vpack.c.bf16 %v1819, %v1818
        %v1823 = vpack.c.bf16 %v1821, %v1820
        %v1824 = vld [vmem:[%s6] sm:$0xff]
        %v1825 = vld [vmem:[%s6 + $0x8] sm:$0xff]
        %v1826 = vld [vmem:[%s6 + $0x10] sm:$0xff]
        %v1827 = vld [vmem:[%s6 + $0x18] sm:$0xff]
        %v1828 = vld [vmem:[%s6 + $0x20] sm:$0xff]
        %v1829 = vld [vmem:[%s6 + $0x28] sm:$0xff]
        %v1830 = vld [vmem:[%s6 + $0x30] sm:$0xff]
        %v1831 = vld [vmem:[%s6 + $0x38] sm:$0xff]
        %v1832 = vld [vmem:[%s6 + $0x40] sm:$0xff]
        %v1833 = vld [vmem:[%s6 + $0x48] sm:$0xff]
        %v1834 = vld [vmem:[%s6 + $0x50] sm:$0xff]
        %v1835 = vld [vmem:[%s6 + $0x58] sm:$0xff]
        %v1836 = vld [vmem:[%s6 + $0x60] sm:$0xff]
        %v1837 = vld [vmem:[%s6 + $0x68] sm:$0xff]
        %v1838 = vld [vmem:[%s6 + $0x70] sm:$0xff]
        %v1839 = vld [vmem:[%s6 + $0x78] sm:$0xff]
        %v1840 = vld [vmem:[%s7] sm:$0x3]
        %v1842 = vlaneseq
        %v1843 = vshrl.u32 %v1842, 7
        %v1844 = vsub.s32 0, %v1843
        %v1845 = vrot.slane %v1840, %v1844
        %v1846 = vlaneseq
        %v1847 = vshrl.u32 %v1846, 7
        %v1848 = vsub.s32 1, %v1847
        %v1849 = vrot.slane %v1840, %v1848
        %v1868 = vunpack.c.l.b16 %v1824
        %v1869 = vunpack.c.h.b16 %v1824
        %v1870 = vunpack.c.l.b16 %v1825
        %v1871 = vunpack.c.h.b16 %v1825
        %v1872 = vunpack.c.l.b16 %v1826
        %v1873 = vunpack.c.h.b16 %v1826
        %v1874 = vunpack.c.l.b16 %v1827
        %v1875 = vunpack.c.h.b16 %v1827
        %v1876 = vunpack.c.l.b16 %v1828
        %v1877 = vunpack.c.h.b16 %v1828
        %v1878 = vunpack.c.l.b16 %v1829
        %v1879 = vunpack.c.h.b16 %v1829
        %v1880 = vunpack.c.l.b16 %v1830
        %v1881 = vunpack.c.h.b16 %v1830
        %v1882 = vunpack.c.l.b16 %v1831
        %v1883 = vunpack.c.h.b16 %v1831
        %v1884 = vunpack.c.l.b16 %v1832
        %v1885 = vunpack.c.h.b16 %v1832
        %v1886 = vunpack.c.l.b16 %v1833
        %v1887 = vunpack.c.h.b16 %v1833
        %v1888 = vunpack.c.l.b16 %v1834
        %v1889 = vunpack.c.h.b16 %v1834
        %v1890 = vunpack.c.l.b16 %v1835
        %v1891 = vunpack.c.h.b16 %v1835
        %v1892 = vunpack.c.l.b16 %v1836
        %v1893 = vunpack.c.h.b16 %v1836
        %v1894 = vunpack.c.l.b16 %v1837
        %v1895 = vunpack.c.h.b16 %v1837
        %v1896 = vunpack.c.l.b16 %v1838
        %v1897 = vunpack.c.h.b16 %v1838
        %v1898 = vunpack.c.l.b16 %v1839
        %v1899 = vunpack.c.h.b16 %v1839
        %v1900 = vpack.c.b16 %v1870, %v1868
        %v1901 = vpack.c.b16 %v1871, %v1869
        %v1902 = vpack.c.b16 %v1874, %v1872
        %v1903 = vpack.c.b16 %v1875, %v1873
        %v1904 = vpack.c.b16 %v1878, %v1876
        %v1905 = vpack.c.b16 %v1879, %v1877
        %v1906 = vpack.c.b16 %v1882, %v1880
        %v1907 = vpack.c.b16 %v1883, %v1881
        %v1908 = vpack.c.b16 %v1886, %v1884
        %v1909 = vpack.c.b16 %v1887, %v1885
        %v1910 = vpack.c.b16 %v1890, %v1888
        %v1911 = vpack.c.b16 %v1891, %v1889
        %v1912 = vpack.c.b16 %v1894, %v1892
        %v1913 = vpack.c.b16 %v1895, %v1893
        %v1914 = vpack.c.b16 %v1898, %v1896
        %v1915 = vpack.c.b16 %v1899, %v1897
        %1932 = vmatprep.subr.bf16.mxu0 %v1915
        %1933 = vmatpush1.bf16.msra.mxu0 %v1914
        %1934 = vmatprep.subr.bf16.mxu0 %v1913
        %1935 = vmatpush1.bf16.msra.mxu0 %v1912
        %1936 = vmatprep.subr.bf16.mxu0 %v1911
        %1937 = vmatpush1.bf16.msra.mxu0 %v1910
        %1938 = vmatprep.subr.bf16.mxu0 %v1909
        %1939 = vmatpush1.bf16.msra.mxu0 %v1908
        %1940 = vmatprep.subr.bf16.mxu0 %v1907
        %1941 = vmatpush1.bf16.msra.mxu0 %v1906
        %1942 = vmatprep.subr.bf16.mxu0 %v1905
        %1943 = vmatpush1.bf16.msra.mxu0 %v1904
        %1944 = vmatprep.subr.bf16.mxu0 %v1903
        %1945 = vmatpush1.bf16.msra.mxu0 %v1902
        %1946 = vmatprep.subr.bf16.mxu0 %v1901
        %1947 = vmatpush1.bf16.msra.mxu0 %v1900
        %1948 = vmatprep.subr.bf16.mxu0 0
        %1949 = vmatpush2.bf16.msra.mxu0 0
        %1950 = vmatprep.subr.bf16.mxu0 0
        %1951 = vmatpush2.bf16.msra.mxu0 0
        %1952 = vmatprep.subr.bf16.mxu0 0
        %1953 = vmatpush2.bf16.msra.mxu0 0
        %1954 = vmatprep.subr.bf16.mxu0 0
        %1955 = vmatpush2.bf16.msra.mxu0 0
        %1956 = vmatprep.subr.bf16.mxu0 0
        %1957 = vmatpush2.bf16.msra.mxu0 0
        %1958 = vmatprep.subr.bf16.mxu0 0
        %1959 = vmatpush2.bf16.msra.mxu0 0
        %1960 = vmatprep.subr.bf16.mxu0 0
        %1961 = vmatpush2.bf16.msra.mxu0 0
        %1962 = vmatprep.subr.bf16.mxu0 0
        %1963 = vmatpush2.bf16.msra.mxu0 0
        %1964 = vmatprep.mubr.bf16.mxu0 0
        %1965 = vmatmul.mubr.bf16.gmra.mxu0 %v1822
        %v1966 = vpop.f32.mrf.mxu0
        %v1967 = vadd.f32 %v1845, %v1966
        %v1968 = vpop.f32.mrf.mxu0
        %v1969 = vadd.f32 %v1849, %v1968
        %v1970 = vpop.f32.mrf.mxu0
        %v1971 = vadd.f32 %v1845, %v1970
        %v1972 = vpop.f32.mrf.mxu0
        %v1973 = vadd.f32 %v1849, %v1972
        %1974 = vmatprep.mubr.bf16.mxu0 0
        %1975 = vmatmul.mubr.bf16.gmra.mxu0 %v1823
        %v1976 = vpop.f32.mrf.mxu0
        %v1977 = vadd.f32 %v1845, %v1976
        %v1978 = vpop.f32.mrf.mxu0
        %v1979 = vadd.f32 %v1849, %v1978
        %v1980 = vpop.f32.mrf.mxu0
        %v1981 = vadd.f32 %v1845, %v1980
        %v1982 = vpop.f32.mrf.mxu0
        %v1983 = vadd.f32 %v1849, %v1982
        %1984 = vdwg.mxu0
        %v1985 = vld [vmem:[%s591] sm:$0xf]
        %v1986 = vld [vmem:[%s591 + $0x4] sm:$0xf]
        %v1987 = vld [vmem:[%s591 + $0x8] sm:$0xf]
        %v1988 = vld [vmem:[%s591 + $0xc] sm:$0xf]
        %v1989 = vld [vmem:[%s8] sm:$0xff]
        %v1990 = vld [vmem:[%s8 + $0x8] sm:$0xff]
        %v1991 = vld [vmem:[%s8 + $0x10] sm:$0xff]
        %v1992 = vld [vmem:[%s8 + $0x18] sm:$0xff]
        %v1993 = vld [vmem:[%s8 + $0x20] sm:$0xff]
        %v1994 = vld [vmem:[%s8 + $0x28] sm:$0xff]
        %v1995 = vld [vmem:[%s8 + $0x30] sm:$0xff]
        %v1996 = vld [vmem:[%s8 + $0x38] sm:$0xff]
        %v1997 = vld [vmem:[%s8 + $0x40] sm:$0xff]
        %v1998 = vld [vmem:[%s8 + $0x48] sm:$0xff]
        %v1999 = vld [vmem:[%s8 + $0x50] sm:$0xff]
        %v2000 = vld [vmem:[%s8 + $0x58] sm:$0xff]
        %v2001 = vld [vmem:[%s8 + $0x60] sm:$0xff]
        %v2002 = vld [vmem:[%s8 + $0x68] sm:$0xff]
        %v2003 = vld [vmem:[%s8 + $0x70] sm:$0xff]
        %v2004 = vld [vmem:[%s8 + $0x78] sm:$0xff]
        %v2009 = vunpack.c.l.b16 %v1985
        %v2010 = vunpack.c.l.b16 %v1986
        %v2011 = vunpack.c.l.b16 %v1987
        %v2012 = vunpack.c.l.b16 %v1988
        %v2013 = vpack.c.b16 %v2010, %v2009
        %v2014 = vpack.c.b16 %v2012, %v2011
        %v2033 = vunpack.c.l.b16 %v1989
        %v2034 = vunpack.c.h.b16 %v1989
        %v2035 = vunpack.c.l.b16 %v1990
        %v2036 = vunpack.c.h.b16 %v1990
        %v2037 = vunpack.c.l.b16 %v1991
        %v2038 = vunpack.c.h.b16 %v1991
        %v2039 = vunpack.c.l.b16 %v1992
        %v2040 = vunpack.c.h.b16 %v1992
        %v2041 = vunpack.c.l.b16 %v1993
        %v2042 = vunpack.c.h.b16 %v1993
        %v2043 = vunpack.c.l.b16 %v1994
        %v2044 = vunpack.c.h.b16 %v1994
        %v2045 = vunpack.c.l.b16 %v1995
        %v2046 = vunpack.c.h.b16 %v1995
        %v2047 = vunpack.c.l.b16 %v1996
        %v2048 = vunpack.c.h.b16 %v1996
        %v2049 = vunpack.c.l.b16 %v1997
        %v2050 = vunpack.c.h.b16 %v1997
        %v2051 = vunpack.c.l.b16 %v1998
        %v2052 = vunpack.c.h.b16 %v1998
        %v2053 = vunpack.c.l.b16 %v1999
        %v2054 = vunpack.c.h.b16 %v1999
        %v2055 = vunpack.c.l.b16 %v2000
        %v2056 = vunpack.c.h.b16 %v2000
        %v2057 = vunpack.c.l.b16 %v2001
        %v2058 = vunpack.c.h.b16 %v2001
        %v2059 = vunpack.c.l.b16 %v2002
        %v2060 = vunpack.c.h.b16 %v2002
        %v2061 = vunpack.c.l.b16 %v2003
        %v2062 = vunpack.c.h.b16 %v2003
        %v2063 = vunpack.c.l.b16 %v2004
        %v2064 = vunpack.c.h.b16 %v2004
        %v2065 = vpack.c.b16 %v2035, %v2033
        %v2066 = vpack.c.b16 %v2036, %v2034
        %v2067 = vpack.c.b16 %v2039, %v2037
        %v2068 = vpack.c.b16 %v2040, %v2038
        %v2069 = vpack.c.b16 %v2043, %v2041
        %v2070 = vpack.c.b16 %v2044, %v2042
        %v2071 = vpack.c.b16 %v2047, %v2045
        %v2072 = vpack.c.b16 %v2048, %v2046
        %v2073 = vpack.c.b16 %v2051, %v2049
        %v2074 = vpack.c.b16 %v2052, %v2050
        %v2075 = vpack.c.b16 %v2055, %v2053
        %v2076 = vpack.c.b16 %v2056, %v2054
        %v2077 = vpack.c.b16 %v2059, %v2057
        %v2078 = vpack.c.b16 %v2060, %v2058
        %v2079 = vpack.c.b16 %v2063, %v2061
        %v2080 = vpack.c.b16 %v2064, %v2062
        %2097 = vmatprep.subr.bf16.mxu0 %v2080
        %2098 = vmatpush1.bf16.msra.mxu0 %v2079
        %2099 = vmatprep.subr.bf16.mxu0 %v2078
        %2100 = vmatpush1.bf16.msra.mxu0 %v2077
        %2101 = vmatprep.subr.bf16.mxu0 %v2076
        %2102 = vmatpush1.bf16.msra.mxu0 %v2075
        %2103 = vmatprep.subr.bf16.mxu0 %v2074
        %2104 = vmatpush1.bf16.msra.mxu0 %v2073
        %2105 = vmatprep.subr.bf16.mxu0 %v2072
        %2106 = vmatpush1.bf16.msra.mxu0 %v2071
        %2107 = vmatprep.subr.bf16.mxu0 %v2070
        %2108 = vmatpush1.bf16.msra.mxu0 %v2069
        %2109 = vmatprep.subr.bf16.mxu0 %v2068
        %2110 = vmatpush1.bf16.msra.mxu0 %v2067
        %2111 = vmatprep.subr.bf16.mxu0 %v2066
        %2112 = vmatpush1.bf16.msra.mxu0 %v2065
        %2113 = vmatprep.subr.bf16.mxu0 0
        %2114 = vmatpush2.bf16.msra.mxu0 0
        %2115 = vmatprep.subr.bf16.mxu0 0
        %2116 = vmatpush2.bf16.msra.mxu0 0
        %2117 = vmatprep.subr.bf16.mxu0 0
        %2118 = vmatpush2.bf16.msra.mxu0 0
        %2119 = vmatprep.subr.bf16.mxu0 0
        %2120 = vmatpush2.bf16.msra.mxu0 0
        %2121 = vmatprep.subr.bf16.mxu0 0
        %2122 = vmatpush2.bf16.msra.mxu0 0
        %2123 = vmatprep.subr.bf16.mxu0 0
        %2124 = vmatpush2.bf16.msra.mxu0 0
        %2125 = vmatprep.subr.bf16.mxu0 0
        %2126 = vmatpush2.bf16.msra.mxu0 0
        %2127 = vmatprep.subr.bf16.mxu0 0
        %2128 = vmatpush2.bf16.msra.mxu0 0
        %2129 = vmatprep.mubr.bf16.mxu0 0
        %2130 = vmatmul.mubr.bf16.gmra.mxu0 %v2013
        %v2131 = vpop.f32.mrf.mxu0
        %v2132 = vadd.f32 0.0, %v2131
        %v2133 = vpop.f32.mrf.mxu0
        %v2134 = vadd.f32 0.0, %v2133
        %v2135 = vpop.f32.mrf.mxu0
        %v2136 = vadd.f32 0.0, %v2135
        %v2137 = vpop.f32.mrf.mxu0
        %v2138 = vadd.f32 0.0, %v2137
        %2139 = vmatprep.mubr.bf16.mxu0 0
        %2140 = vmatmul.mubr.bf16.gmra.mxu0 %v2014
        %v2141 = vpop.f32.mrf.mxu0
        %v2142 = vadd.f32 0.0, %v2141
        %v2143 = vpop.f32.mrf.mxu0
        %v2144 = vadd.f32 0.0, %v2143
        %v2145 = vpop.f32.mrf.mxu0
        %v2146 = vadd.f32 0.0, %v2145
        %v2147 = vpop.f32.mrf.mxu0
        %v2148 = vadd.f32 0.0, %v2147
        %2149 = vdwg.mxu0
        %v2150 = vadd.f32 %v1967, %v2132
        %v2151 = vadd.f32 %v1969, %v2134
        %v2152 = vadd.f32 %v1971, %v2136
        %v2153 = vadd.f32 %v1973, %v2138
        %v2154 = vadd.f32 %v1977, %v2142
        %v2155 = vadd.f32 %v1979, %v2144
        %v2156 = vadd.f32 %v1981, %v2146
        %v2157 = vadd.f32 %v1983, %v2148
        %v2158 = vld [vmem:[%s9] sm:$0x3]
        %v2160 = vlaneseq
        %v2161 = vshrl.u32 %v2160, 7
        %v2162 = vsub.s32 0, %v2161
        %v2163 = vrot.slane %v2158, %v2162
        %v2164 = vlaneseq
        %v2165 = vshrl.u32 %v2164, 7
        %v2166 = vsub.s32 1, %v2165
        %v2167 = vrot.slane %v2158, %v2166
        %v2170 = vadd.f32 %v2150, %v2163
        %v2171 = vadd.f32 %v2151, %v2167
        %v2172 = vadd.f32 %v2152, %v2163
        %v2173 = vadd.f32 %v2153, %v2167
        %v2174 = vadd.f32 %v2154, %v2163
        %v2175 = vadd.f32 %v2155, %v2167
        %v2176 = vadd.f32 %v2156, %v2163
        %v2177 = vadd.f32 %v2157, %v2167
        %v2178 = vmax.f32 %v2170, 0.0
        %v2179 = vmax.f32 %v2171, 0.0
        %v2180 = vmax.f32 %v2172, 0.0
        %v2181 = vmax.f32 %v2173, 0.0
        %v2182 = vmax.f32 %v2174, 0.0
        %v2183 = vmax.f32 %v2175, 0.0
        %v2184 = vmax.f32 %v2176, 0.0
        %v2185 = vmax.f32 %v2177, 0.0
        %v2186 = vlaneseq
        %v2187 = vand.u32 %v2186, 127
        %vm2188 = vcmp.lt.s32.totalorder %v2187, 0
        %v2189 = vsub.s32 0, %v2187
        %v2190 = vsel %vm2188, %v2189, %v2187
        %v2191 = vshrl.u32 %v2190, 3
        %v2192 = vand.u32 %v2190, 7
        %v2193 = vsub.s32 0, %v2192
        %v2194 = vsel %vm2188, %v2193, %v2192
        %vm2195 = vcmp.ne.s32.totalorder %v2194, 0
        %vm2196 = vcmp.lt.s32.totalorder %v2194, 0
        %vm2197 = vmand %vm2196, %vm2195
        %v2198 = vadd.s32 %v2194, 8
        %v2199 = vsel %vm2197, %v2198, %v2194
        %vm2200 = vcmp.lt.s32.totalorder %v2199, 4
        %v2201 = vsel %vm2200, 1, 0
        %v2202 = vcvt.s32.f32 %v2201
        %v2203 = vld [vmem:[#allocation2] sm:$0x3]
        %vm2204 = vcmask 261120
        %v2206 = vsel %vm2204, %v2202, 0
        %2208 = vmatprep.subr.mxu0 0.0
        %2209 = vmatpush1.msra.mxu0 0.0
        %2210 = vmatprep.subr.mxu0 0.0
        %2211 = vmatpush1.msra.mxu0 0.0
        %2212 = vmatprep.subr.mxu0 0.0
        %2213 = vmatpush1.msra.mxu0 0.0
        %2214 = vmatprep.subr.mxu0 0.0
        %2215 = vmatpush1.msra.mxu0 0.0
        %2216 = vmatprep.subr.mxu0 0.0
        %2217 = vmatpush1.msra.mxu0 0.0
        %2218 = vmatprep.subr.mxu0 0.0
        %2219 = vmatpush1.msra.mxu0 0.0
        %2220 = vmatprep.subr.mxu0 0.0
        %2221 = vmatpush1.msra.mxu0 0.0
        %2222 = vmatprep.subr.mxu0 0.0
        %2223 = vmatpush1.msra.mxu0 0.0
        %2224 = vmatprep.subr.mxu0 0.0
        %2225 = vmatpush1.msra.mxu0 0.0
        %2226 = vmatprep.subr.mxu0 0.0
        %2227 = vmatpush1.msra.mxu0 0.0
        %2228 = vmatprep.subr.mxu0 0.0
        %2229 = vmatpush1.msra.mxu0 0.0
        %2230 = vmatprep.subr.mxu0 0.0
        %2231 = vmatpush1.msra.mxu0 0.0
        %2232 = vmatprep.subr.mxu0 %v2185
        %2233 = vmatpush1.msra.mxu0 %v2184
        %2234 = vmatprep.subr.mxu0 %v2183
        %2235 = vmatpush1.msra.mxu0 %v2182
        %2236 = vmatprep.subr.mxu0 %v2181
        %2237 = vmatpush1.msra.mxu0 %v2180
        %2238 = vmatprep.subr.mxu0 %v2179
        %2239 = vmatpush1.msra.mxu0 %v2178
        %2240 = vmatprep.subr.mxu0 0.0
        %2241 = vmatpush2.msra.mxu0 0.0
        %2242 = vmatprep.subr.mxu0 0.0
        %2243 = vmatpush2.msra.mxu0 0.0
        %2244 = vmatprep.subr.mxu0 0.0
        %2245 = vmatpush2.msra.mxu0 0.0
        %2246 = vmatprep.subr.mxu0 0.0
        %2247 = vmatpush2.msra.mxu0 0.0
        %2248 = vmatprep.subr.mxu0 0.0
        %2249 = vmatpush2.msra.mxu0 0.0
        %2250 = vmatprep.subr.mxu0 0.0
        %2251 = vmatpush2.msra.mxu0 0.0
        %2252 = vmatprep.subr.mxu0 0.0
        %2253 = vmatpush2.msra.mxu0 0.0
        %2254 = vmatprep.subr.mxu0 0.0
        %2255 = vmatpush2.msra.mxu0 0.0
        %2256 = vmatprep.subr.mxu0 0.0
        %2257 = vmatpush2.msra.mxu0 0.0
        %2258 = vmatprep.subr.mxu0 0.0
        %2259 = vmatpush2.msra.mxu0 0.0
        %2260 = vmatprep.subr.mxu0 0.0
        %2261 = vmatpush2.msra.mxu0 0.0
        %2262 = vmatprep.subr.mxu0 0.0
        %2263 = vmatpush2.msra.mxu0 0.0
        %2264 = vmatprep.subr.mxu0 0.0
        %2265 = vmatpush2.msra.mxu0 0.0
        %2266 = vmatprep.subr.mxu0 0.0
        %2267 = vmatpush2.msra.mxu0 0.0
        %2268 = vmatprep.subr.mxu0 0.0
        %2269 = vmatpush2.msra.mxu0 0.0
        %2270 = vmatprep.subr.mxu0 0.0
        %2271 = vmatpush2.msra.mxu0 0.0
        %2272 = vmatprep.mubr.f32.mxu0 0.0
        %2273 = vmatmul.mubr.f32.gmra.mxu0 %v2206
        %v2274 = vpop.f32.mrf.mxu0
        %v2275 = vadd.f32 0.0, %v2274
        %v2276 = vpop.f32.mrf.mxu0
        %v2277 = vadd.f32 0.0, %v2276
        %2278 = vdwg.mxu0
        %v2281 = vcombine.low %v2275, %v2277
        %v2283 = vunpack.c.l.s4 1966171168
        %v2284 = vunpack.c.0.s8 %v2283
        %v2285 = vlaneseq
        %v2286 = vshrl.u32 %v2285, 7
        %v2287 = vsub.s32 %v2284, %v2286
        %v2288 = vrot.slane %v2281, %v2287
        %v2290 = vunpack.c.l.s4 1966171168
        %v2291 = vunpack.c.0.s8 %v2290
        %v2292 = vlaneseq
        %v2293 = vshrl.u32 %v2292, 7
        %v2294 = vsub.s32 %v2291, %v2293
        %v2295 = vrot.slane %v2288, %v2294
        %v2297 = vadd.f32 %v2203, %v2295
        %v2298 = vlaneseq
        %vm2299 = vcmp.ge.s32.totalorder %v2298, 0
        %vm2300 = vcmp.lt.s32.totalorder %v2298, 256
        %vm2301 = vmand %vm2299, %vm2300
        %2302 = vst.msk [vmem:[#allocation2] sm:$0x3] %vm2301, %v2297
        // Predicated region
        $region73: #{encoder_cnn_forward.3} parent=67 // pred_check
          %p2303 = pneg %p594
        $region74: #{encoder_cnn_forward.3} parent=67 // pred_check_branch
          %2305 = sbr.rel (%p2303) target = $region76
        $region75: #{encoder_cnn_forward.3} parent=67 // pred_region
          %v2306 = vld [vmem:[#allocation2] sm:$0x3]
          %v2307 = vmul.f32 %v2306, 0.0625
          %v2309 = vlaneseq
          %v2310 = vshrl.u32 %v2309, 7
          %v2311 = vsub.s32 0, %v2310
          %v2312 = vrot.slane %v2307, %v2311
          %v2313 = vlaneseq
          %v2314 = vshrl.u32 %v2313, 7
          %v2315 = vsub.s32 1, %v2314
          %v2316 = vrot.slane %v2307, %v2315
          %v2319 = vpack.c.bf16 %v2312, %v2312
          %v2320 = vpack.c.bf16 %v2316, %v2316
          %v2321 = vld [vmem:[%s10] sm:$0xf]
          %v2322 = vld [vmem:[%s10 + $0x4] sm:$0xf]
          %v2323 = vld [vmem:[%s10 + $0x8] sm:$0xf]
          %v2324 = vld [vmem:[%s10 + $0xc] sm:$0xf]
          %v2325 = vld [vmem:[%s10 + $0x10] sm:$0xf]
          %v2326 = vld [vmem:[%s10 + $0x14] sm:$0xf]
          %v2327 = vld [vmem:[%s10 + $0x18] sm:$0xf]
          %v2328 = vld [vmem:[%s10 + $0x1c] sm:$0xf]
          %v2329 = vld [vmem:[%s10 + $0x20] sm:$0xf]
          %v2330 = vld [vmem:[%s10 + $0x24] sm:$0xf]
          %v2331 = vld [vmem:[%s10 + $0x28] sm:$0xf]
          %v2332 = vld [vmem:[%s10 + $0x2c] sm:$0xf]
          %v2333 = vld [vmem:[%s10 + $0x30] sm:$0xf]
          %v2334 = vld [vmem:[%s10 + $0x34] sm:$0xf]
          %v2335 = vld [vmem:[%s10 + $0x38] sm:$0xf]
          %v2336 = vld [vmem:[%s10 + $0x3c] sm:$0xf]
          %v2337 = vld [vmem:[%s10 + $0x40] sm:$0xf]
          %v2338 = vld [vmem:[%s10 + $0x44] sm:$0xf]
          %v2339 = vld [vmem:[%s10 + $0x48] sm:$0xf]
          %v2340 = vld [vmem:[%s10 + $0x4c] sm:$0xf]
          %v2341 = vld [vmem:[%s10 + $0x50] sm:$0xf]
          %v2342 = vld [vmem:[%s10 + $0x54] sm:$0xf]
          %v2343 = vld [vmem:[%s10 + $0x58] sm:$0xf]
          %v2344 = vld [vmem:[%s10 + $0x5c] sm:$0xf]
          %v2345 = vld [vmem:[%s10 + $0x60] sm:$0xf]
          %v2346 = vld [vmem:[%s10 + $0x64] sm:$0xf]
          %v2347 = vld [vmem:[%s10 + $0x68] sm:$0xf]
          %v2348 = vld [vmem:[%s10 + $0x6c] sm:$0xf]
          %v2349 = vld [vmem:[%s10 + $0x70] sm:$0xf]
          %v2350 = vld [vmem:[%s10 + $0x74] sm:$0xf]
          %v2351 = vld [vmem:[%s10 + $0x78] sm:$0xf]
          %v2352 = vld [vmem:[%s10 + $0x7c] sm:$0xf]
          %v2353 = vld [vmem:[%s11] sm:$0x1]
          %v2386 = vunpack.c.l.b16 %v2321
          %v2387 = vunpack.c.l.b16 %v2322
          %v2388 = vunpack.c.l.b16 %v2323
          %v2389 = vunpack.c.l.b16 %v2324
          %v2390 = vunpack.c.l.b16 %v2325
          %v2391 = vunpack.c.l.b16 %v2326
          %v2392 = vunpack.c.l.b16 %v2327
          %v2393 = vunpack.c.l.b16 %v2328
          %v2394 = vunpack.c.l.b16 %v2329
          %v2395 = vunpack.c.l.b16 %v2330
          %v2396 = vunpack.c.l.b16 %v2331
          %v2397 = vunpack.c.l.b16 %v2332
          %v2398 = vunpack.c.l.b16 %v2333
          %v2399 = vunpack.c.l.b16 %v2334
          %v2400 = vunpack.c.l.b16 %v2335
          %v2401 = vunpack.c.l.b16 %v2336
          %v2402 = vunpack.c.l.b16 %v2337
          %v2403 = vunpack.c.l.b16 %v2338
          %v2404 = vunpack.c.l.b16 %v2339
          %v2405 = vunpack.c.l.b16 %v2340
          %v2406 = vunpack.c.l.b16 %v2341
          %v2407 = vunpack.c.l.b16 %v2342
          %v2408 = vunpack.c.l.b16 %v2343
          %v2409 = vunpack.c.l.b16 %v2344
          %v2410 = vunpack.c.l.b16 %v2345
          %v2411 = vunpack.c.l.b16 %v2346
          %v2412 = vunpack.c.l.b16 %v2347
          %v2413 = vunpack.c.l.b16 %v2348
          %v2414 = vunpack.c.l.b16 %v2349
          %v2415 = vunpack.c.l.b16 %v2350
          %v2416 = vunpack.c.l.b16 %v2351
          %v2417 = vunpack.c.l.b16 %v2352
          %v2418 = vpack.c.b16 %v2387, %v2386
          %v2419 = vpack.c.b16 %v2389, %v2388
          %v2420 = vpack.c.b16 %v2391, %v2390
          %v2421 = vpack.c.b16 %v2393, %v2392
          %v2422 = vpack.c.b16 %v2395, %v2394
          %v2423 = vpack.c.b16 %v2397, %v2396
          %v2424 = vpack.c.b16 %v2399, %v2398
          %v2425 = vpack.c.b16 %v2401, %v2400
          %v2426 = vpack.c.b16 %v2403, %v2402
          %v2427 = vpack.c.b16 %v2405, %v2404
          %v2428 = vpack.c.b16 %v2407, %v2406
          %v2429 = vpack.c.b16 %v2409, %v2408
          %v2430 = vpack.c.b16 %v2411, %v2410
          %v2431 = vpack.c.b16 %v2413, %v2412
          %v2432 = vpack.c.b16 %v2415, %v2414
          %v2433 = vpack.c.b16 %v2417, %v2416
          %2450 = vmatprep.subr.bf16.mxu0 0
          %2451 = vmatpush1.bf16.msra.mxu0 %v2425
          %2452 = vmatprep.subr.bf16.mxu0 0
          %2453 = vmatpush1.bf16.msra.mxu0 %v2424
          %2454 = vmatprep.subr.bf16.mxu0 0
          %2455 = vmatpush1.bf16.msra.mxu0 %v2423
          %2456 = vmatprep.subr.bf16.mxu0 0
          %2457 = vmatpush1.bf16.msra.mxu0 %v2422
          %2458 = vmatprep.subr.bf16.mxu0 0
          %2459 = vmatpush1.bf16.msra.mxu0 %v2421
          %2460 = vmatprep.subr.bf16.mxu0 0
          %2461 = vmatpush1.bf16.msra.mxu0 %v2420
          %2462 = vmatprep.subr.bf16.mxu0 0
          %2463 = vmatpush1.bf16.msra.mxu0 %v2419
          %2464 = vmatprep.subr.bf16.mxu0 0
          %2465 = vmatpush1.bf16.msra.mxu0 %v2418
          %2466 = vmatprep.subr.bf16.mxu0 0
          %2467 = vmatpush2.bf16.msra.mxu0 %v2433
          %2468 = vmatprep.subr.bf16.mxu0 0
          %2469 = vmatpush2.bf16.msra.mxu0 %v2432
          %2470 = vmatprep.subr.bf16.mxu0 0
          %2471 = vmatpush2.bf16.msra.mxu0 %v2431
          %2472 = vmatprep.subr.bf16.mxu0 0
          %2473 = vmatpush2.bf16.msra.mxu0 %v2430
          %2474 = vmatprep.subr.bf16.mxu0 0
          %2475 = vmatpush2.bf16.msra.mxu0 %v2429
          %2476 = vmatprep.subr.bf16.mxu0 0
          %2477 = vmatpush2.bf16.msra.mxu0 %v2428
          %2478 = vmatprep.subr.bf16.mxu0 0
          %2479 = vmatpush2.bf16.msra.mxu0 %v2427
          %2480 = vmatprep.subr.bf16.mxu0 0
          %2481 = vmatpush2.bf16.msra.mxu0 %v2426
          %2482 = vmatprep.mubr.bf16.mxu0 %v2320
          %2483 = vmatmul.mubr.bf16.gmra.mxu0 %v2319
          %v2484 = vpop.f32.mrf.mxu0
          %v2485 = vadd.f32 %v2353, %v2484
          %v2486 = vpop.f32.mrf.mxu0
          %v2487 = vpop.f32.mrf.mxu0
          %v2488 = vpop.f32.mrf.mxu0
          %2489 = vdwg.mxu0
          %2490 = vst [vmem:[%s540] sm:$0x1] %v2485
        $region76: #{encoder_cnn_forward.3} parent=67 // pred_fallthru
          _
        %s2491 = sand.u32 %s342, 1
        %s2492 = scalar_lea.sflag [#allocation4], %s2491
        %s2493 = sand.u32 %s342, 1
        %s2494 = scalar_lea.vmem [#allocation3], %s2493
        // Predicated region
        $region77: #{encoder_cnn_forward.3} parent=67 // pred_check
          %p2495 = pneg %p352
        $region78: #{encoder_cnn_forward.3} parent=67 // pred_check_branch
          %2497 = sbr.rel (%p2495) target = $region80
        $region79: #{encoder_cnn_forward.3} parent=67 // pred_region
          %s2499 = ssub.s32 16, 16
          %2500 = vsyncadd %s2492, %s2499
          %s2501 = smul.addr %s30, 16
          %s2502 = scalar_lea.hbm %s12, %s2501
          %s2504 = sshll.u32 %s2494, 4
          %s2505 = int_to_ptr.vmem [resolvable:$true] %s2504
          %2507 = dma.vmem_to_hbm [thread:$0]  %s2505, 16, %s2502, %s2492
        $region80: #{encoder_cnn_forward.3} parent=67 // pred_fallthru
          _
      $region68: #{encoder_cnn_forward.3} parent=5 // pred_fallthru
        _
      %p2508 = scmp.le.s32.totalorder 2, %s21
      // Predicated region
      $region81: #{encoder_cnn_forward.3} parent=5 // pred_check
        %p2509 = pneg %p2508
      $region82: #{encoder_cnn_forward.3} parent=5 // pred_check_branch
        %2511 = sbr.rel (%p2509) target = $region84
      $region83: #{encoder_cnn_forward.3} parent=5 // pred_region
        %s2512 = ssub.s32 %s21, 2
        // Predicated region
        $region85: #{encoder_cnn_forward.3} parent=83 // pred_check
          %p2513 = pneg %p358
        $region86: #{encoder_cnn_forward.3} parent=83 // pred_check_branch
          %2515 = sbr.rel (%p2513) target = $region88
        $region87: #{encoder_cnn_forward.3} parent=83 // pred_region
          %s2516 = sand.u32 %s343, 1
          %s2517 = scalar_lea.sflag [#allocation4], %s2516
          %s2518 = sand.u32 %s343, 1
          %s2519 = scalar_lea.vmem [#allocation3], %s2518
          %2520 = dma.done %s2517, 16
        $region88: #{encoder_cnn_forward.3} parent=83 // pred_fallthru
          _
      $region84: #{encoder_cnn_forward.3} parent=5 // pred_fallthru
        _
    $region6: #{encoder_cnn_forward.3} parent=1 // loop_footer
      %s25 = sadd.s32 1, %s21
    $region7: #{encoder_cnn_forward.3} parent=1 // loop_footer_branch
      %20 = sbr.rel target = $region3
    $region8: #{encoder_cnn_forward.3} parent=1 // loop_exit
      _
    %2521 = vsyncpa [#allocation4], 1
    %s2522 = scalar_lea.sflag [#allocation4], 1
    %2523 = vsyncpa %s2522, 1

</llo_original>
